<compile_context>
chip_gen: v7x
topology: tpu7x:2x2x1
jax: 0.10.0
libtpu: 0.0.40
codegen_flags: <defaults>
</compile_context>

<pallas_src>
import functools

import jax
import jax.numpy as jnp
import numpy as np
from jax.experimental import pallas as pl
from jax.experimental.pallas import tpu as pltpu


# ------------------------------ small helpers ------------------------------ #

def _round_up(x, m):
    return ((x + m - 1) // m) * m


def _pad_cols(a, new_cols):
    pad = new_cols - a.shape[-1]
    return a if pad == 0 else jnp.pad(a, ((0, 0), (0, pad)))


def _pad_rows(a, new_rows):
    pad = new_rows - a.shape[0]
    return a if pad == 0 else jnp.pad(a, ((0, pad), (0, 0)))


def _pick_tile_n(N, row_bytes, vmem_budget_bytes=8 * 1024 * 1024):
    """Largest row tile whose double-buffered per-step working set stays inside
    a conservative VMEM budget (sized for v7x's 64 MiB part), preferring >= 2
    grid steps so the 'parallel' axis can be sharded over v7x's 2 TensorCores.
    On v5e/v6e (128 MiB VMEM) the same choice is simply extra-safe."""
    cap = max(8, vmem_budget_bytes // (2 * max(row_bytes, 1)))
    cands = [t for t in (1024, 512, 256, 128, 64, 32, 16, 8) if t <= cap]
    if not cands:
        return 8
    for t in cands:
        if -(-N // t) >= 2:          # cdiv(N, t) >= 2 -> both TCs get work
            return t
    return cands[-1]


# ------------------------------- Pallas kernel ------------------------------ #

def _jk_gamlp_kernel(xcat_ref,             # [tn, HFp]  cat(feature_list), lane-padded
                     label_ref,            # [tn, Cp]   label_emb, lane-padded
                     wjk1_ref, bjk1_ref,   # [HFp, Hd], [1, Hd]   lr_jk_ref dense 1
                     wjk2_ref, bjk2_ref,   # [Hd, Hd],  [1, Hd]   lr_jk_ref dense 2
                     wl_ref, wr_ref,       # [1, Hd], [1, F]      lr_att weight split
                     w1_ref, b1_ref,       # [F, Hd],  [1, Hd]    lr_output dense 1
                     w2_ref, b2_ref,       # [Hd, Cp], [1, Cp]    lr_output dense 2
                     wf1_ref, bf1_ref,     # [Cp, Hd], [1, Hd]    label_fc linear 1
                     wf2_ref, bf2_ref,     # [Hd, Cp], [1, Cp]    label_fc linear 2
                     scal_ref,             # [1, 8] SMEM: b_att + PReLU slopes
                     out_ref,              # [tn, Cp]
                     *, num_hops, nfeat):
    H, F = num_hops, nfeat
    b_att = scal_ref[0, 0]
    a_jk = scal_ref[0, 1]     # PReLU inside lr_jk_ref (FeedForwardNetII)
    a_mod = scal_ref[0, 2]    # module-level self.prelu applied to lr_jk_ref output
    a_out = scal_ref[0, 3]    # PReLU inside lr_output
    a_lab = scal_ref[0, 4]    # PReLU inside label_fc

    def prelu(v, a):
        return jnp.where(v > 0, v, a * v)

    x = xcat_ref[...]                                         # [tn, HFp]

    # ---- jk_ref = PReLU( lr_jk_ref(cat(feature_list)) ) ----------------------
    h = jnp.dot(x, wjk1_ref[...], preferred_element_type=jnp.float32) + bjk1_ref[...]
    h = prelu(h, a_jk)
    jk = jnp.dot(h, wjk2_ref[...], preferred_element_type=jnp.float32) + bjk2_ref[...]
    jk = prelu(jk, a_mod)                                     # [tn, Hd]

    # ---- attention scores: relu( lr_att(cat(jk_ref, x_i)) ) ------------------
    # The 1-column Linear runs on the VPU (mul) + XLU (lane reduce) rather than
    # a 1/256-wide MXU matmul; the jk_ref . wl term is hop-invariant -> hoisted.
    s_left = jnp.sum(jk * wl_ref[...], axis=-1, keepdims=True)        # [tn, 1]
    wr = wr_ref[...]
    scores = []
    for i in range(H):                                        # H is static -> unrolled
        xi = x[:, i * F:(i + 1) * F]
        s = s_left + jnp.sum(xi * wr, axis=-1, keepdims=True) + b_att
        scores.append(jnp.maximum(s, 0.0))                    # act = ReLU

    # ---- softmax over hops (kept as a list of [tn,1] columns) ----------------
    m = scores[0]
    for s in scores[1:]:
        m = jnp.maximum(m, s)
    es = [jnp.exp(s - m) for s in scores]
    denom = es[0]
    for e in es[1:]:
        denom = denom + e
    inv = 1.0 / denom       # exact divide: approx reciprocal risks the 1e-5 tol
    att = [e * inv for e in es]

    # ---- weighted hop combination --------------------------------------------
    right = x[:, 0:F] * att[0]
    for i in range(1, H):
        right = right + x[:, i * F:(i + 1) * F] * att[i]

    # ---- lr_output: Dense -> PReLU -> Dense -----------------------------------
    h2 = jnp.dot(right, w1_ref[...], preferred_element_type=jnp.float32) + b1_ref[...]
    h2 = prelu(h2, a_out)
    out = jnp.dot(h2, w2_ref[...], preferred_element_type=jnp.float32) + b2_ref[...]

    # ---- label_fc(label_emb): Linear -> PReLU -> Linear ------------------------
    lh = jnp.dot(label_ref[...], wf1_ref[...],
                 preferred_element_type=jnp.float32) + bf1_ref[...]
    lh = prelu(lh, a_lab)
    lab = jnp.dot(lh, wf2_ref[...], preferred_element_type=jnp.float32) + bf2_ref[...]

    out_ref[...] = (out + lab).astype(out_ref.dtype)          # lane-dense store


# ---------------------------------- wrapper --------------------------------- #

def jk_gamlp_rlu_forward(feats, label_emb, params, *, tile_n=None):
    """feats: [H, N, F] stacked hop features; label_emb: [N, C]."""
    H, N, F = feats.shape
    HF = H * F
    Hd = params["wjk1"].shape[1]
    C = params["w2"].shape[1]

    HFp = _round_up(HF, 128)          # lane-dense feats slab
    Cp = _round_up(C, 128)            # lane-dense output / label path

    # cat(feature_list, dim=1) -> one contiguous row-major slab per node.
    xcat = jnp.transpose(feats, (1, 0, 2)).reshape(N, HF)
    xcat = _pad_cols(xcat, HFp)
    label_p = _pad_cols(label_emb, Cp)

    # Zero-pad weights so the padded lanes/rows contribute exactly zero.
    wjk1_p = _pad_rows(params["wjk1"], HFp)
    w2_p = _pad_cols(params["w2"], Cp)
    b2_p = _pad_cols(params["b2"], Cp)
    wf1_p = _pad_rows(params["wf1"], Cp)
    wf2_p = _pad_cols(params["wf2"], Cp)
    bf2_p = _pad_cols(params["bf2"], Cp)

    scal = jnp.asarray([[params["b_att"], params["a_jk"], params["a_mod"],
                         params["a_out"], params["a_lab"], 0.0, 0.0, 0.0]],
                       dtype=jnp.float32)                     # [1, 8] SMEM

    if tile_n is None:
        row_bytes = 4 * (HFp + 2 * Cp)          # xcat + label + out, per node row
        tile_n = _pick_tile_n(N, row_bytes)

    # Pad N so any node count works (padded rows are all-zero and finite
    # through the whole pipeline; they are sliced off below).
    Np = _round_up(N, tile_n)
    if Np != N:
        xcat = jnp.pad(xcat, ((0, Np - N), (0, 0)))
        label_p = jnp.pad(label_p, ((0, Np - N), (0, 0)))

    kernel = functools.partial(_jk_gamlp_kernel, num_hops=H, nfeat=F)
    full = lambda i: (0, 0)

    out_p = pl.pallas_call(
        kernel,
        out_shape=jax.ShapeDtypeStruct((Np, Cp), jnp.float32),
        grid=(Np // tile_n,),
        in_specs=[
            pl.BlockSpec((tile_n, HFp), lambda i: (i, 0)),      # xcat slab
            pl.BlockSpec((tile_n, Cp), lambda i: (i, 0)),       # label_emb
            pl.BlockSpec((HFp, Hd), full),                      # wjk1
            pl.BlockSpec((1, Hd), full),                        # bjk1
            pl.BlockSpec((Hd, Hd), full),                       # wjk2
            pl.BlockSpec((1, Hd), full),                        # bjk2
            pl.BlockSpec((1, Hd), full),                        # wl (jk_ref part)
            pl.BlockSpec((1, F), full),                         # wr (x part)
            pl.BlockSpec((F, Hd), full),                        # w1
            pl.BlockSpec((1, Hd), full),                        # b1
            pl.BlockSpec((Hd, Cp), full),                       # w2 (lane-padded)
            pl.BlockSpec((1, Cp), full),                        # b2 (lane-padded)
            pl.BlockSpec((Cp, Hd), full),                       # wf1 (row-padded)
            pl.BlockSpec((1, Hd), full),                        # bf1
            pl.BlockSpec((Hd, Cp), full),                       # wf2 (lane-padded)
            pl.BlockSpec((1, Cp), full),                        # bf2 (lane-padded)
            pl.BlockSpec(memory_space=pltpu.MemorySpace.SMEM),  # scalars
        ],
        out_specs=pl.BlockSpec((tile_n, Cp), lambda i: (i, 0)),
        compiler_params=pltpu.CompilerParams(
            dimension_semantics=("parallel",)),
    )(xcat, label_p, wjk1_p, params["bjk1"], params["wjk2"], params["bjk2"],
      params["wl"], params["wr"], params["w1"], params["b1"], w2_p, b2_p,
      wf1_p, params["bf1"], wf2_p, bf2_p, scal)

    return out_p[:N, :C]


# ------------------------------ pure-JAX reference --------------------------- #

def jk_gamlp_rlu_reference(feats, label_emb, params):
    H, N, F = feats.shape
    x_list = [feats[i] for i in range(H)]
    xcat = jnp.concatenate(x_list, axis=1)

    def prelu(v, a):
        return jnp.where(v > 0, v, a * v)

    h = xcat @ params["wjk1"] + params["bjk1"]
    h = prelu(h, params["a_jk"])
    jk = h @ params["wjk2"] + params["bjk2"]
    jk = prelu(jk, params["a_mod"])

    wl_col = params["wl"].T
    wr_col = params["wr"].T
    scores = [jax.nn.relu(jk @ wl_col + xi @ wr_col + params["b_att"])
              for xi in x_list]
    W = jax.nn.softmax(jnp.concatenate(scores, axis=1), axis=1)

    right = x_list[0] * W[:, 0:1]
    for i in range(1, H):
        right = right + x_list[i] * W[:, i:i + 1]

    h2 = prelu(right @ params["w1"] + params["b1"], params["a_out"])
    out = h2 @ params["w2"] + params["b2"]

    lh = prelu(label_emb @ params["wf1"] + params["bf1"], params["a_lab"])
    lab = lh @ params["wf2"] + params["bf2"]
    return out + lab


# ------------------------------------- main ---------------------------------- #

if __name__ == "__main__":
    num_hops = 3
    N, nfeat, hidden, nclass = 256, 32, 32, 10

    key = jax.random.PRNGKey(0)
    (kf, kl, kjk1, kbjk1, kjk2, kbjk2, katt,
     k1, kb1, k2, kb2, kf1, kbf1, kf2, kbf2) = jax.random.split(key, 15)

    feats = jax.random.normal(kf, (num_hops, N, nfeat), dtype=jnp.float32)
    label_emb = jax.random.normal(kl, (N, nclass), dtype=jnp.float32)

    def xavier(k, shape, gain=1.0):
        fan_in, fan_out = shape
        bound = gain * float(np.sqrt(6.0 / (fan_in + fan_out)))
        return jax.random.uniform(k, shape, jnp.float32, -bound, bound)

    HF = num_hops * nfeat
    gain_relu = float(np.sqrt(2.0))

    # lr_att: Linear(hidden + nfeat -> 1), xavier(gain=relu), zero bias.
    # Split into the jk_ref part (wl) and the hop-feature part (wr), stored as
    # rows for the in-kernel VPU dot.
    w_att = xavier(katt, (hidden + nfeat, 1), gain=gain_relu)

    params = dict(
        wjk1=xavier(kjk1, (HF, hidden)),
        bjk1=jax.random.uniform(kbjk1, (1, hidden), jnp.float32, -0.05, 0.05),
        wjk2=xavier(kjk2, (hidden, hidden)),
        bjk2=jax.random.uniform(kbjk2, (1, hidden), jnp.float32, -0.05, 0.05),
        wl=w_att[:hidden, :].T,               # [1, hidden]
        wr=w_att[hidden:, :].T,               # [1, nfeat]
        b_att=0.0,                            # zero-init bias (reset_parameters)
        w1=xavier(k1, (nfeat, hidden)),
        b1=jax.random.uniform(kb1, (1, hidden), jnp.float32, -0.05, 0.05),
        w2=xavier(k2, (hidden, nclass)),
        b2=jax.random.uniform(kb2, (1, nclass), jnp.float32, -0.05, 0.05),
        wf1=xavier(kf1, (nclass, hidden)),
        bf1=jax.random.uniform(kbf1, (1, hidden), jnp.float32, -0.05, 0.05),
        wf2=xavier(kf2, (hidden, nclass)),
        bf2=jax.random.uniform(kbf2, (1, nclass), jnp.float32, -0.05, 0.05),
        a_jk=0.25, a_mod=0.25, a_out=0.25, a_lab=0.25,   # PReLU default slopes
    )

    out = jk_gamlp_rlu_forward(feats, label_emb, params)
    out = jax.block_until_ready(out)

    ref = jk_gamlp_rlu_reference(feats, label_emb, params)
    np.testing.assert_allclose(np.asarray(out), np.asarray(ref),
                               rtol=1e-5, atol=1e-5)

    print("KERNEL_OK")
</pallas_src>

<mosaic_0001>
module attributes {stable_mosaic.version = 11 : i64} {
  func.func @_jk_gamlp_kernel(%arg0: i32, %arg1: memref<128x128xf32, #tpu.memory_space<vmem>>, %arg2: memref<128x128xf32, #tpu.memory_space<vmem>>, %arg3: memref<128x32xf32, #tpu.memory_space<vmem>>, %arg4: memref<1x32xf32, #tpu.memory_space<vmem>>, %arg5: memref<32x32xf32, #tpu.memory_space<vmem>>, %arg6: memref<1x32xf32, #tpu.memory_space<vmem>>, %arg7: memref<1x32xf32, #tpu.memory_space<vmem>>, %arg8: memref<1x32xf32, #tpu.memory_space<vmem>>, %arg9: memref<32x32xf32, #tpu.memory_space<vmem>>, %arg10: memref<1x32xf32, #tpu.memory_space<vmem>>, %arg11: memref<32x128xf32, #tpu.memory_space<vmem>>, %arg12: memref<1x128xf32, #tpu.memory_space<vmem>>, %arg13: memref<128x32xf32, #tpu.memory_space<vmem>>, %arg14: memref<1x32xf32, #tpu.memory_space<vmem>>, %arg15: memref<32x128xf32, #tpu.memory_space<vmem>>, %arg16: memref<1x128xf32, #tpu.memory_space<vmem>>, %arg17: memref<1x8xf32, #tpu.memory_space<smem>>, %arg18: memref<128x128xf32, #tpu.memory_space<vmem>>) attributes {dimension_semantics = [#tpu.dimension_semantics<parallel>], iteration_bounds = array<i64: 2>, scalar_prefetch = 0 : i64, scratch_operands = 0 : i64, tpu.core_type = #tpu.core_type<tc>, window_params = [{transform_indices = @transform_0, window_bounds = array<i64: 128, 128>}, {transform_indices = @transform_1, window_bounds = array<i64: 128, 128>}, {pipeline_mode = #tpu.pipeline_mode<synchronous>, transform_indices = @transform_2, window_bounds = array<i64: 128, 32>}, {pipeline_mode = #tpu.pipeline_mode<synchronous>, transform_indices = @transform_3, window_bounds = array<i64: 1, 32>}, {pipeline_mode = #tpu.pipeline_mode<synchronous>, transform_indices = @transform_4, window_bounds = array<i64: 32, 32>}, {pipeline_mode = #tpu.pipeline_mode<synchronous>, transform_indices = @transform_5, window_bounds = array<i64: 1, 32>}, {pipeline_mode = #tpu.pipeline_mode<synchronous>, transform_indices = @transform_6, window_bounds = array<i64: 1, 32>}, {pipeline_mode = #tpu.pipeline_mode<synchronous>, transform_indices = @transform_7, window_bounds = array<i64: 1, 32>}, {pipeline_mode = #tpu.pipeline_mode<synchronous>, transform_indices = @transform_8, window_bounds = array<i64: 32, 32>}, {pipeline_mode = #tpu.pipeline_mode<synchronous>, transform_indices = @transform_9, window_bounds = array<i64: 1, 32>}, {pipeline_mode = #tpu.pipeline_mode<synchronous>, transform_indices = @transform_10, window_bounds = array<i64: 32, 128>}, {pipeline_mode = #tpu.pipeline_mode<synchronous>, transform_indices = @transform_11, window_bounds = array<i64: 1, 128>}, {pipeline_mode = #tpu.pipeline_mode<synchronous>, transform_indices = @transform_12, window_bounds = array<i64: 128, 32>}, {pipeline_mode = #tpu.pipeline_mode<synchronous>, transform_indices = @transform_13, window_bounds = array<i64: 1, 32>}, {pipeline_mode = #tpu.pipeline_mode<synchronous>, transform_indices = @transform_14, window_bounds = array<i64: 32, 128>}, {pipeline_mode = #tpu.pipeline_mode<synchronous>, transform_indices = @transform_15, window_bounds = array<i64: 1, 128>}, {transform_indices = @transform_16, window_bounds = array<i64: 1, 8>}, {transform_indices = @transform_17, window_bounds = array<i64: 128, 128>}]} {
    %c0 = arith.constant 0 : index
    %c0_0 = arith.constant 0 : index
    %0 = memref.load %arg17[%c0, %c0_0] : memref<1x8xf32, #tpu.memory_space<smem>>
    %c0_1 = arith.constant 0 : index
    %c1 = arith.constant 1 : index
    %1 = memref.load %arg17[%c0_1, %c1] : memref<1x8xf32, #tpu.memory_space<smem>>
    %c0_2 = arith.constant 0 : index
    %c2 = arith.constant 2 : index
    %2 = memref.load %arg17[%c0_2, %c2] : memref<1x8xf32, #tpu.memory_space<smem>>
    %c0_3 = arith.constant 0 : index
    %c3 = arith.constant 3 : index
    %3 = memref.load %arg17[%c0_3, %c3] : memref<1x8xf32, #tpu.memory_space<smem>>
    %c0_4 = arith.constant 0 : index
    %c4 = arith.constant 4 : index
    %4 = memref.load %arg17[%c0_4, %c4] : memref<1x8xf32, #tpu.memory_space<smem>>
    %c0_5 = arith.constant 0 : index
    %c0_6 = arith.constant 0 : index
    %5 = vector.load %arg1[%c0_5, %c0_6] : memref<128x128xf32, #tpu.memory_space<vmem>>, vector<128x128xf32>
    %c0_7 = arith.constant 0 : index
    %c0_8 = arith.constant 0 : index
    %6 = vector.load %arg3[%c0_7, %c0_8] : memref<128x32xf32, #tpu.memory_space<vmem>>, vector<128x32xf32>
    %cst = arith.constant dense<0.000000e+00> : vector<128x32xf32>
    %7 = tpu.matmul %5, %6, %cst {dimension_numbers = #tpu.dot_dimension_numbers<[1], [0], [0], [1], [0, 0, 1, 1], [], []>} : vector<128x128xf32>, vector<128x32xf32>, vector<128x32xf32> -> vector<128x32xf32>
    %c0_9 = arith.constant 0 : index
    %c0_10 = arith.constant 0 : index
    %8 = vector.load %arg4[%c0_9, %c0_10] : memref<1x32xf32, #tpu.memory_space<vmem>>, vector<1x32xf32>
    %9 = vector.broadcast %8 : vector<1x32xf32> to vector<128x32xf32>
    %10 = arith.addf %7, %9 : vector<128x32xf32>
    %cst_11 = arith.constant 0.000000e+00 : f32
    %11 = vector.broadcast %cst_11 : f32 to vector<128x32xf32>
    %12 = arith.cmpf ogt, %10, %11 : vector<128x32xf32>
    %13 = vector.broadcast %1 : f32 to vector<128x32xf32>
    %14 = arith.mulf %13, %10 : vector<128x32xf32>
    %15 = arith.select %12, %10, %14 : vector<128x32xi1>, vector<128x32xf32>
    %c0_12 = arith.constant 0 : index
    %c0_13 = arith.constant 0 : index
    %16 = vector.load %arg5[%c0_12, %c0_13] : memref<32x32xf32, #tpu.memory_space<vmem>>, vector<32x32xf32>
    %cst_14 = arith.constant dense<0.000000e+00> : vector<128x32xf32>
    %17 = tpu.matmul %15, %16, %cst_14 {dimension_numbers = #tpu.dot_dimension_numbers<[1], [0], [0], [1], [0, 0, 1, 1], [], []>} : vector<128x32xf32>, vector<32x32xf32>, vector<128x32xf32> -> vector<128x32xf32>
    %c0_15 = arith.constant 0 : index
    %c0_16 = arith.constant 0 : index
    %18 = vector.load %arg6[%c0_15, %c0_16] : memref<1x32xf32, #tpu.memory_space<vmem>>, vector<1x32xf32>
    %19 = vector.broadcast %18 : vector<1x32xf32> to vector<128x32xf32>
    %20 = arith.addf %17, %19 : vector<128x32xf32>
    %cst_17 = arith.constant 0.000000e+00 : f32
    %21 = vector.broadcast %cst_17 : f32 to vector<128x32xf32>
    %22 = arith.cmpf ogt, %20, %21 : vector<128x32xf32>
    %23 = vector.broadcast %2 : f32 to vector<128x32xf32>
    %24 = arith.mulf %23, %20 : vector<128x32xf32>
    %25 = arith.select %22, %20, %24 : vector<128x32xi1>, vector<128x32xf32>
    %c0_18 = arith.constant 0 : index
    %c0_19 = arith.constant 0 : index
    %26 = vector.load %arg7[%c0_18, %c0_19] : memref<1x32xf32, #tpu.memory_space<vmem>>, vector<1x32xf32>
    %27 = vector.broadcast %26 : vector<1x32xf32> to vector<128x32xf32>
    %28 = arith.mulf %25, %27 : vector<128x32xf32>
    %cst_20 = arith.constant dense<0.000000e+00> : vector<128xf32>
    %29 = vector.multi_reduction <add>, %28, %cst_20 [1] : vector<128x32xf32> to vector<128xf32>
    %30 = vector.shape_cast %29 : vector<128xf32> to vector<128x1xf32>
    %c0_21 = arith.constant 0 : index
    %c0_22 = arith.constant 0 : index
    %31 = vector.load %arg8[%c0_21, %c0_22] : memref<1x32xf32, #tpu.memory_space<vmem>>, vector<1x32xf32>
    %32 = vector.extract_strided_slice %5 {offsets = [0, 0], sizes = [128, 32], strides = [1, 1]} : vector<128x128xf32> to vector<128x32xf32>
    %33 = vector.broadcast %31 : vector<1x32xf32> to vector<128x32xf32>
    %34 = arith.mulf %32, %33 : vector<128x32xf32>
    %cst_23 = arith.constant dense<0.000000e+00> : vector<128xf32>
    %35 = vector.multi_reduction <add>, %34, %cst_23 [1] : vector<128x32xf32> to vector<128xf32>
    %36 = vector.shape_cast %35 : vector<128xf32> to vector<128x1xf32>
    %37 = arith.addf %30, %36 : vector<128x1xf32>
    %38 = vector.broadcast %0 : f32 to vector<128x1xf32>
    %39 = arith.addf %37, %38 : vector<128x1xf32>
    %cst_24 = arith.constant 0.000000e+00 : f32
    %40 = vector.broadcast %cst_24 : f32 to vector<128x1xf32>
    %41 = arith.maximumf %39, %40 : vector<128x1xf32>
    %42 = vector.extract_strided_slice %5 {offsets = [0, 32], sizes = [128, 32], strides = [1, 1]} : vector<128x128xf32> to vector<128x32xf32>
    %43 = vector.broadcast %31 : vector<1x32xf32> to vector<128x32xf32>
    %44 = arith.mulf %42, %43 : vector<128x32xf32>
    %cst_25 = arith.constant dense<0.000000e+00> : vector<128xf32>
    %45 = vector.multi_reduction <add>, %44, %cst_25 [1] : vector<128x32xf32> to vector<128xf32>
    %46 = vector.shape_cast %45 : vector<128xf32> to vector<128x1xf32>
    %47 = arith.addf %30, %46 : vector<128x1xf32>
    %48 = vector.broadcast %0 : f32 to vector<128x1xf32>
    %49 = arith.addf %47, %48 : vector<128x1xf32>
    %cst_26 = arith.constant 0.000000e+00 : f32
    %50 = vector.broadcast %cst_26 : f32 to vector<128x1xf32>
    %51 = arith.maximumf %49, %50 : vector<128x1xf32>
    %52 = vector.extract_strided_slice %5 {offsets = [0, 64], sizes = [128, 32], strides = [1, 1]} : vector<128x128xf32> to vector<128x32xf32>
    %53 = vector.broadcast %31 : vector<1x32xf32> to vector<128x32xf32>
    %54 = arith.mulf %52, %53 : vector<128x32xf32>
    %cst_27 = arith.constant dense<0.000000e+00> : vector<128xf32>
    %55 = vector.multi_reduction <add>, %54, %cst_27 [1] : vector<128x32xf32> to vector<128xf32>
    %56 = vector.shape_cast %55 : vector<128xf32> to vector<128x1xf32>
    %57 = arith.addf %30, %56 : vector<128x1xf32>
    %58 = vector.broadcast %0 : f32 to vector<128x1xf32>
    %59 = arith.addf %57, %58 : vector<128x1xf32>
    %cst_28 = arith.constant 0.000000e+00 : f32
    %60 = vector.broadcast %cst_28 : f32 to vector<128x1xf32>
    %61 = arith.maximumf %59, %60 : vector<128x1xf32>
    %62 = arith.maximumf %41, %51 : vector<128x1xf32>
    %63 = arith.maximumf %62, %61 : vector<128x1xf32>
    %64 = arith.subf %41, %63 : vector<128x1xf32>
    %65 = math.exp %64 : vector<128x1xf32>
    %66 = arith.subf %51, %63 : vector<128x1xf32>
    %67 = math.exp %66 : vector<128x1xf32>
    %68 = arith.subf %61, %63 : vector<128x1xf32>
    %69 = math.exp %68 : vector<128x1xf32>
    %70 = arith.addf %65, %67 : vector<128x1xf32>
    %71 = arith.addf %70, %69 : vector<128x1xf32>
    %cst_29 = arith.constant 1.000000e+00 : f32
    %72 = vector.broadcast %cst_29 : f32 to vector<128x1xf32>
    %73 = arith.divf %72, %71 : vector<128x1xf32>
    %74 = arith.mulf %65, %73 : vector<128x1xf32>
    %75 = arith.mulf %67, %73 : vector<128x1xf32>
    %76 = arith.mulf %69, %73 : vector<128x1xf32>
    %77 = vector.extract_strided_slice %5 {offsets = [0, 0], sizes = [128, 32], strides = [1, 1]} : vector<128x128xf32> to vector<128x32xf32>
    %78 = vector.broadcast %74 : vector<128x1xf32> to vector<128x32xf32>
    %79 = arith.mulf %77, %78 : vector<128x32xf32>
    %80 = vector.extract_strided_slice %5 {offsets = [0, 32], sizes = [128, 32], strides = [1, 1]} : vector<128x128xf32> to vector<128x32xf32>
    %81 = vector.broadcast %75 : vector<128x1xf32> to vector<128x32xf32>
    %82 = arith.mulf %80, %81 : vector<128x32xf32>
    %83 = arith.addf %79, %82 : vector<128x32xf32>
    %84 = vector.extract_strided_slice %5 {offsets = [0, 64], sizes = [128, 32], strides = [1, 1]} : vector<128x128xf32> to vector<128x32xf32>
    %85 = vector.broadcast %76 : vector<128x1xf32> to vector<128x32xf32>
    %86 = arith.mulf %84, %85 : vector<128x32xf32>
    %87 = arith.addf %83, %86 : vector<128x32xf32>
    %c0_30 = arith.constant 0 : index
    %c0_31 = arith.constant 0 : index
    %88 = vector.load %arg9[%c0_30, %c0_31] : memref<32x32xf32, #tpu.memory_space<vmem>>, vector<32x32xf32>
    %cst_32 = arith.constant dense<0.000000e+00> : vector<128x32xf32>
    %89 = tpu.matmul %87, %88, %cst_32 {dimension_numbers = #tpu.dot_dimension_numbers<[1], [0], [0], [1], [0, 0, 1, 1], [], []>} : vector<128x32xf32>, vector<32x32xf32>, vector<128x32xf32> -> vector<128x32xf32>
    %c0_33 = arith.constant 0 : index
    %c0_34 = arith.constant 0 : index
    %90 = vector.load %arg10[%c0_33, %c0_34] : memref<1x32xf32, #tpu.memory_space<vmem>>, vector<1x32xf32>
    %91 = vector.broadcast %90 : vector<1x32xf32> to vector<128x32xf32>
    %92 = arith.addf %89, %91 : vector<128x32xf32>
    %cst_35 = arith.constant 0.000000e+00 : f32
    %93 = vector.broadcast %cst_35 : f32 to vector<128x32xf32>
    %94 = arith.cmpf ogt, %92, %93 : vector<128x32xf32>
    %95 = vector.broadcast %3 : f32 to vector<128x32xf32>
    %96 = arith.mulf %95, %92 : vector<128x32xf32>
    %97 = arith.select %94, %92, %96 : vector<128x32xi1>, vector<128x32xf32>
    %c0_36 = arith.constant 0 : index
    %c0_37 = arith.constant 0 : index
    %98 = vector.load %arg11[%c0_36, %c0_37] : memref<32x128xf32, #tpu.memory_space<vmem>>, vector<32x128xf32>
    %cst_38 = arith.constant dense<0.000000e+00> : vector<128x128xf32>
    %99 = tpu.matmul %97, %98, %cst_38 {dimension_numbers = #tpu.dot_dimension_numbers<[1], [0], [0], [1], [0, 0, 1, 1], [], []>} : vector<128x32xf32>, vector<32x128xf32>, vector<128x128xf32> -> vector<128x128xf32>
    %c0_39 = arith.constant 0 : index
    %c0_40 = arith.constant 0 : index
    %100 = vector.load %arg12[%c0_39, %c0_40] : memref<1x128xf32, #tpu.memory_space<vmem>>, vector<1x128xf32>
    %101 = vector.broadcast %100 : vector<1x128xf32> to vector<128x128xf32>
    %102 = arith.addf %99, %101 : vector<128x128xf32>
    %c0_41 = arith.constant 0 : index
    %c0_42 = arith.constant 0 : index
    %103 = vector.load %arg2[%c0_41, %c0_42] : memref<128x128xf32, #tpu.memory_space<vmem>>, vector<128x128xf32>
    %c0_43 = arith.constant 0 : index
    %c0_44 = arith.constant 0 : index
    %104 = vector.load %arg13[%c0_43, %c0_44] : memref<128x32xf32, #tpu.memory_space<vmem>>, vector<128x32xf32>
    %cst_45 = arith.constant dense<0.000000e+00> : vector<128x32xf32>
    %105 = tpu.matmul %103, %104, %cst_45 {dimension_numbers = #tpu.dot_dimension_numbers<[1], [0], [0], [1], [0, 0, 1, 1], [], []>} : vector<128x128xf32>, vector<128x32xf32>, vector<128x32xf32> -> vector<128x32xf32>
    %c0_46 = arith.constant 0 : index
    %c0_47 = arith.constant 0 : index
    %106 = vector.load %arg14[%c0_46, %c0_47] : memref<1x32xf32, #tpu.memory_space<vmem>>, vector<1x32xf32>
    %107 = vector.broadcast %106 : vector<1x32xf32> to vector<128x32xf32>
    %108 = arith.addf %105, %107 : vector<128x32xf32>
    %cst_48 = arith.constant 0.000000e+00 : f32
    %109 = vector.broadcast %cst_48 : f32 to vector<128x32xf32>
    %110 = arith.cmpf ogt, %108, %109 : vector<128x32xf32>
    %111 = vector.broadcast %4 : f32 to vector<128x32xf32>
    %112 = arith.mulf %111, %108 : vector<128x32xf32>
    %113 = arith.select %110, %108, %112 : vector<128x32xi1>, vector<128x32xf32>
    %c0_49 = arith.constant 0 : index
    %c0_50 = arith.constant 0 : index
    %114 = vector.load %arg15[%c0_49, %c0_50] : memref<32x128xf32, #tpu.memory_space<vmem>>, vector<32x128xf32>
    %cst_51 = arith.constant dense<0.000000e+00> : vector<128x128xf32>
    %115 = tpu.matmul %113, %114, %cst_51 {dimension_numbers = #tpu.dot_dimension_numbers<[1], [0], [0], [1], [0, 0, 1, 1], [], []>} : vector<128x32xf32>, vector<32x128xf32>, vector<128x128xf32> -> vector<128x128xf32>
    %c0_52 = arith.constant 0 : index
    %c0_53 = arith.constant 0 : index
    %116 = vector.load %arg16[%c0_52, %c0_53] : memref<1x128xf32, #tpu.memory_space<vmem>>, vector<1x128xf32>
    %117 = vector.broadcast %116 : vector<1x128xf32> to vector<128x128xf32>
    %118 = arith.addf %115, %117 : vector<128x128xf32>
    %119 = arith.addf %102, %118 : vector<128x128xf32>
    %c0_54 = arith.constant 0 : index
    %c0_55 = arith.constant 0 : index
    %120 = vector.load %arg18[%c0_54, %c0_55] : memref<128x128xf32, #tpu.memory_space<vmem>>, vector<128x128xf32>
    tpu.vector_store %arg18[%c0_54, %c0_55], %119 {strides = array<i32>} : memref<128x128xf32, #tpu.memory_space<vmem>>, vector<128x128xf32>,
    return
  }
  func.func @transform_0(%arg0: i32) -> (i32, i32) {
    %c0_i32 = arith.constant 0 : i32
    %c0_i32_0 = arith.constant 0 : i32
    return %arg0, %c0_i32 : i32, i32
  }
  func.func @transform_1(%arg0: i32) -> (i32, i32) {
    %c0_i32 = arith.constant 0 : i32
    %c0_i32_0 = arith.constant 0 : i32
    return %arg0, %c0_i32 : i32, i32
  }
  func.func @transform_2(%arg0: i32) -> (i32, i32) {
    %c0_i32 = arith.constant 0 : i32
    %c0_i32_0 = arith.constant 0 : i32
    %c0_i32_1 = arith.constant 0 : i32
    return %c0_i32, %c0_i32_0 : i32, i32
  }
  func.func @transform_3(%arg0: i32) -> (i32, i32) {
    %c0_i32 = arith.constant 0 : i32
    %c0_i32_0 = arith.constant 0 : i32
    %c0_i32_1 = arith.constant 0 : i32
    return %c0_i32, %c0_i32_0 : i32, i32
  }
  func.func @transform_4(%arg0: i32) -> (i32, i32) {
    %c0_i32 = arith.constant 0 : i32
    %c0_i32_0 = arith.constant 0 : i32
    %c0_i32_1 = arith.constant 0 : i32
    return %c0_i32, %c0_i32_0 : i32, i32
  }
  func.func @transform_5(%arg0: i32) -> (i32, i32) {
    %c0_i32 = arith.constant 0 : i32
    %c0_i32_0 = arith.constant 0 : i32
    %c0_i32_1 = arith.constant 0 : i32
    return %c0_i32, %c0_i32_0 : i32, i32
  }
  func.func @transform_6(%arg0: i32) -> (i32, i32) {
    %c0_i32 = arith.constant 0 : i32
    %c0_i32_0 = arith.constant 0 : i32
    %c0_i32_1 = arith.constant 0 : i32
    return %c0_i32, %c0_i32_0 : i32, i32
  }
  func.func @transform_7(%arg0: i32) -> (i32, i32) {
    %c0_i32 = arith.constant 0 : i32
    %c0_i32_0 = arith.constant 0 : i32
    %c0_i32_1 = arith.constant 0 : i32
    return %c0_i32, %c0_i32_0 : i32, i32
  }
  func.func @transform_8(%arg0: i32) -> (i32, i32) {
    %c0_i32 = arith.constant 0 : i32
    %c0_i32_0 = arith.constant 0 : i32
    %c0_i32_1 = arith.constant 0 : i32
    return %c0_i32, %c0_i32_0 : i32, i32
  }
  func.func @transform_9(%arg0: i32) -> (i32, i32) {
    %c0_i32 = arith.constant 0 : i32
    %c0_i32_0 = arith.constant 0 : i32
    %c0_i32_1 = arith.constant 0 : i32
    return %c0_i32, %c0_i32_0 : i32, i32
  }
  func.func @transform_10(%arg0: i32) -> (i32, i32) {
    %c0_i32 = arith.constant 0 : i32
    %c0_i32_0 = arith.constant 0 : i32
    %c0_i32_1 = arith.constant 0 : i32
    return %c0_i32, %c0_i32_0 : i32, i32
  }
  func.func @transform_11(%arg0: i32) -> (i32, i32) {
    %c0_i32 = arith.constant 0 : i32
    %c0_i32_0 = arith.constant 0 : i32
    %c0_i32_1 = arith.constant 0 : i32
    return %c0_i32, %c0_i32_0 : i32, i32
  }
  func.func @transform_12(%arg0: i32) -> (i32, i32) {
    %c0_i32 = arith.constant 0 : i32
    %c0_i32_0 = arith.constant 0 : i32
    %c0_i32_1 = arith.constant 0 : i32
    return %c0_i32, %c0_i32_0 : i32, i32
  }
  func.func @transform_13(%arg0: i32) -> (i32, i32) {
    %c0_i32 = arith.constant 0 : i32
    %c0_i32_0 = arith.constant 0 : i32
    %c0_i32_1 = arith.constant 0 : i32
    return %c0_i32, %c0_i32_0 : i32, i32
  }
  func.func @transform_14(%arg0: i32) -> (i32, i32) {
    %c0_i32 = arith.constant 0 : i32
    %c0_i32_0 = arith.constant 0 : i32
    %c0_i32_1 = arith.constant 0 : i32
    return %c0_i32, %c0_i32_0 : i32, i32
  }
  func.func @transform_15(%arg0: i32) -> (i32, i32) {
    %c0_i32 = arith.constant 0 : i32
    %c0_i32_0 = arith.constant 0 : i32
    %c0_i32_1 = arith.constant 0 : i32
    return %c0_i32, %c0_i32_0 : i32, i32
  }
  func.func @transform_16(%arg0: i32) -> (i32, i32) {
    %c0_i32 = arith.constant 0 : i32
    %c0_i32_0 = arith.constant 0 : i32
    %c0_i32_1 = arith.constant 0 : i32
    return %c0_i32, %c0_i32_0 : i32, i32
  }
  func.func @transform_17(%arg0: i32) -> (i32, i32) {
    %c0_i32 = arith.constant 0 : i32
    %c0_i32_0 = arith.constant 0 : i32
    return %arg0, %c0_i32 : i32, i32
  }
}

</mosaic_0001>

<llo_original>
// kernel: tpu_custom_call.1
$region0: #{tpu_custom_call.1}
  #allocation0 [shape = 'u32[]', space=smem, size = 0x4, offset = 0x4, fixed_abs, tag = 'smem constant byte address 0x4 - core index']
  #allocation1 [shape = 'u32[144,128]{1,0:T(1,128)}', space=vmem, size = 0x12000, scoped, tag = 'internal scratch']
  %s0 = inlined_call_operand.vmem [shape: f32[256,128], index: 0, kind: input, shape index: {}]
  %s1 = inlined_call_operand.hbm [shape: f32[256,128], index: 1, kind: input, shape index: {}]
  %s2 = inlined_call_operand.vmem [shape: f32[128,32], index: 2, kind: input, shape index: {}]
  %s3 = inlined_call_operand.vmem [shape: f32[1,32], index: 3, kind: input, shape index: {}]
  %s4 = inlined_call_operand.vmem [shape: f32[32,32], index: 4, kind: input, shape index: {}]
  %s5 = inlined_call_operand.vmem [shape: f32[1,32], index: 5, kind: input, shape index: {}]
  %s6 = inlined_call_operand.hbm [shape: f32[1,32], index: 6, kind: input, shape index: {}]
  %s7 = inlined_call_operand.hbm [shape: f32[1,32], index: 7, kind: input, shape index: {}]
  %s8 = inlined_call_operand.hbm [shape: f32[32,32], index: 8, kind: input, shape index: {}]
  %s9 = inlined_call_operand.hbm [shape: f32[1,32], index: 9, kind: input, shape index: {}]
  %s10 = inlined_call_operand.vmem [shape: f32[32,128], index: 10, kind: input, shape index: {}]
  %s11 = inlined_call_operand.vmem [shape: f32[1,128], index: 11, kind: input, shape index: {}]
  %s12 = inlined_call_operand.vmem [shape: f32[128,32], index: 12, kind: input, shape index: {}]
  %s13 = inlined_call_operand.vmem [shape: f32[1,32], index: 13, kind: input, shape index: {}]
  %s14 = inlined_call_operand.hbm [shape: f32[32,128], index: 14, kind: input, shape index: {}]
  %s15 = inlined_call_operand.vmem [shape: f32[1,128], index: 15, kind: input, shape index: {}]
  %s16 = inlined_call_operand.vmem [shape: f32[1,8], index: 16, kind: input, shape index: {}]
  %s17 = inlined_call_operand.hbm [shape: f32[256,128], index: 17, kind: output, shape index: {}]
  %s18 = sld [smem:[#allocation0]]
  $region129: #{tpu_custom_call.1} parent=0
    _
  %s20 = ssub.s32 1, %s18
  %s21 = scalar_select 0, %s20, %s18
  $region1: #{tpu_custom_call.1} parent=0
    #allocation2 [shape = 'u8[131072]{0}', space=vmem, size = 0x20000, scoped, tag = 'input window, operand 1']
    #allocation3 [shape = 's32[2]{0}', space=sflag, size = 0x8, scoped, tag = 'scoped memory for tpu_custom_call.1']
    #allocation4 [shape = 's32[2]{0}', space=sflag, size = 0x8, scoped, tag = 'scoped memory for tpu_custom_call.1']
    #allocation5 [shape = 's32[2]{0}', space=sflag, size = 0x8, scoped, tag = 'scoped memory for tpu_custom_call.1']
    #allocation6 [shape = 'u8[512]{0}', space=vmem, size = 0x400, scoped, tag = 'input window, operand 6, single buffered']
    #allocation7 [shape = 's32[1]{0}', space=sflag, size = 0x4, scoped, tag = 'scoped memory for tpu_custom_call.1']
    #allocation8 [shape = 'u8[512]{0}', space=vmem, size = 0x400, scoped, tag = 'input window, operand 7, single buffered']
    #allocation9 [shape = 'u8[16384]{0}', space=vmem, size = 0x4000, scoped, tag = 'input window, operand 8, single buffered']
    #allocation10 [shape = 's32[1]{0}', space=sflag, size = 0x4, scoped, tag = 'scoped memory for tpu_custom_call.1']
    #allocation11 [shape = 'u8[512]{0}', space=vmem, size = 0x400, scoped, tag = 'input window, operand 9, single buffered']
    #allocation12 [shape = 'u8[16384]{0}', space=vmem, size = 0x4000, scoped, tag = 'input window, operand 14, single buffered']
    #allocation13 [shape = 's32[1]{0}', space=sflag, size = 0x4, scoped, tag = 'scoped memory for tpu_custom_call.1']
    #allocation14 [shape = 'u8[512]{0}', space=smem, size = 0x200, scoped, tag = 'input window, operand 16, single buffered']
    #allocation15 [shape = 'u8[131072]{0}', space=vmem, size = 0x20000, scoped, tag = 'output window, operand 0']
    %22 = vsyncpa [#allocation3], 0
    %s23 = scalar_lea.sflag [#allocation3], 1
    %24 = vsyncpa %s23, 0
    %25 = vsyncpa [#allocation7], 0
    %26 = vsyncpa [#allocation10], 0
    %27 = vsyncpa [#allocation13], 0
    %28 = vsyncpa [#allocation5], 0
    %29 = vsyncpa [#allocation4], 0
    %s30 = scalar_lea.sflag [#allocation4], 1
    %31 = vsyncpa %s30, 0
    loop: start=0, step=1, limit=4
    $region2: #{tpu_custom_call.1} parent=1 // loop_pre_header
      _
    $region3: #{tpu_custom_call.1} parent=1 // loop_header
      %s33 = sphi 0, %s37
      %p34 = scmp.ge.s32.totalorder %s33, 4
      %s43 = sphi 0, %s45
      %s46 = sphi 0, %s43
      %s47 = sphi 0, %s46
      %s63 = sphi 0, %s47
      %s69 = sphi 0, %s71
      %s72 = sphi 0, %s69
      %s73 = sphi 0, %s72
      %s89 = sphi 0, %s73
      %s93 = sphi 0, %s93
      %s95 = sphi 0, %s93
      %s96 = sphi 0, %s95
      %s110 = sphi 0, %s96
      %s114 = sphi 0, %s114
      %s116 = sphi 0, %s114
      %s117 = sphi 0, %s116
      %s131 = sphi 0, %s117
      %s135 = sphi 0, %s135
      %s137 = sphi 0, %s135
      %s138 = sphi 0, %s137
      %s152 = sphi 0, %s138
      %s156 = sphi 0, %s156
      %s158 = sphi 0, %s156
      %s159 = sphi 0, %s158
      %s173 = sphi 0, %s159
      %s177 = sphi 0, %s177
      %s179 = sphi 0, %s177
      %s180 = sphi 0, %s179
      %s194 = sphi 0, %s180
      %s198 = sphi 0, %s198
      %s200 = sphi 0, %s198
      %s201 = sphi 0, %s200
      %s215 = sphi 0, %s201
      %s219 = sphi 0, %s219
      %s221 = sphi 0, %s219
      %s222 = sphi 0, %s221
      %s236 = sphi 0, %s222
      %s240 = sphi 0, %s240
      %s242 = sphi 0, %s240
      %s243 = sphi 0, %s242
      %s257 = sphi 0, %s243
      %s261 = sphi 0, %s261
      %s263 = sphi 0, %s261
      %s264 = sphi 0, %s263
      %s278 = sphi 0, %s264
      %s282 = sphi 0, %s282
      %s284 = sphi 0, %s282
      %s285 = sphi 0, %s284
      %s299 = sphi 0, %s285
      %s303 = sphi 0, %s303
      %s305 = sphi 0, %s303
      %s306 = sphi 0, %s305
      %s320 = sphi 0, %s306
      %s324 = sphi 0, %s324
      %s326 = sphi 0, %s324
      %s327 = sphi 0, %s326
      %s341 = sphi 0, %s327
      %s345 = sphi 0, %s345
      %s347 = sphi 0, %s345
      %s348 = sphi 0, %s347
      %s362 = sphi 0, %s348
      %s366 = sphi 0, %s366
      %s368 = sphi 0, %s366
      %s369 = sphi 0, %s368
      %s383 = sphi 0, %s369
      %s387 = sphi 0, %s387
      %s389 = sphi 0, %s387
      %s390 = sphi 0, %s389
      %s404 = sphi 0, %s390
      %s410 = sphi 0, %s412
      %s413 = sphi 0, %s410
      %s414 = sphi 0, %s413
      %s430 = sphi 0, %s414
    $region4: #{tpu_custom_call.1} parent=1 // loop_header_branch
      %36 = sbr.rel (%p34) target = $region8
    $region5: #{tpu_custom_call.1} parent=1 // loop_body
      %s38 = ssub.s32 %s33, 1
      %s39 = ssub.s32 %s33, 2
      %s40 = sadd.s32 %s33, 1
      %s41 = ssub.s32 %s33, %s40
      %p42 = scmp.eq.s32.totalorder %s41, 0
      %s44 = sadd.s32 %s43, 1
      %s45 = scalar_select %p42, %s43, %s44
      %p48 = pneg %p42
      %p49 = scmp.eq.s32.totalorder %s33, 1
      %p50 = por %p48, %p49
      %p51 = scmp.ne.s32.totalorder %s43, %s46
      %p52 = scmp.eq.s32.totalorder %s33, 0
      %p53 = por %p51, %p52
      %p54 = scmp.ne.s32.totalorder %s43, %s46
      %p55 = scmp.eq.s32.totalorder %s38, 1
      %p56 = por %p54, %p55
      %p57 = scmp.ne.s32.totalorder %s46, %s47
      %p58 = scmp.eq.s32.totalorder %s38, 0
      %p59 = por %p57, %p58
      %p60 = scmp.ne.s32.totalorder %s46, %s47
      %p61 = scmp.eq.s32.totalorder %s39, 1
      %p62 = por %p60, %p61
      %p64 = scmp.ne.s32.totalorder %s47, %s63
      %p65 = scmp.eq.s32.totalorder %s39, 0
      %p66 = por %p64, %p65
      %s67 = ssub.s32 %s33, %s40
      %p68 = scmp.eq.s32.totalorder %s67, 0
      %s70 = sadd.s32 %s69, 1
      %s71 = scalar_select %p68, %s69, %s70
      %p74 = pneg %p68
      %p75 = scmp.eq.s32.totalorder %s33, 1
      %p76 = por %p74, %p75
      %p77 = scmp.ne.s32.totalorder %s69, %s72
      %p78 = scmp.eq.s32.totalorder %s33, 0
      %p79 = por %p77, %p78
      %p80 = scmp.ne.s32.totalorder %s69, %s72
      %p81 = scmp.eq.s32.totalorder %s38, 1
      %p82 = por %p80, %p81
      %p83 = scmp.ne.s32.totalorder %s72, %s73
      %p84 = scmp.eq.s32.totalorder %s38, 0
      %p85 = por %p83, %p84
      %p86 = scmp.ne.s32.totalorder %s72, %s73
      %p87 = scmp.eq.s32.totalorder %s39, 1
      %p88 = por %p86, %p87
      %p90 = scmp.ne.s32.totalorder %s73, %s89
      %p91 = scmp.eq.s32.totalorder %s39, 0
      %p92 = por %p90, %p91
      %s94 = sadd.s32 %s93, 1
      %p97 = scmp.eq.s32.totalorder %s33, 1
      %p98 = scmp.ne.s32.totalorder %s93, %s95
      %p99 = scmp.eq.s32.totalorder %s33, 0
      %p100 = por %p98, %p99
      %p101 = scmp.ne.s32.totalorder %s93, %s95
      %p102 = scmp.eq.s32.totalorder %s38, 1
      %p103 = por %p101, %p102
      %p104 = scmp.ne.s32.totalorder %s95, %s96
      %p105 = scmp.eq.s32.totalorder %s38, 0
      %p106 = por %p104, %p105
      %p107 = scmp.ne.s32.totalorder %s95, %s96
      %p108 = scmp.eq.s32.totalorder %s39, 1
      %p109 = por %p107, %p108
      %p111 = scmp.ne.s32.totalorder %s96, %s110
      %p112 = scmp.eq.s32.totalorder %s39, 0
      %p113 = por %p111, %p112
      %s115 = sadd.s32 %s114, 1
      %p118 = scmp.eq.s32.totalorder %s33, 1
      %p119 = scmp.ne.s32.totalorder %s114, %s116
      %p120 = scmp.eq.s32.totalorder %s33, 0
      %p121 = por %p119, %p120
      %p122 = scmp.ne.s32.totalorder %s114, %s116
      %p123 = scmp.eq.s32.totalorder %s38, 1
      %p124 = por %p122, %p123
      %p125 = scmp.ne.s32.totalorder %s116, %s117
      %p126 = scmp.eq.s32.totalorder %s38, 0
      %p127 = por %p125, %p126
      %p128 = scmp.ne.s32.totalorder %s116, %s117
      %p129 = scmp.eq.s32.totalorder %s39, 1
      %p130 = por %p128, %p129
      %p132 = scmp.ne.s32.totalorder %s117, %s131
      %p133 = scmp.eq.s32.totalorder %s39, 0
      %p134 = por %p132, %p133
      %s136 = sadd.s32 %s135, 1
      %p139 = scmp.eq.s32.totalorder %s33, 1
      %p140 = scmp.ne.s32.totalorder %s135, %s137
      %p141 = scmp.eq.s32.totalorder %s33, 0
      %p142 = por %p140, %p141
      %p143 = scmp.ne.s32.totalorder %s135, %s137
      %p144 = scmp.eq.s32.totalorder %s38, 1
      %p145 = por %p143, %p144
      %p146 = scmp.ne.s32.totalorder %s137, %s138
      %p147 = scmp.eq.s32.totalorder %s38, 0
      %p148 = por %p146, %p147
      %p149 = scmp.ne.s32.totalorder %s137, %s138
      %p150 = scmp.eq.s32.totalorder %s39, 1
      %p151 = por %p149, %p150
      %p153 = scmp.ne.s32.totalorder %s138, %s152
      %p154 = scmp.eq.s32.totalorder %s39, 0
      %p155 = por %p153, %p154
      %s157 = sadd.s32 %s156, 1
      %p160 = scmp.eq.s32.totalorder %s33, 1
      %p161 = scmp.ne.s32.totalorder %s156, %s158
      %p162 = scmp.eq.s32.totalorder %s33, 0
      %p163 = por %p161, %p162
      %p164 = scmp.ne.s32.totalorder %s156, %s158
      %p165 = scmp.eq.s32.totalorder %s38, 1
      %p166 = por %p164, %p165
      %p167 = scmp.ne.s32.totalorder %s158, %s159
      %p168 = scmp.eq.s32.totalorder %s38, 0
      %p169 = por %p167, %p168
      %p170 = scmp.ne.s32.totalorder %s158, %s159
      %p171 = scmp.eq.s32.totalorder %s39, 1
      %p172 = por %p170, %p171
      %p174 = scmp.ne.s32.totalorder %s159, %s173
      %p175 = scmp.eq.s32.totalorder %s39, 0
      %p176 = por %p174, %p175
      %s178 = sadd.s32 %s177, 1
      %p181 = scmp.eq.s32.totalorder %s33, 1
      %p182 = scmp.ne.s32.totalorder %s177, %s179
      %p183 = scmp.eq.s32.totalorder %s33, 0
      %p184 = por %p182, %p183
      %p185 = scmp.ne.s32.totalorder %s177, %s179
      %p186 = scmp.eq.s32.totalorder %s38, 1
      %p187 = por %p185, %p186
      %p188 = scmp.ne.s32.totalorder %s179, %s180
      %p189 = scmp.eq.s32.totalorder %s38, 0
      %p190 = por %p188, %p189
      %p191 = scmp.ne.s32.totalorder %s179, %s180
      %p192 = scmp.eq.s32.totalorder %s39, 1
      %p193 = por %p191, %p192
      %p195 = scmp.ne.s32.totalorder %s180, %s194
      %p196 = scmp.eq.s32.totalorder %s39, 0
      %p197 = por %p195, %p196
      %s199 = sadd.s32 %s198, 1
      %p202 = scmp.eq.s32.totalorder %s33, 1
      %p203 = scmp.ne.s32.totalorder %s198, %s200
      %p204 = scmp.eq.s32.totalorder %s33, 0
      %p205 = por %p203, %p204
      %p206 = scmp.ne.s32.totalorder %s198, %s200
      %p207 = scmp.eq.s32.totalorder %s38, 1
      %p208 = por %p206, %p207
      %p209 = scmp.ne.s32.totalorder %s200, %s201
      %p210 = scmp.eq.s32.totalorder %s38, 0
      %p211 = por %p209, %p210
      %p212 = scmp.ne.s32.totalorder %s200, %s201
      %p213 = scmp.eq.s32.totalorder %s39, 1
      %p214 = por %p212, %p213
      %p216 = scmp.ne.s32.totalorder %s201, %s215
      %p217 = scmp.eq.s32.totalorder %s39, 0
      %p218 = por %p216, %p217
      %s220 = sadd.s32 %s219, 1
      %p223 = scmp.eq.s32.totalorder %s33, 1
      %p224 = scmp.ne.s32.totalorder %s219, %s221
      %p225 = scmp.eq.s32.totalorder %s33, 0
      %p226 = por %p224, %p225
      %p227 = scmp.ne.s32.totalorder %s219, %s221
      %p228 = scmp.eq.s32.totalorder %s38, 1
      %p229 = por %p227, %p228
      %p230 = scmp.ne.s32.totalorder %s221, %s222
      %p231 = scmp.eq.s32.totalorder %s38, 0
      %p232 = por %p230, %p231
      %p233 = scmp.ne.s32.totalorder %s221, %s222
      %p234 = scmp.eq.s32.totalorder %s39, 1
      %p235 = por %p233, %p234
      %p237 = scmp.ne.s32.totalorder %s222, %s236
      %p238 = scmp.eq.s32.totalorder %s39, 0
      %p239 = por %p237, %p238
      %s241 = sadd.s32 %s240, 1
      %p244 = scmp.eq.s32.totalorder %s33, 1
      %p245 = scmp.ne.s32.totalorder %s240, %s242
      %p246 = scmp.eq.s32.totalorder %s33, 0
      %p247 = por %p245, %p246
      %p248 = scmp.ne.s32.totalorder %s240, %s242
      %p249 = scmp.eq.s32.totalorder %s38, 1
      %p250 = por %p248, %p249
      %p251 = scmp.ne.s32.totalorder %s242, %s243
      %p252 = scmp.eq.s32.totalorder %s38, 0
      %p253 = por %p251, %p252
      %p254 = scmp.ne.s32.totalorder %s242, %s243
      %p255 = scmp.eq.s32.totalorder %s39, 1
      %p256 = por %p254, %p255
      %p258 = scmp.ne.s32.totalorder %s243, %s257
      %p259 = scmp.eq.s32.totalorder %s39, 0
      %p260 = por %p258, %p259
      %s262 = sadd.s32 %s261, 1
      %p265 = scmp.eq.s32.totalorder %s33, 1
      %p266 = scmp.ne.s32.totalorder %s261, %s263
      %p267 = scmp.eq.s32.totalorder %s33, 0
      %p268 = por %p266, %p267
      %p269 = scmp.ne.s32.totalorder %s261, %s263
      %p270 = scmp.eq.s32.totalorder %s38, 1
      %p271 = por %p269, %p270
      %p272 = scmp.ne.s32.totalorder %s263, %s264
      %p273 = scmp.eq.s32.totalorder %s38, 0
      %p274 = por %p272, %p273
      %p275 = scmp.ne.s32.totalorder %s263, %s264
      %p276 = scmp.eq.s32.totalorder %s39, 1
      %p277 = por %p275, %p276
      %p279 = scmp.ne.s32.totalorder %s264, %s278
      %p280 = scmp.eq.s32.totalorder %s39, 0
      %p281 = por %p279, %p280
      %s283 = sadd.s32 %s282, 1
      %p286 = scmp.eq.s32.totalorder %s33, 1
      %p287 = scmp.ne.s32.totalorder %s282, %s284
      %p288 = scmp.eq.s32.totalorder %s33, 0
      %p289 = por %p287, %p288
      %p290 = scmp.ne.s32.totalorder %s282, %s284
      %p291 = scmp.eq.s32.totalorder %s38, 1
      %p292 = por %p290, %p291
      %p293 = scmp.ne.s32.totalorder %s284, %s285
      %p294 = scmp.eq.s32.totalorder %s38, 0
      %p295 = por %p293, %p294
      %p296 = scmp.ne.s32.totalorder %s284, %s285
      %p297 = scmp.eq.s32.totalorder %s39, 1
      %p298 = por %p296, %p297
      %p300 = scmp.ne.s32.totalorder %s285, %s299
      %p301 = scmp.eq.s32.totalorder %s39, 0
      %p302 = por %p300, %p301
      %s304 = sadd.s32 %s303, 1
      %p307 = scmp.eq.s32.totalorder %s33, 1
      %p308 = scmp.ne.s32.totalorder %s303, %s305
      %p309 = scmp.eq.s32.totalorder %s33, 0
      %p310 = por %p308, %p309
      %p311 = scmp.ne.s32.totalorder %s303, %s305
      %p312 = scmp.eq.s32.totalorder %s38, 1
      %p313 = por %p311, %p312
      %p314 = scmp.ne.s32.totalorder %s305, %s306
      %p315 = scmp.eq.s32.totalorder %s38, 0
      %p316 = por %p314, %p315
      %p317 = scmp.ne.s32.totalorder %s305, %s306
      %p318 = scmp.eq.s32.totalorder %s39, 1
      %p319 = por %p317, %p318
      %p321 = scmp.ne.s32.totalorder %s306, %s320
      %p322 = scmp.eq.s32.totalorder %s39, 0
      %p323 = por %p321, %p322
      %s325 = sadd.s32 %s324, 1
      %p328 = scmp.eq.s32.totalorder %s33, 1
      %p329 = scmp.ne.s32.totalorder %s324, %s326
      %p330 = scmp.eq.s32.totalorder %s33, 0
      %p331 = por %p329, %p330
      %p332 = scmp.ne.s32.totalorder %s324, %s326
      %p333 = scmp.eq.s32.totalorder %s38, 1
      %p334 = por %p332, %p333
      %p335 = scmp.ne.s32.totalorder %s326, %s327
      %p336 = scmp.eq.s32.totalorder %s38, 0
      %p337 = por %p335, %p336
      %p338 = scmp.ne.s32.totalorder %s326, %s327
      %p339 = scmp.eq.s32.totalorder %s39, 1
      %p340 = por %p338, %p339
      %p342 = scmp.ne.s32.totalorder %s327, %s341
      %p343 = scmp.eq.s32.totalorder %s39, 0
      %p344 = por %p342, %p343
      %s346 = sadd.s32 %s345, 1
      %p349 = scmp.eq.s32.totalorder %s33, 1
      %p350 = scmp.ne.s32.totalorder %s345, %s347
      %p351 = scmp.eq.s32.totalorder %s33, 0
      %p352 = por %p350, %p351
      %p353 = scmp.ne.s32.totalorder %s345, %s347
      %p354 = scmp.eq.s32.totalorder %s38, 1
      %p355 = por %p353, %p354
      %p356 = scmp.ne.s32.totalorder %s347, %s348
      %p357 = scmp.eq.s32.totalorder %s38, 0
      %p358 = por %p356, %p357
      %p359 = scmp.ne.s32.totalorder %s347, %s348
      %p360 = scmp.eq.s32.totalorder %s39, 1
      %p361 = por %p359, %p360
      %p363 = scmp.ne.s32.totalorder %s348, %s362
      %p364 = scmp.eq.s32.totalorder %s39, 0
      %p365 = por %p363, %p364
      %s367 = sadd.s32 %s366, 1
      %p370 = scmp.eq.s32.totalorder %s33, 1
      %p371 = scmp.ne.s32.totalorder %s366, %s368
      %p372 = scmp.eq.s32.totalorder %s33, 0
      %p373 = por %p371, %p372
      %p374 = scmp.ne.s32.totalorder %s366, %s368
      %p375 = scmp.eq.s32.totalorder %s38, 1
      %p376 = por %p374, %p375
      %p377 = scmp.ne.s32.totalorder %s368, %s369
      %p378 = scmp.eq.s32.totalorder %s38, 0
      %p379 = por %p377, %p378
      %p380 = scmp.ne.s32.totalorder %s368, %s369
      %p381 = scmp.eq.s32.totalorder %s39, 1
      %p382 = por %p380, %p381
      %p384 = scmp.ne.s32.totalorder %s369, %s383
      %p385 = scmp.eq.s32.totalorder %s39, 0
      %p386 = por %p384, %p385
      %s388 = sadd.s32 %s387, 1
      %p391 = scmp.eq.s32.totalorder %s33, 1
      %p392 = scmp.ne.s32.totalorder %s387, %s389
      %p393 = scmp.eq.s32.totalorder %s33, 0
      %p394 = por %p392, %p393
      %p395 = scmp.ne.s32.totalorder %s387, %s389
      %p396 = scmp.eq.s32.totalorder %s38, 1
      %p397 = por %p395, %p396
      %p398 = scmp.ne.s32.totalorder %s389, %s390
      %p399 = scmp.eq.s32.totalorder %s38, 0
      %p400 = por %p398, %p399
      %p401 = scmp.ne.s32.totalorder %s389, %s390
      %p402 = scmp.eq.s32.totalorder %s39, 1
      %p403 = por %p401, %p402
      %p405 = scmp.ne.s32.totalorder %s390, %s404
      %p406 = scmp.eq.s32.totalorder %s39, 0
      %p407 = por %p405, %p406
      %s408 = ssub.s32 %s33, %s40
      %p409 = scmp.eq.s32.totalorder %s408, 0
      %s411 = sadd.s32 %s410, 1
      %s412 = scalar_select %p409, %s410, %s411
      %p415 = pneg %p409
      %p416 = scmp.eq.s32.totalorder %s33, 1
      %p417 = por %p415, %p416
      %p418 = scmp.ne.s32.totalorder %s410, %s413
      %p419 = scmp.eq.s32.totalorder %s33, 0
      %p420 = por %p418, %p419
      %p421 = scmp.ne.s32.totalorder %s410, %s413
      %p422 = scmp.eq.s32.totalorder %s38, 1
      %p423 = por %p421, %p422
      %p424 = scmp.ne.s32.totalorder %s413, %s414
      %p425 = scmp.eq.s32.totalorder %s38, 0
      %p426 = por %p424, %p425
      %p427 = scmp.ne.s32.totalorder %s413, %s414
      %p428 = scmp.eq.s32.totalorder %s39, 1
      %p429 = por %p427, %p428
      %p431 = scmp.ne.s32.totalorder %s414, %s430
      %p432 = scmp.eq.s32.totalorder %s39, 0
      %p433 = por %p431, %p432
      %p434 = scmp.le.s32.totalorder 1, %s33
      %p435 = scmp.lt.s32.totalorder %s33, 3
      %p436 = pnand %p434, %p435
      %p437 = pneg %p436
      // Predicated region
      $region9: #{tpu_custom_call.1} parent=5 // pred_check
        _
      $region10: #{tpu_custom_call.1} parent=5 // pred_check_branch
        %439 = sbr.rel (%p436) target = $region12
      $region11: #{tpu_custom_call.1} parent=5 // pred_region
        %s440 = ssub.s32 %s33, 1
        // Predicated region
        $region13: #{tpu_custom_call.1} parent=11 // pred_check
          %p441 = pneg %p106
        $region14: #{tpu_custom_call.1} parent=11 // pred_check_branch
          %443 = sbr.rel (%p441) target = $region16
        $region15: #{tpu_custom_call.1} parent=11 // pred_region
          _
        $region16: #{tpu_custom_call.1} parent=11 // pred_fallthru
          _
        // Predicated region
        $region17: #{tpu_custom_call.1} parent=11 // pred_check
          %p444 = pneg %p127
        $region18: #{tpu_custom_call.1} parent=11 // pred_check_branch
          %446 = sbr.rel (%p444) target = $region20
        $region19: #{tpu_custom_call.1} parent=11 // pred_region
          _
        $region20: #{tpu_custom_call.1} parent=11 // pred_fallthru
          _
        // Predicated region
        $region21: #{tpu_custom_call.1} parent=11 // pred_check
          %p447 = pneg %p148
        $region22: #{tpu_custom_call.1} parent=11 // pred_check_branch
          %449 = sbr.rel (%p447) target = $region24
        $region23: #{tpu_custom_call.1} parent=11 // pred_region
          _
        $region24: #{tpu_custom_call.1} parent=11 // pred_fallthru
          _
        // Predicated region
        $region25: #{tpu_custom_call.1} parent=11 // pred_check
          %p450 = pneg %p169
        $region26: #{tpu_custom_call.1} parent=11 // pred_check_branch
          %452 = sbr.rel (%p450) target = $region28
        $region27: #{tpu_custom_call.1} parent=11 // pred_region
          _
        $region28: #{tpu_custom_call.1} parent=11 // pred_fallthru
          _
        // Predicated region
        $region29: #{tpu_custom_call.1} parent=11 // pred_check
          %p453 = pneg %p190
        $region30: #{tpu_custom_call.1} parent=11 // pred_check_branch
          %455 = sbr.rel (%p453) target = $region32
        $region31: #{tpu_custom_call.1} parent=11 // pred_region
          %s457 = ssub.s32 16, 16
          %458 = vsyncadd [#allocation7], %s457
          %s460 = sshll.u32 [#allocation6], 4
          %s461 = int_to_ptr.vmem [resolvable:$true] %s460
          %463 = dma.hbm_to_vmem [thread:$0]  %s6, 16, %s461, [#allocation7]
        $region32: #{tpu_custom_call.1} parent=11 // pred_fallthru
          _
        // Predicated region
        $region33: #{tpu_custom_call.1} parent=11 // pred_check
          %p464 = pneg %p211
        $region34: #{tpu_custom_call.1} parent=11 // pred_check_branch
          %466 = sbr.rel (%p464) target = $region36
        $region35: #{tpu_custom_call.1} parent=11 // pred_region
          %s468 = ssub.s32 16, 16
          %469 = vsyncadd [#allocation7], %s468
          %s471 = sshll.u32 [#allocation8], 4
          %s472 = int_to_ptr.vmem [resolvable:$true] %s471
          %474 = dma.hbm_to_vmem [thread:$0]  %s7, 16, %s472, [#allocation7]
        $region36: #{tpu_custom_call.1} parent=11 // pred_fallthru
          _
        // Predicated region
        $region37: #{tpu_custom_call.1} parent=11 // pred_check
          %p475 = pneg %p232
        $region38: #{tpu_custom_call.1} parent=11 // pred_check_branch
          %477 = sbr.rel (%p475) target = $region40
        $region39: #{tpu_custom_call.1} parent=11 // pred_region
          %s479 = ssub.s32 512, 512
          %480 = vsyncadd [#allocation10], %s479
          %s481 = sshll.u32 [#allocation9], 4
          %s482 = int_to_ptr.vmem [resolvable:$true] %s481
          %487 = dma.hbm_to_vmem [thread:$0]  %s8, 512, %s482, [#allocation10], 128, 128, 8
        $region40: #{tpu_custom_call.1} parent=11 // pred_fallthru
          _
        // Predicated region
        $region41: #{tpu_custom_call.1} parent=11 // pred_check
          %p488 = pneg %p253
        $region42: #{tpu_custom_call.1} parent=11 // pred_check_branch
          %490 = sbr.rel (%p488) target = $region44
        $region43: #{tpu_custom_call.1} parent=11 // pred_region
          %s492 = ssub.s32 16, 16
          %493 = vsyncadd [#allocation10], %s492
          %s495 = sshll.u32 [#allocation11], 4
          %s496 = int_to_ptr.vmem [resolvable:$true] %s495
          %498 = dma.hbm_to_vmem [thread:$0]  %s9, 16, %s496, [#allocation10]
        $region44: #{tpu_custom_call.1} parent=11 // pred_fallthru
          _
        // Predicated region
        $region45: #{tpu_custom_call.1} parent=11 // pred_check
          %p499 = pneg %p274
        $region46: #{tpu_custom_call.1} parent=11 // pred_check_branch
          %501 = sbr.rel (%p499) target = $region48
        $region47: #{tpu_custom_call.1} parent=11 // pred_region
          _
        $region48: #{tpu_custom_call.1} parent=11 // pred_fallthru
          _
        // Predicated region
        $region49: #{tpu_custom_call.1} parent=11 // pred_check
          %p502 = pneg %p295
        $region50: #{tpu_custom_call.1} parent=11 // pred_check_branch
          %504 = sbr.rel (%p502) target = $region52
        $region51: #{tpu_custom_call.1} parent=11 // pred_region
          _
        $region52: #{tpu_custom_call.1} parent=11 // pred_fallthru
          _
        // Predicated region
        $region53: #{tpu_custom_call.1} parent=11 // pred_check
          %p505 = pneg %p316
        $region54: #{tpu_custom_call.1} parent=11 // pred_check_branch
          %507 = sbr.rel (%p505) target = $region56
        $region55: #{tpu_custom_call.1} parent=11 // pred_region
          _
        $region56: #{tpu_custom_call.1} parent=11 // pred_fallthru
          _
        // Predicated region
        $region57: #{tpu_custom_call.1} parent=11 // pred_check
          %p508 = pneg %p337
        $region58: #{tpu_custom_call.1} parent=11 // pred_check_branch
          %510 = sbr.rel (%p508) target = $region60
        $region59: #{tpu_custom_call.1} parent=11 // pred_region
          _
        $region60: #{tpu_custom_call.1} parent=11 // pred_fallthru
          _
        // Predicated region
        $region61: #{tpu_custom_call.1} parent=11 // pred_check
          %p511 = pneg %p358
        $region62: #{tpu_custom_call.1} parent=11 // pred_check_branch
          %513 = sbr.rel (%p511) target = $region64
        $region63: #{tpu_custom_call.1} parent=11 // pred_region
          %s515 = ssub.s32 512, 512
          %516 = vsyncadd [#allocation13], %s515
          %s517 = sshll.u32 [#allocation12], 4
          %s518 = int_to_ptr.vmem [resolvable:$true] %s517
          %523 = dma.hbm_to_vmem [thread:$0]  %s14, 512, %s518, [#allocation13], 128, 128, 8
        $region64: #{tpu_custom_call.1} parent=11 // pred_fallthru
          _
        // Predicated region
        $region65: #{tpu_custom_call.1} parent=11 // pred_check
          %p524 = pneg %p379
        $region66: #{tpu_custom_call.1} parent=11 // pred_check_branch
          %526 = sbr.rel (%p524) target = $region68
        $region67: #{tpu_custom_call.1} parent=11 // pred_region
          _
        $region68: #{tpu_custom_call.1} parent=11 // pred_fallthru
          _
        // Predicated region
        $region69: #{tpu_custom_call.1} parent=11 // pred_check
          %p527 = pneg %p400
        $region70: #{tpu_custom_call.1} parent=11 // pred_check_branch
          %529 = sbr.rel (%p527) target = $region72
        $region71: #{tpu_custom_call.1} parent=11 // pred_region
          %s531 = ssub.s32 16, 16
          %532 = vsyncadd [#allocation5], %s531
          %s534 = sshll.u32 %s16, 4
          %s535 = int_to_ptr.vmem [resolvable:$true] %s534
          %537 = dma.vmem_to_smem %s535, 16, [#allocation14], [#allocation5]
        $region72: #{tpu_custom_call.1} parent=11 // pred_fallthru
          _
      $region12: #{tpu_custom_call.1} parent=5 // pred_fallthru
        _
      %p538 = scmp.lt.s32.totalorder %s33, 2
      // Predicated region
      $region73: #{tpu_custom_call.1} parent=5 // pred_check
        %p539 = pneg %p538
      $region74: #{tpu_custom_call.1} parent=5 // pred_check_branch
        %541 = sbr.rel (%p539) target = $region76
      $region75: #{tpu_custom_call.1} parent=5 // pred_region
        // Predicated region
        $region77: #{tpu_custom_call.1} parent=75 // pred_check
          %p542 = pneg %p53
        $region78: #{tpu_custom_call.1} parent=75 // pred_check_branch
          %544 = sbr.rel (%p542) target = $region80
        $region79: #{tpu_custom_call.1} parent=75 // pred_region
          %s545 = smul.u32 16, %s33
          %p546 = scmp.lt.s32.totalorder %s545, 31
          %s547 = scalar_select %p546, %s545, 31
          %s548 = smul.addr %s547, 8
          %s549 = scalar_lea.vmem %s0, %s548
          %s550 = smul.u32 16, %s33
        $region80: #{tpu_custom_call.1} parent=75 // pred_fallthru
          _
        // Predicated region
        $region81: #{tpu_custom_call.1} parent=75 // pred_check
          %p551 = pneg %p79
        $region82: #{tpu_custom_call.1} parent=75 // pred_check_branch
          %553 = sbr.rel (%p551) target = $region84
        $region83: #{tpu_custom_call.1} parent=75 // pred_region
          %s554 = sand.u32 %s69, 1
          %s555 = scalar_lea.sflag [#allocation3], %s554
          %s556 = sand.u32 %s69, 1
          %s557 = smul.addr %s556, 128
          %s558 = scalar_lea.vmem [#allocation2], %s557
          %s559 = smul.u32 16, %s33
          %s561 = ssub.s32 2048, 2048
          %562 = vsyncadd %s555, %s561
          %s563 = smul.addr %s559, 128
          %s564 = scalar_lea.hbm %s1, %s563
          %s565 = sshll.u32 %s558, 4
          %s566 = int_to_ptr.vmem [resolvable:$true] %s565
          %571 = dma.hbm_to_vmem [thread:$0]  %s564, 2048, %s566, %s555, 128, 128, 8
        $region84: #{tpu_custom_call.1} parent=75 // pred_fallthru
          _
      $region76: #{tpu_custom_call.1} parent=5 // pred_fallthru
        _
      %p572 = scmp.le.s32.totalorder 1, %s33
      %p573 = scmp.lt.s32.totalorder %s33, 3
      %p574 = pnand %p572, %p573
      %p575 = pneg %p574
      // Predicated region
      $region85: #{tpu_custom_call.1} parent=5 // pred_check
        _
      $region86: #{tpu_custom_call.1} parent=5 // pred_check_branch
        %577 = sbr.rel (%p574) target = $region88
      $region87: #{tpu_custom_call.1} parent=5 // pred_region
        %s578 = ssub.s32 %s33, 1
        %s579 = sand.u32 %s72, 1
        %s580 = scalar_lea.sflag [#allocation3], %s579
        %s581 = sand.u32 %s72, 1
        %s582 = smul.addr %s581, 128
        %s583 = scalar_lea.vmem [#allocation2], %s582
        // Predicated region
        $region89: #{tpu_custom_call.1} parent=87 // pred_check
          %p584 = pneg %p85
        $region90: #{tpu_custom_call.1} parent=87 // pred_check_branch
          %586 = sbr.rel (%p584) target = $region92
        $region91: #{tpu_custom_call.1} parent=87 // pred_region
          %587 = dma.done %s580, 2048
        $region92: #{tpu_custom_call.1} parent=87 // pred_fallthru
          _
        // Predicated region
        $region93: #{tpu_custom_call.1} parent=87 // pred_check
          %p588 = pneg %p190
        $region94: #{tpu_custom_call.1} parent=87 // pred_check_branch
          %590 = sbr.rel (%p588) target = $region96
        $region95: #{tpu_custom_call.1} parent=87 // pred_region
          %591 = dma.done [#allocation7], 16
        $region96: #{tpu_custom_call.1} parent=87 // pred_fallthru
          _
        // Predicated region
        $region97: #{tpu_custom_call.1} parent=87 // pred_check
          %p592 = pneg %p211
        $region98: #{tpu_custom_call.1} parent=87 // pred_check_branch
          %594 = sbr.rel (%p592) target = $region100
        $region99: #{tpu_custom_call.1} parent=87 // pred_region
          %595 = dma.done [#allocation7], 16
        $region100: #{tpu_custom_call.1} parent=87 // pred_fallthru
          _
        // Predicated region
        $region101: #{tpu_custom_call.1} parent=87 // pred_check
          %p596 = pneg %p232
        $region102: #{tpu_custom_call.1} parent=87 // pred_check_branch
          %598 = sbr.rel (%p596) target = $region104
        $region103: #{tpu_custom_call.1} parent=87 // pred_region
          %599 = dma.done [#allocation10], 512
        $region104: #{tpu_custom_call.1} parent=87 // pred_fallthru
          _
        // Predicated region
        $region105: #{tpu_custom_call.1} parent=87 // pred_check
          %p600 = pneg %p253
        $region106: #{tpu_custom_call.1} parent=87 // pred_check_branch
          %602 = sbr.rel (%p600) target = $region108
        $region107: #{tpu_custom_call.1} parent=87 // pred_region
          %603 = dma.done [#allocation10], 16
        $region108: #{tpu_custom_call.1} parent=87 // pred_fallthru
          _
        // Predicated region
        $region109: #{tpu_custom_call.1} parent=87 // pred_check
          %p604 = pneg %p358
        $region110: #{tpu_custom_call.1} parent=87 // pred_check_branch
          %606 = sbr.rel (%p604) target = $region112
        $region111: #{tpu_custom_call.1} parent=87 // pred_region
          %607 = dma.done [#allocation13], 512
        $region112: #{tpu_custom_call.1} parent=87 // pred_fallthru
          _
        // Predicated region
        $region113: #{tpu_custom_call.1} parent=87 // pred_check
          %p608 = pneg %p400
        $region114: #{tpu_custom_call.1} parent=87 // pred_check_branch
          %610 = sbr.rel (%p608) target = $region116
        $region115: #{tpu_custom_call.1} parent=87 // pred_region
          %611 = dma.done [#allocation5], 16
        $region116: #{tpu_custom_call.1} parent=87 // pred_fallthru
          _
        %612 = sfence
        %s613 = smul.u32 16, %s38
        %p614 = scmp.lt.s32.totalorder %s613, 31
        %s615 = scalar_select %p614, %s613, 31
        %s616 = smul.addr %s615, 8
        %s617 = scalar_lea.vmem %s0, %s616
        %p618 = pneg %p59
        %p619 = pneg %p56
        %s620 = sand.u32 %s72, 1
        %s621 = scalar_lea.sflag [#allocation3], %s620
        %s622 = sand.u32 %s72, 1
        %s623 = smul.addr %s622, 128
        %s624 = scalar_lea.vmem [#allocation2], %s623
        %p625 = pneg %p85
        %p626 = pneg %p82
        %p627 = pneg %p106
        %p628 = pneg %p103
        %p629 = pneg %p127
        %p630 = pneg %p124
        %p631 = pneg %p148
        %p632 = pneg %p145
        %p633 = pneg %p169
        %p634 = pneg %p166
        %p635 = pneg %p190
        %p636 = pneg %p187
        %p637 = pneg %p211
        %p638 = pneg %p208
        %p639 = pneg %p232
        %p640 = pneg %p229
        %p641 = pneg %p253
        %p642 = pneg %p250
        %p643 = pneg %p274
        %p644 = pneg %p271
        %p645 = pneg %p295
        %p646 = pneg %p292
        %p647 = pneg %p316
        %p648 = pneg %p313
        %p649 = pneg %p337
        %p650 = pneg %p334
        %p651 = pneg %p358
        %p652 = pneg %p355
        %p653 = pneg %p379
        %p654 = pneg %p376
        %p655 = pneg %p400
        %p656 = pneg %p397
        %p657 = pneg %p426
        %p658 = pneg %p423
        %s659 = sand.u32 %s413, 1
        %s660 = scalar_lea.sflag [#allocation4], %s659
        %s661 = sand.u32 %s413, 1
        %s662 = smul.addr %s661, 128
        %s663 = scalar_lea.vmem [#allocation15], %s662
        %s664 = smul.u32 16, %s38
        %p665 = scmp.lt.s32.totalorder %s664, 31
        %s666 = scalar_select %p665, %s664, 31
        %s667 = smul.addr %s666, 8
        %s668 = scalar_lea.vmem %s0, %s667
        %s669 = smul.u32 16, %s38
        %s670 = smul.u32 16, %s38
        %s671 = smul.u32 16, %s38
        %s672 = sld [smem:[#allocation14]]
        %s673 = sld [smem:[#allocation14 + $0x1]]
        %s674 = sld [smem:[#allocation14 + $0x2]]
        %s675 = sld [smem:[#allocation14 + $0x3]]
        %s676 = sld [smem:[#allocation14 + $0x4]]
        %v677 = vld [vmem:[%s668] sm:$0xff]
        %v678 = vld [vmem:[%s668 + $0x8] sm:$0xff]
        %v679 = vld [vmem:[%s668 + $0x10] sm:$0xff]
        %v680 = vld [vmem:[%s668 + $0x18] sm:$0xff]
        %v681 = vld [vmem:[%s668 + $0x20] sm:$0xff]
        %v682 = vld [vmem:[%s668 + $0x28] sm:$0xff]
        %v683 = vld [vmem:[%s668 + $0x30] sm:$0xff]
        %v684 = vld [vmem:[%s668 + $0x38] sm:$0xff]
        %v685 = vld [vmem:[%s668 + $0x40] sm:$0xff]
        %v686 = vld [vmem:[%s668 + $0x48] sm:$0xff]
        %v687 = vld [vmem:[%s668 + $0x50] sm:$0xff]
        %v688 = vld [vmem:[%s668 + $0x58] sm:$0xff]
        %v689 = vld [vmem:[%s668 + $0x60] sm:$0xff]
        %v690 = vld [vmem:[%s668 + $0x68] sm:$0xff]
        %v691 = vld [vmem:[%s668 + $0x70] sm:$0xff]
        %v692 = vld [vmem:[%s668 + $0x78] sm:$0xff]
        %v693 = vld [vmem:[%s2] sm:$0xff]
        %v694 = vld [vmem:[%s2 + $0x8] sm:$0xff]
        %v695 = vld [vmem:[%s2 + $0x10] sm:$0xff]
        %v696 = vld [vmem:[%s2 + $0x18] sm:$0xff]
        %v697 = vld [vmem:[%s2 + $0x20] sm:$0xff]
        %v698 = vld [vmem:[%s2 + $0x28] sm:$0xff]
        %v699 = vld [vmem:[%s2 + $0x30] sm:$0xff]
        %v700 = vld [vmem:[%s2 + $0x38] sm:$0xff]
        %v701 = vld [vmem:[%s2 + $0x40] sm:$0xff]
        %v702 = vld [vmem:[%s2 + $0x48] sm:$0xff]
        %v703 = vld [vmem:[%s2 + $0x50] sm:$0xff]
        %v704 = vld [vmem:[%s2 + $0x58] sm:$0xff]
        %v705 = vld [vmem:[%s2 + $0x60] sm:$0xff]
        %v706 = vld [vmem:[%s2 + $0x68] sm:$0xff]
        %v707 = vld [vmem:[%s2 + $0x70] sm:$0xff]
        %v708 = vld [vmem:[%s2 + $0x78] sm:$0xff]
        %v709 = vld [vmem:[%s3] sm:$0x1]
        %v711 = vlaneseq
        %v712 = vshrl.u32 %v711, 7
        %v713 = vsub.s32 0, %v712
        %v714 = vrot.slane %v709, %v713
        %716 = vmatprep.subr.mxu0 0.0
        %717 = vmatpush1.msra.mxu0 %v693
        %718 = vmatprep.subr.mxu0 0.0
        %719 = vmatpush1.msra.mxu0 %v694
        %720 = vmatprep.subr.mxu0 0.0
        %721 = vmatpush1.msra.mxu0 %v695
        %722 = vmatprep.subr.mxu0 0.0
        %723 = vmatpush1.msra.mxu0 %v696
        %724 = vmatprep.subr.mxu0 0.0
        %725 = vmatpush1.msra.mxu0 %v697
        %726 = vmatprep.subr.mxu0 0.0
        %727 = vmatpush1.msra.mxu0 %v698
        %728 = vmatprep.subr.mxu0 0.0
        %729 = vmatpush1.msra.mxu0 %v699
        %730 = vmatprep.subr.mxu0 0.0
        %731 = vmatpush1.msra.mxu0 %v700
        %732 = vmatprep.subr.mxu0 0.0
        %733 = vmatpush1.msra.mxu0 %v701
        %734 = vmatprep.subr.mxu0 0.0
        %735 = vmatpush1.msra.mxu0 %v702
        %736 = vmatprep.subr.mxu0 0.0
        %737 = vmatpush1.msra.mxu0 %v703
        %738 = vmatprep.subr.mxu0 0.0
        %739 = vmatpush1.msra.mxu0 %v704
        %740 = vmatprep.subr.mxu0 0.0
        %741 = vmatpush1.msra.mxu0 %v705
        %742 = vmatprep.subr.mxu0 0.0
        %743 = vmatpush1.msra.mxu0 %v706
        %744 = vmatprep.subr.mxu0 0.0
        %745 = vmatpush1.msra.mxu0 %v707
        %746 = vmatprep.subr.mxu0 0.0
        %747 = vmatpush1.msra.mxu0 %v708
        %748 = vmatprep.subr.mxu0 0.0
        %749 = vmatpush1.msra.mxu0 0.0
        %750 = vmatprep.subr.mxu0 0.0
        %751 = vmatpush1.msra.mxu0 0.0
        %752 = vmatprep.subr.mxu0 0.0
        %753 = vmatpush1.msra.mxu0 0.0
        %754 = vmatprep.subr.mxu0 0.0
        %755 = vmatpush1.msra.mxu0 0.0
        %756 = vmatprep.subr.mxu0 0.0
        %757 = vmatpush1.msra.mxu0 0.0
        %758 = vmatprep.subr.mxu0 0.0
        %759 = vmatpush1.msra.mxu0 0.0
        %760 = vmatprep.subr.mxu0 0.0
        %761 = vmatpush1.msra.mxu0 0.0
        %762 = vmatprep.subr.mxu0 0.0
        %763 = vmatpush1.msra.mxu0 0.0
        %764 = vmatprep.subr.mxu0 0.0
        %765 = vmatpush1.msra.mxu0 0.0
        %766 = vmatprep.subr.mxu0 0.0
        %767 = vmatpush1.msra.mxu0 0.0
        %768 = vmatprep.subr.mxu0 0.0
        %769 = vmatpush1.msra.mxu0 0.0
        %770 = vmatprep.subr.mxu0 0.0
        %771 = vmatpush1.msra.mxu0 0.0
        %772 = vmatprep.subr.mxu0 0.0
        %773 = vmatpush1.msra.mxu0 0.0
        %774 = vmatprep.subr.mxu0 0.0
        %775 = vmatpush1.msra.mxu0 0.0
        %776 = vmatprep.subr.mxu0 0.0
        %777 = vmatpush1.msra.mxu0 0.0
        %778 = vmatprep.subr.mxu0 0.0
        %779 = vmatpush1.msra.mxu0 0.0
        %780 = vmatprep.mubr.f32.mxu0 0.0
        %781 = vmatmul.mubr.f32.gmra.mrb[0].mxu0 %v677
        %v782 = vpop.f32.mrb[0].mxu0
        %v783 = vadd.f32 %v714, %v782
        %v784 = vpop.f32.mrb[0].mxu0
        %785 = vmatprep.mubr.f32.mxu0 0.0
        %786 = vmatmul.mubr.f32.gmra.mrb[0].mxu0 %v678
        %v787 = vpop.f32.mrb[0].mxu0
        %v788 = vadd.f32 %v714, %v787
        %v789 = vpop.f32.mrb[0].mxu0
        %790 = vmatprep.mubr.f32.mxu0 0.0
        %791 = vmatmul.mubr.f32.gmra.mrb[0].mxu0 %v679
        %v792 = vpop.f32.mrb[0].mxu0
        %v793 = vadd.f32 %v714, %v792
        %v794 = vpop.f32.mrb[0].mxu0
        %795 = vmatprep.mubr.f32.mxu0 0.0
        %796 = vmatmul.mubr.f32.gmra.mrb[0].mxu0 %v680
        %v797 = vpop.f32.mrb[0].mxu0
        %v798 = vadd.f32 %v714, %v797
        %v799 = vpop.f32.mrb[0].mxu0
        %800 = vmatprep.mubr.f32.mxu0 0.0
        %801 = vmatmul.mubr.f32.gmra.mrb[0].mxu0 %v681
        %v802 = vpop.f32.mrb[0].mxu0
        %v803 = vadd.f32 %v714, %v802
        %v804 = vpop.f32.mrb[0].mxu0
        %805 = vmatprep.mubr.f32.mxu0 0.0
        %806 = vmatmul.mubr.f32.gmra.mrb[0].mxu0 %v682
        %v807 = vpop.f32.mrb[0].mxu0
        %v808 = vadd.f32 %v714, %v807
        %v809 = vpop.f32.mrb[0].mxu0
        %810 = vmatprep.mubr.f32.mxu0 0.0
        %811 = vmatmul.mubr.f32.gmra.mrb[0].mxu0 %v683
        %v812 = vpop.f32.mrb[0].mxu0
        %v813 = vadd.f32 %v714, %v812
        %v814 = vpop.f32.mrb[0].mxu0
        %815 = vmatprep.mubr.f32.mxu0 0.0
        %816 = vmatmul.mubr.f32.gmra.mrb[0].mxu0 %v684
        %v817 = vpop.f32.mrb[0].mxu0
        %v818 = vadd.f32 %v714, %v817
        %v819 = vpop.f32.mrb[0].mxu0
        %820 = vmatprep.mubr.f32.mxu0 0.0
        %821 = vmatmul.mubr.f32.gmra.mrb[0].mxu0 %v685
        %v822 = vpop.f32.mrb[0].mxu0
        %v823 = vadd.f32 %v714, %v822
        %v824 = vpop.f32.mrb[0].mxu0
        %825 = vmatprep.mubr.f32.mxu0 0.0
        %826 = vmatmul.mubr.f32.gmra.mrb[0].mxu0 %v686
        %v827 = vpop.f32.mrb[0].mxu0
        %v828 = vadd.f32 %v714, %v827
        %v829 = vpop.f32.mrb[0].mxu0
        %830 = vmatprep.mubr.f32.mxu0 0.0
        %831 = vmatmul.mubr.f32.gmra.mrb[0].mxu0 %v687
        %v832 = vpop.f32.mrb[0].mxu0
        %v833 = vadd.f32 %v714, %v832
        %v834 = vpop.f32.mrb[0].mxu0
        %835 = vmatprep.mubr.f32.mxu0 0.0
        %836 = vmatmul.mubr.f32.gmra.mrb[0].mxu0 %v688
        %v837 = vpop.f32.mrb[0].mxu0
        %v838 = vadd.f32 %v714, %v837
        %v839 = vpop.f32.mrb[0].mxu0
        %840 = vmatprep.mubr.f32.mxu0 0.0
        %841 = vmatmul.mubr.f32.gmra.mrb[0].mxu0 %v689
        %v842 = vpop.f32.mrb[0].mxu0
        %v843 = vadd.f32 %v714, %v842
        %v844 = vpop.f32.mrb[0].mxu0
        %845 = vmatprep.mubr.f32.mxu0 0.0
        %846 = vmatmul.mubr.f32.gmra.mrb[0].mxu0 %v690
        %v847 = vpop.f32.mrb[0].mxu0
        %v848 = vadd.f32 %v714, %v847
        %v849 = vpop.f32.mrb[0].mxu0
        %850 = vmatprep.mubr.f32.mxu0 0.0
        %851 = vmatmul.mubr.f32.gmra.mrb[0].mxu0 %v691
        %v852 = vpop.f32.mrb[0].mxu0
        %v853 = vadd.f32 %v714, %v852
        %v854 = vpop.f32.mrb[0].mxu0
        %855 = vmatprep.mubr.f32.mxu0 0.0
        %856 = vmatmul.mubr.f32.gmra.mrb[0].mxu0 %v692
        %v857 = vpop.f32.mrb[0].mxu0
        %v858 = vadd.f32 %v714, %v857
        %v859 = vpop.f32.mrb[0].mxu0
        %860 = vdwg.mxu0
        %vm861 = vcmp.gt.f32.partialorder %v783, 0.0
        %vm862 = vcmp.gt.f32.partialorder %v788, 0.0
        %vm863 = vcmp.gt.f32.partialorder %v793, 0.0
        %vm864 = vcmp.gt.f32.partialorder %v798, 0.0
        %vm865 = vcmp.gt.f32.partialorder %v803, 0.0
        %vm866 = vcmp.gt.f32.partialorder %v808, 0.0
        %vm867 = vcmp.gt.f32.partialorder %v813, 0.0
        %vm868 = vcmp.gt.f32.partialorder %v818, 0.0
        %vm869 = vcmp.gt.f32.partialorder %v823, 0.0
        %vm870 = vcmp.gt.f32.partialorder %v828, 0.0
        %vm871 = vcmp.gt.f32.partialorder %v833, 0.0
        %vm872 = vcmp.gt.f32.partialorder %v838, 0.0
        %vm873 = vcmp.gt.f32.partialorder %v843, 0.0
        %vm874 = vcmp.gt.f32.partialorder %v848, 0.0
        %vm875 = vcmp.gt.f32.partialorder %v853, 0.0
        %vm876 = vcmp.gt.f32.partialorder %v858, 0.0
        %v877 = vstv %s673
        %v878 = vmul.f32 %v877, %v783
        %v879 = vmul.f32 %v877, %v788
        %v880 = vmul.f32 %v877, %v793
        %v881 = vmul.f32 %v877, %v798
        %v882 = vmul.f32 %v877, %v803
        %v883 = vmul.f32 %v877, %v808
        %v884 = vmul.f32 %v877, %v813
        %v885 = vmul.f32 %v877, %v818
        %v886 = vmul.f32 %v877, %v823
        %v887 = vmul.f32 %v877, %v828
        %v888 = vmul.f32 %v877, %v833
        %v889 = vmul.f32 %v877, %v838
        %v890 = vmul.f32 %v877, %v843
        %v891 = vmul.f32 %v877, %v848
        %v892 = vmul.f32 %v877, %v853
        %v893 = vmul.f32 %v877, %v858
        %v894 = vsel %vm861, %v783, %v878
        %v895 = vsel %vm862, %v788, %v879
        %v896 = vsel %vm863, %v793, %v880
        %v897 = vsel %vm864, %v798, %v881
        %v898 = vsel %vm865, %v803, %v882
        %v899 = vsel %vm866, %v808, %v883
        %v900 = vsel %vm867, %v813, %v884
        %v901 = vsel %vm868, %v818, %v885
        %v902 = vsel %vm869, %v823, %v886
        %v903 = vsel %vm870, %v828, %v887
        %v904 = vsel %vm871, %v833, %v888
        %v905 = vsel %vm872, %v838, %v889
        %v906 = vsel %vm873, %v843, %v890
        %v907 = vsel %vm874, %v848, %v891
        %v908 = vsel %vm875, %v853, %v892
        %v909 = vsel %vm876, %v858, %v893
        %v910 = vld [vmem:[%s4] sm:$0xff]
        %v911 = vld [vmem:[%s4 + $0x8] sm:$0xff]
        %v912 = vld [vmem:[%s4 + $0x10] sm:$0xff]
        %v913 = vld [vmem:[%s4 + $0x18] sm:$0xff]
        %v914 = vld [vmem:[%s5] sm:$0x1]
        %v916 = vlaneseq
        %v917 = vshrl.u32 %v916, 7
        %v918 = vsub.s32 0, %v917
        %v919 = vrot.slane %v914, %v918
        %vm921 = vcmask 261120
        %v923 = vsel %vm921, %v894, 0
        %v926 = vsel %vm921, %v895, 0
        %v929 = vsel %vm921, %v896, 0
        %v932 = vsel %vm921, %v897, 0
        %v935 = vsel %vm921, %v898, 0
        %v938 = vsel %vm921, %v899, 0
        %v941 = vsel %vm921, %v900, 0
        %v944 = vsel %vm921, %v901, 0
        %v947 = vsel %vm921, %v902, 0
        %v950 = vsel %vm921, %v903, 0
        %v953 = vsel %vm921, %v904, 0
        %v956 = vsel %vm921, %v905, 0
        %v959 = vsel %vm921, %v906, 0
        %v962 = vsel %vm921, %v907, 0
        %v965 = vsel %vm921, %v908, 0
        %v968 = vsel %vm921, %v909, 0
        %970 = vmatprep.subr.mxu0 0.0
        %971 = vmatpush1.msra.mxu0 %v910
        %972 = vmatprep.subr.mxu0 0.0
        %973 = vmatpush1.msra.mxu0 %v911
        %974 = vmatprep.subr.mxu0 0.0
        %975 = vmatpush1.msra.mxu0 %v912
        %976 = vmatprep.subr.mxu0 0.0
        %977 = vmatpush1.msra.mxu0 %v913
        %978 = vmatprep.subr.mxu0 0.0
        %979 = vmatpush1.msra.mxu0 0.0
        %980 = vmatprep.subr.mxu0 0.0
        %981 = vmatpush1.msra.mxu0 0.0
        %982 = vmatprep.subr.mxu0 0.0
        %983 = vmatpush1.msra.mxu0 0.0
        %984 = vmatprep.subr.mxu0 0.0
        %985 = vmatpush1.msra.mxu0 0.0
        %986 = vmatprep.subr.mxu0 0.0
        %987 = vmatpush1.msra.mxu0 0.0
        %988 = vmatprep.subr.mxu0 0.0
        %989 = vmatpush1.msra.mxu0 0.0
        %990 = vmatprep.subr.mxu0 0.0
        %991 = vmatpush1.msra.mxu0 0.0
        %992 = vmatprep.subr.mxu0 0.0
        %993 = vmatpush1.msra.mxu0 0.0
        %994 = vmatprep.subr.mxu0 0.0
        %995 = vmatpush1.msra.mxu0 0.0
        %996 = vmatprep.subr.mxu0 0.0
        %997 = vmatpush1.msra.mxu0 0.0
        %998 = vmatprep.subr.mxu0 0.0
        %999 = vmatpush1.msra.mxu0 0.0
        %1000 = vmatprep.subr.mxu0 0.0
        %1001 = vmatpush1.msra.mxu0 0.0
        %1002 = vmatprep.subr.mxu0 0.0
        %1003 = vmatpush1.msra.mxu0 0.0
        %1004 = vmatprep.subr.mxu0 0.0
        %1005 = vmatpush1.msra.mxu0 0.0
        %1006 = vmatprep.subr.mxu0 0.0
        %1007 = vmatpush1.msra.mxu0 0.0
        %1008 = vmatprep.subr.mxu0 0.0
        %1009 = vmatpush1.msra.mxu0 0.0
        %1010 = vmatprep.subr.mxu0 0.0
        %1011 = vmatpush1.msra.mxu0 0.0
        %1012 = vmatprep.subr.mxu0 0.0
        %1013 = vmatpush1.msra.mxu0 0.0
        %1014 = vmatprep.subr.mxu0 0.0
        %1015 = vmatpush1.msra.mxu0 0.0
        %1016 = vmatprep.subr.mxu0 0.0
        %1017 = vmatpush1.msra.mxu0 0.0
        %1018 = vmatprep.subr.mxu0 0.0
        %1019 = vmatpush1.msra.mxu0 0.0
        %1020 = vmatprep.subr.mxu0 0.0
        %1021 = vmatpush1.msra.mxu0 0.0
        %1022 = vmatprep.subr.mxu0 0.0
        %1023 = vmatpush1.msra.mxu0 0.0
        %1024 = vmatprep.subr.mxu0 0.0
        %1025 = vmatpush1.msra.mxu0 0.0
        %1026 = vmatprep.subr.mxu0 0.0
        %1027 = vmatpush1.msra.mxu0 0.0
        %1028 = vmatprep.subr.mxu0 0.0
        %1029 = vmatpush1.msra.mxu0 0.0
        %1030 = vmatprep.subr.mxu0 0.0
        %1031 = vmatpush1.msra.mxu0 0.0
        %1032 = vmatprep.subr.mxu0 0.0
        %1033 = vmatpush1.msra.mxu0 0.0
        %1034 = vmatprep.mubr.f32.mxu0 0.0
        %1035 = vmatmul.mubr.f32.gmra.mrb[0].mxu0 %v923
        %v1036 = vpop.f32.mrb[0].mxu0
        %v1037 = vadd.f32 %v919, %v1036
        %v1038 = vpop.f32.mrb[0].mxu0
        %1039 = vmatprep.mubr.f32.mxu0 0.0
        %1040 = vmatmul.mubr.f32.gmra.mrb[0].mxu0 %v926
        %v1041 = vpop.f32.mrb[0].mxu0
        %v1042 = vadd.f32 %v919, %v1041
        %v1043 = vpop.f32.mrb[0].mxu0
        %1044 = vmatprep.mubr.f32.mxu0 0.0
        %1045 = vmatmul.mubr.f32.gmra.mrb[0].mxu0 %v929
        %v1046 = vpop.f32.mrb[0].mxu0
        %v1047 = vadd.f32 %v919, %v1046
        %v1048 = vpop.f32.mrb[0].mxu0
        %1049 = vmatprep.mubr.f32.mxu0 0.0
        %1050 = vmatmul.mubr.f32.gmra.mrb[0].mxu0 %v932
        %v1051 = vpop.f32.mrb[0].mxu0
        %v1052 = vadd.f32 %v919, %v1051
        %v1053 = vpop.f32.mrb[0].mxu0
        %1054 = vmatprep.mubr.f32.mxu0 0.0
        %1055 = vmatmul.mubr.f32.gmra.mrb[0].mxu0 %v935
        %v1056 = vpop.f32.mrb[0].mxu0
        %v1057 = vadd.f32 %v919, %v1056
        %v1058 = vpop.f32.mrb[0].mxu0
        %1059 = vmatprep.mubr.f32.mxu0 0.0
        %1060 = vmatmul.mubr.f32.gmra.mrb[0].mxu0 %v938
        %v1061 = vpop.f32.mrb[0].mxu0
        %v1062 = vadd.f32 %v919, %v1061
        %v1063 = vpop.f32.mrb[0].mxu0
        %1064 = vmatprep.mubr.f32.mxu0 0.0
        %1065 = vmatmul.mubr.f32.gmra.mrb[0].mxu0 %v941
        %v1066 = vpop.f32.mrb[0].mxu0
        %v1067 = vadd.f32 %v919, %v1066
        %v1068 = vpop.f32.mrb[0].mxu0
        %1069 = vmatprep.mubr.f32.mxu0 0.0
        %1070 = vmatmul.mubr.f32.gmra.mrb[0].mxu0 %v944
        %v1071 = vpop.f32.mrb[0].mxu0
        %v1072 = vadd.f32 %v919, %v1071
        %v1073 = vpop.f32.mrb[0].mxu0
        %1074 = vmatprep.mubr.f32.mxu0 0.0
        %1075 = vmatmul.mubr.f32.gmra.mrb[0].mxu0 %v947
        %v1076 = vpop.f32.mrb[0].mxu0
        %v1077 = vadd.f32 %v919, %v1076
        %v1078 = vpop.f32.mrb[0].mxu0
        %1079 = vmatprep.mubr.f32.mxu0 0.0
        %1080 = vmatmul.mubr.f32.gmra.mrb[0].mxu0 %v950
        %v1081 = vpop.f32.mrb[0].mxu0
        %v1082 = vadd.f32 %v919, %v1081
        %v1083 = vpop.f32.mrb[0].mxu0
        %1084 = vmatprep.mubr.f32.mxu0 0.0
        %1085 = vmatmul.mubr.f32.gmra.mrb[0].mxu0 %v953
        %v1086 = vpop.f32.mrb[0].mxu0
        %v1087 = vadd.f32 %v919, %v1086
        %v1088 = vpop.f32.mrb[0].mxu0
        %1089 = vmatprep.mubr.f32.mxu0 0.0
        %1090 = vmatmul.mubr.f32.gmra.mrb[0].mxu0 %v956
        %v1091 = vpop.f32.mrb[0].mxu0
        %v1092 = vadd.f32 %v919, %v1091
        %v1093 = vpop.f32.mrb[0].mxu0
        %1094 = vmatprep.mubr.f32.mxu0 0.0
        %1095 = vmatmul.mubr.f32.gmra.mrb[0].mxu0 %v959
        %v1096 = vpop.f32.mrb[0].mxu0
        %v1097 = vadd.f32 %v919, %v1096
        %v1098 = vpop.f32.mrb[0].mxu0
        %1099 = vmatprep.mubr.f32.mxu0 0.0
        %1100 = vmatmul.mubr.f32.gmra.mrb[0].mxu0 %v962
        %v1101 = vpop.f32.mrb[0].mxu0
        %v1102 = vadd.f32 %v919, %v1101
        %v1103 = vpop.f32.mrb[0].mxu0
        %1104 = vmatprep.mubr.f32.mxu0 0.0
        %1105 = vmatmul.mubr.f32.gmra.mrb[0].mxu0 %v965
        %v1106 = vpop.f32.mrb[0].mxu0
        %v1107 = vadd.f32 %v919, %v1106
        %v1108 = vpop.f32.mrb[0].mxu0
        %1109 = vmatprep.mubr.f32.mxu0 0.0
        %1110 = vmatmul.mubr.f32.gmra.mrb[0].mxu0 %v968
        %v1111 = vpop.f32.mrb[0].mxu0
        %v1112 = vadd.f32 %v919, %v1111
        %v1113 = vpop.f32.mrb[0].mxu0
        %1114 = vdwg.mxu0
        %vm1115 = vcmp.gt.f32.partialorder %v1037, 0.0
        %vm1116 = vcmp.gt.f32.partialorder %v1042, 0.0
        %vm1117 = vcmp.gt.f32.partialorder %v1047, 0.0
        %vm1118 = vcmp.gt.f32.partialorder %v1052, 0.0
        %vm1119 = vcmp.gt.f32.partialorder %v1057, 0.0
        %vm1120 = vcmp.gt.f32.partialorder %v1062, 0.0
        %vm1121 = vcmp.gt.f32.partialorder %v1067, 0.0
        %vm1122 = vcmp.gt.f32.partialorder %v1072, 0.0
        %vm1123 = vcmp.gt.f32.partialorder %v1077, 0.0
        %vm1124 = vcmp.gt.f32.partialorder %v1082, 0.0
        %vm1125 = vcmp.gt.f32.partialorder %v1087, 0.0
        %vm1126 = vcmp.gt.f32.partialorder %v1092, 0.0
        %vm1127 = vcmp.gt.f32.partialorder %v1097, 0.0
        %vm1128 = vcmp.gt.f32.partialorder %v1102, 0.0
        %vm1129 = vcmp.gt.f32.partialorder %v1107, 0.0
        %vm1130 = vcmp.gt.f32.partialorder %v1112, 0.0
        %v1131 = vstv %s674
        %v1132 = vmul.f32 %v1131, %v1037
        %v1133 = vmul.f32 %v1131, %v1042
        %v1134 = vmul.f32 %v1131, %v1047
        %v1135 = vmul.f32 %v1131, %v1052
        %v1136 = vmul.f32 %v1131, %v1057
        %v1137 = vmul.f32 %v1131, %v1062
        %v1138 = vmul.f32 %v1131, %v1067
        %v1139 = vmul.f32 %v1131, %v1072
        %v1140 = vmul.f32 %v1131, %v1077
        %v1141 = vmul.f32 %v1131, %v1082
        %v1142 = vmul.f32 %v1131, %v1087
        %v1143 = vmul.f32 %v1131, %v1092
        %v1144 = vmul.f32 %v1131, %v1097
        %v1145 = vmul.f32 %v1131, %v1102
        %v1146 = vmul.f32 %v1131, %v1107
        %v1147 = vmul.f32 %v1131, %v1112
        %v1148 = vsel %vm1115, %v1037, %v1132
        %v1149 = vsel %vm1116, %v1042, %v1133
        %v1150 = vsel %vm1117, %v1047, %v1134
        %v1151 = vsel %vm1118, %v1052, %v1135
        %v1152 = vsel %vm1119, %v1057, %v1136
        %v1153 = vsel %vm1120, %v1062, %v1137
        %v1154 = vsel %vm1121, %v1067, %v1138
        %v1155 = vsel %vm1122, %v1072, %v1139
        %v1156 = vsel %vm1123, %v1077, %v1140
        %v1157 = vsel %vm1124, %v1082, %v1141
        %v1158 = vsel %vm1125, %v1087, %v1142
        %v1159 = vsel %vm1126, %v1092, %v1143
        %v1160 = vsel %vm1127, %v1097, %v1144
        %v1161 = vsel %vm1128, %v1102, %v1145
        %v1162 = vsel %vm1129, %v1107, %v1146
        %v1163 = vsel %vm1130, %v1112, %v1147
        %v1164 = vld [vmem:[#allocation6] sm:$0x1]
        %v1166 = vlaneseq
        %v1167 = vshrl.u32 %v1166, 7
        %v1168 = vsub.s32 0, %v1167
        %v1169 = vrot.slane %v1164, %v1168
        %v1171 = vmul.f32 %v1148, %v1169
        %v1172 = vmul.f32 %v1149, %v1169
        %v1173 = vmul.f32 %v1150, %v1169
        %v1174 = vmul.f32 %v1151, %v1169
        %v1175 = vmul.f32 %v1152, %v1169
        %v1176 = vmul.f32 %v1153, %v1169
        %v1177 = vmul.f32 %v1154, %v1169
        %v1178 = vmul.f32 %v1155, %v1169
        %v1179 = vmul.f32 %v1156, %v1169
        %v1180 = vmul.f32 %v1157, %v1169
        %v1181 = vmul.f32 %v1158, %v1169
        %v1182 = vmul.f32 %v1159, %v1169
        %v1183 = vmul.f32 %v1160, %v1169
        %v1184 = vmul.f32 %v1161, %v1169
        %v1185 = vmul.f32 %v1162, %v1169
        %v1186 = vmul.f32 %v1163, %v1169
        %v1187 = vsel %vm921, %v1171, 0.0
        %1188 = vadd.xlane.f32.xlu0 %v1187
        %v1189 = vpop.xlane.xlu0 %1188
        %v1190 = vsel %vm921, %v1172, 0.0
        %1191 = vadd.xlane.f32.xlu0 %v1190
        %v1192 = vpop.xlane.xlu0 %1191
        %v1193 = vsel %vm921, %v1173, 0.0
        %1194 = vadd.xlane.f32.xlu0 %v1193
        %v1195 = vpop.xlane.xlu0 %1194
        %v1196 = vsel %vm921, %v1174, 0.0
        %1197 = vadd.xlane.f32.xlu0 %v1196
        %v1198 = vpop.xlane.xlu0 %1197
        %v1199 = vsel %vm921, %v1175, 0.0
        %1200 = vadd.xlane.f32.xlu0 %v1199
        %v1201 = vpop.xlane.xlu0 %1200
        %v1202 = vsel %vm921, %v1176, 0.0
        %1203 = vadd.xlane.f32.xlu0 %v1202
        %v1204 = vpop.xlane.xlu0 %1203
        %v1205 = vsel %vm921, %v1177, 0.0
        %1206 = vadd.xlane.f32.xlu0 %v1205
        %v1207 = vpop.xlane.xlu0 %1206
        %v1208 = vsel %vm921, %v1178, 0.0
        %1209 = vadd.xlane.f32.xlu0 %v1208
        %v1210 = vpop.xlane.xlu0 %1209
        %v1211 = vsel %vm921, %v1179, 0.0
        %1212 = vadd.xlane.f32.xlu0 %v1211
        %v1213 = vpop.xlane.xlu0 %1212
        %v1214 = vsel %vm921, %v1180, 0.0
        %1215 = vadd.xlane.f32.xlu0 %v1214
        %v1216 = vpop.xlane.xlu0 %1215
        %v1217 = vsel %vm921, %v1181, 0.0
        %1218 = vadd.xlane.f32.xlu0 %v1217
        %v1219 = vpop.xlane.xlu0 %1218
        %v1220 = vsel %vm921, %v1182, 0.0
        %1221 = vadd.xlane.f32.xlu0 %v1220
        %v1222 = vpop.xlane.xlu0 %1221
        %v1223 = vsel %vm921, %v1183, 0.0
        %1224 = vadd.xlane.f32.xlu0 %v1223
        %v1225 = vpop.xlane.xlu0 %1224
        %v1226 = vsel %vm921, %v1184, 0.0
        %1227 = vadd.xlane.f32.xlu0 %v1226
        %v1228 = vpop.xlane.xlu0 %1227
        %v1229 = vsel %vm921, %v1185, 0.0
        %1230 = vadd.xlane.f32.xlu0 %v1229
        %v1231 = vpop.xlane.xlu0 %1230
        %v1232 = vsel %vm921, %v1186, 0.0
        %1233 = vadd.xlane.f32.xlu0 %v1232
        %v1234 = vpop.xlane.xlu0 %1233
        %v1235 = vld [vmem:[#allocation8] sm:$0x1]
        %v1237 = vlaneseq
        %v1238 = vshrl.u32 %v1237, 7
        %v1239 = vsub.s32 0, %v1238
        %v1240 = vrot.slane %v1235, %v1239
        %v1242 = vmul.f32 %v677, %v1240
        %v1243 = vmul.f32 %v678, %v1240
        %v1244 = vmul.f32 %v679, %v1240
        %v1245 = vmul.f32 %v680, %v1240
        %v1246 = vmul.f32 %v681, %v1240
        %v1247 = vmul.f32 %v682, %v1240
        %v1248 = vmul.f32 %v683, %v1240
        %v1249 = vmul.f32 %v684, %v1240
        %v1250 = vmul.f32 %v685, %v1240
        %v1251 = vmul.f32 %v686, %v1240
        %v1252 = vmul.f32 %v687, %v1240
        %v1253 = vmul.f32 %v688, %v1240
        %v1254 = vmul.f32 %v689, %v1240
        %v1255 = vmul.f32 %v690, %v1240
        %v1256 = vmul.f32 %v691, %v1240
        %v1257 = vmul.f32 %v692, %v1240
        %v1258 = vsel %vm921, %v1242, 0.0
        %1259 = vadd.xlane.f32.xlu0 %v1258
        %v1260 = vpop.xlane.xlu0 %1259
        %v1261 = vsel %vm921, %v1243, 0.0
        %1262 = vadd.xlane.f32.xlu0 %v1261
        %v1263 = vpop.xlane.xlu0 %1262
        %v1264 = vsel %vm921, %v1244, 0.0
        %1265 = vadd.xlane.f32.xlu0 %v1264
        %v1266 = vpop.xlane.xlu0 %1265
        %v1267 = vsel %vm921, %v1245, 0.0
        %1268 = vadd.xlane.f32.xlu0 %v1267
        %v1269 = vpop.xlane.xlu0 %1268
        %v1270 = vsel %vm921, %v1246, 0.0
        %1271 = vadd.xlane.f32.xlu0 %v1270
        %v1272 = vpop.xlane.xlu0 %1271
        %v1273 = vsel %vm921, %v1247, 0.0
        %1274 = vadd.xlane.f32.xlu0 %v1273
        %v1275 = vpop.xlane.xlu0 %1274
        %v1276 = vsel %vm921, %v1248, 0.0
        %1277 = vadd.xlane.f32.xlu0 %v1276
        %v1278 = vpop.xlane.xlu0 %1277
        %v1279 = vsel %vm921, %v1249, 0.0
        %1280 = vadd.xlane.f32.xlu0 %v1279
        %v1281 = vpop.xlane.xlu0 %1280
        %v1282 = vsel %vm921, %v1250, 0.0
        %1283 = vadd.xlane.f32.xlu0 %v1282
        %v1284 = vpop.xlane.xlu0 %1283
        %v1285 = vsel %vm921, %v1251, 0.0
        %1286 = vadd.xlane.f32.xlu0 %v1285
        %v1287 = vpop.xlane.xlu0 %1286
        %v1288 = vsel %vm921, %v1252, 0.0
        %1289 = vadd.xlane.f32.xlu0 %v1288
        %v1290 = vpop.xlane.xlu0 %1289
        %v1291 = vsel %vm921, %v1253, 0.0
        %1292 = vadd.xlane.f32.xlu0 %v1291
        %v1293 = vpop.xlane.xlu0 %1292
        %v1294 = vsel %vm921, %v1254, 0.0
        %1295 = vadd.xlane.f32.xlu0 %v1294
        %v1296 = vpop.xlane.xlu0 %1295
        %v1297 = vsel %vm921, %v1255, 0.0
        %1298 = vadd.xlane.f32.xlu0 %v1297
        %v1299 = vpop.xlane.xlu0 %1298
        %v1300 = vsel %vm921, %v1256, 0.0
        %1301 = vadd.xlane.f32.xlu0 %v1300
        %v1302 = vpop.xlane.xlu0 %1301
        %v1303 = vsel %vm921, %v1257, 0.0
        %1304 = vadd.xlane.f32.xlu0 %v1303
        %v1305 = vpop.xlane.xlu0 %1304
        %v1306 = vadd.f32 %v1189, %v1260
        %v1307 = vadd.f32 %v1192, %v1263
        %v1308 = vadd.f32 %v1195, %v1266
        %v1309 = vadd.f32 %v1198, %v1269
        %v1310 = vadd.f32 %v1201, %v1272
        %v1311 = vadd.f32 %v1204, %v1275
        %v1312 = vadd.f32 %v1207, %v1278
        %v1313 = vadd.f32 %v1210, %v1281
        %v1314 = vadd.f32 %v1213, %v1284
        %v1315 = vadd.f32 %v1216, %v1287
        %v1316 = vadd.f32 %v1219, %v1290
        %v1317 = vadd.f32 %v1222, %v1293
        %v1318 = vadd.f32 %v1225, %v1296
        %v1319 = vadd.f32 %v1228, %v1299
        %v1320 = vadd.f32 %v1231, %v1302
        %v1321 = vadd.f32 %v1234, %v1305
        %v1322 = vstv %s672
        %v1323 = vadd.f32 %v1306, %v1322
        %v1324 = vadd.f32 %v1307, %v1322
        %v1325 = vadd.f32 %v1308, %v1322
        %v1326 = vadd.f32 %v1309, %v1322
        %v1327 = vadd.f32 %v1310, %v1322
        %v1328 = vadd.f32 %v1311, %v1322
        %v1329 = vadd.f32 %v1312, %v1322
        %v1330 = vadd.f32 %v1313, %v1322
        %v1331 = vadd.f32 %v1314, %v1322
        %v1332 = vadd.f32 %v1315, %v1322
        %v1333 = vadd.f32 %v1316, %v1322
        %v1334 = vadd.f32 %v1317, %v1322
        %v1335 = vadd.f32 %v1318, %v1322
        %v1336 = vadd.f32 %v1319, %v1322
        %v1337 = vadd.f32 %v1320, %v1322
        %v1338 = vadd.f32 %v1321, %v1322
        %v1339 = vmax.f32 %v1323, 0.0
        %v1340 = vmax.f32 %v1324, 0.0
        %v1341 = vmax.f32 %v1325, 0.0
        %v1342 = vmax.f32 %v1326, 0.0
        %v1343 = vmax.f32 %v1327, 0.0
        %v1344 = vmax.f32 %v1328, 0.0
        %v1345 = vmax.f32 %v1329, 0.0
        %v1346 = vmax.f32 %v1330, 0.0
        %v1347 = vmax.f32 %v1331, 0.0
        %v1348 = vmax.f32 %v1332, 0.0
        %v1349 = vmax.f32 %v1333, 0.0
        %v1350 = vmax.f32 %v1334, 0.0
        %v1351 = vmax.f32 %v1335, 0.0
        %v1352 = vmax.f32 %v1336, 0.0
        %v1353 = vmax.f32 %v1337, 0.0
        %v1354 = vmax.f32 %v1338, 0.0
        %1355 = vrot.lane.b32.xlu0 %v1240, 32
        %v1356 = vpop.permute.xlu0 %1355
        %v1358 = vmul.f32 %v677, %v1356
        %v1359 = vmul.f32 %v678, %v1356
        %v1360 = vmul.f32 %v679, %v1356
        %v1361 = vmul.f32 %v680, %v1356
        %v1362 = vmul.f32 %v681, %v1356
        %v1363 = vmul.f32 %v682, %v1356
        %v1364 = vmul.f32 %v683, %v1356
        %v1365 = vmul.f32 %v684, %v1356
        %v1366 = vmul.f32 %v685, %v1356
        %v1367 = vmul.f32 %v686, %v1356
        %v1368 = vmul.f32 %v687, %v1356
        %v1369 = vmul.f32 %v688, %v1356
        %v1370 = vmul.f32 %v689, %v1356
        %v1371 = vmul.f32 %v690, %v1356
        %v1372 = vmul.f32 %v691, %v1356
        %v1373 = vmul.f32 %v692, %v1356
        %1390 = vrot.lane.b32.xlu0 %v1358, 96
        %v1391 = vpop.permute.xlu0 %1390
        %1392 = vrot.lane.b32.xlu0 %v1359, 96
        %v1393 = vpop.permute.xlu0 %1392
        %1394 = vrot.lane.b32.xlu0 %v1360, 96
        %v1395 = vpop.permute.xlu0 %1394
        %1396 = vrot.lane.b32.xlu0 %v1361, 96
        %v1397 = vpop.permute.xlu0 %1396
        %1398 = vrot.lane.b32.xlu0 %v1362, 96
        %v1399 = vpop.permute.xlu0 %1398
        %1400 = vrot.lane.b32.xlu0 %v1363, 96
        %v1401 = vpop.permute.xlu0 %1400
        %1402 = vrot.lane.b32.xlu0 %v1364, 96
        %v1403 = vpop.permute.xlu0 %1402
        %1404 = vrot.lane.b32.xlu0 %v1365, 96
        %v1405 = vpop.permute.xlu0 %1404
        %1406 = vrot.lane.b32.xlu0 %v1366, 96
        %v1407 = vpop.permute.xlu0 %1406
        %1408 = vrot.lane.b32.xlu0 %v1367, 96
        %v1409 = vpop.permute.xlu0 %1408
        %1410 = vrot.lane.b32.xlu0 %v1368, 96
        %v1411 = vpop.permute.xlu0 %1410
        %1412 = vrot.lane.b32.xlu0 %v1369, 96
        %v1413 = vpop.permute.xlu0 %1412
        %1414 = vrot.lane.b32.xlu0 %v1370, 96
        %v1415 = vpop.permute.xlu0 %1414
        %1416 = vrot.lane.b32.xlu0 %v1371, 96
        %v1417 = vpop.permute.xlu0 %1416
        %1418 = vrot.lane.b32.xlu0 %v1372, 96
        %v1419 = vpop.permute.xlu0 %1418
        %1420 = vrot.lane.b32.xlu0 %v1373, 96
        %v1421 = vpop.permute.xlu0 %1420
        %v1438 = vsel %vm921, %v1391, 0.0
        %1439 = vadd.xlane.f32.xlu0 %v1438
        %v1440 = vpop.xlane.xlu0 %1439
        %v1441 = vsel %vm921, %v1393, 0.0
        %1442 = vadd.xlane.f32.xlu0 %v1441
        %v1443 = vpop.xlane.xlu0 %1442
        %v1444 = vsel %vm921, %v1395, 0.0
        %1445 = vadd.xlane.f32.xlu0 %v1444
        %v1446 = vpop.xlane.xlu0 %1445
        %v1447 = vsel %vm921, %v1397, 0.0
        %1448 = vadd.xlane.f32.xlu0 %v1447
        %v1449 = vpop.xlane.xlu0 %1448
        %v1450 = vsel %vm921, %v1399, 0.0
        %1451 = vadd.xlane.f32.xlu0 %v1450
        %v1452 = vpop.xlane.xlu0 %1451
        %v1453 = vsel %vm921, %v1401, 0.0
        %1454 = vadd.xlane.f32.xlu0 %v1453
        %v1455 = vpop.xlane.xlu0 %1454
        %v1456 = vsel %vm921, %v1403, 0.0
        %1457 = vadd.xlane.f32.xlu0 %v1456
        %v1458 = vpop.xlane.xlu0 %1457
        %v1459 = vsel %vm921, %v1405, 0.0
        %1460 = vadd.xlane.f32.xlu0 %v1459
        %v1461 = vpop.xlane.xlu0 %1460
        %v1462 = vsel %vm921, %v1407, 0.0
        %1463 = vadd.xlane.f32.xlu0 %v1462
        %v1464 = vpop.xlane.xlu0 %1463
        %v1465 = vsel %vm921, %v1409, 0.0
        %1466 = vadd.xlane.f32.xlu0 %v1465
        %v1467 = vpop.xlane.xlu0 %1466
        %v1468 = vsel %vm921, %v1411, 0.0
        %1469 = vadd.xlane.f32.xlu0 %v1468
        %v1470 = vpop.xlane.xlu0 %1469
        %v1471 = vsel %vm921, %v1413, 0.0
        %1472 = vadd.xlane.f32.xlu0 %v1471
        %v1473 = vpop.xlane.xlu0 %1472
        %v1474 = vsel %vm921, %v1415, 0.0
        %1475 = vadd.xlane.f32.xlu0 %v1474
        %v1476 = vpop.xlane.xlu0 %1475
        %v1477 = vsel %vm921, %v1417, 0.0
        %1478 = vadd.xlane.f32.xlu0 %v1477
        %v1479 = vpop.xlane.xlu0 %1478
        %v1480 = vsel %vm921, %v1419, 0.0
        %1481 = vadd.xlane.f32.xlu0 %v1480
        %v1482 = vpop.xlane.xlu0 %1481
        %v1483 = vsel %vm921, %v1421, 0.0
        %1484 = vadd.xlane.f32.xlu0 %v1483
        %v1485 = vpop.xlane.xlu0 %1484
        %v1486 = vadd.f32 %v1189, %v1440
        %v1487 = vadd.f32 %v1192, %v1443
        %v1488 = vadd.f32 %v1195, %v1446
        %v1489 = vadd.f32 %v1198, %v1449
        %v1490 = vadd.f32 %v1201, %v1452
        %v1491 = vadd.f32 %v1204, %v1455
        %v1492 = vadd.f32 %v1207, %v1458
        %v1493 = vadd.f32 %v1210, %v1461
        %v1494 = vadd.f32 %v1213, %v1464
        %v1495 = vadd.f32 %v1216, %v1467
        %v1496 = vadd.f32 %v1219, %v1470
        %v1497 = vadd.f32 %v1222, %v1473
        %v1498 = vadd.f32 %v1225, %v1476
        %v1499 = vadd.f32 %v1228, %v1479
        %v1500 = vadd.f32 %v1231, %v1482
        %v1501 = vadd.f32 %v1234, %v1485
        %v1502 = vadd.f32 %v1486, %v1322
        %v1503 = vadd.f32 %v1487, %v1322
        %v1504 = vadd.f32 %v1488, %v1322
        %v1505 = vadd.f32 %v1489, %v1322
        %v1506 = vadd.f32 %v1490, %v1322
        %v1507 = vadd.f32 %v1491, %v1322
        %v1508 = vadd.f32 %v1492, %v1322
        %v1509 = vadd.f32 %v1493, %v1322
        %v1510 = vadd.f32 %v1494, %v1322
        %v1511 = vadd.f32 %v1495, %v1322
        %v1512 = vadd.f32 %v1496, %v1322
        %v1513 = vadd.f32 %v1497, %v1322
        %v1514 = vadd.f32 %v1498, %v1322
        %v1515 = vadd.f32 %v1499, %v1322
        %v1516 = vadd.f32 %v1500, %v1322
        %v1517 = vadd.f32 %v1501, %v1322
        %v1518 = vmax.f32 %v1502, 0.0
        %v1519 = vmax.f32 %v1503, 0.0
        %v1520 = vmax.f32 %v1504, 0.0
        %v1521 = vmax.f32 %v1505, 0.0
        %v1522 = vmax.f32 %v1506, 0.0
        %v1523 = vmax.f32 %v1507, 0.0
        %v1524 = vmax.f32 %v1508, 0.0
        %v1525 = vmax.f32 %v1509, 0.0
        %v1526 = vmax.f32 %v1510, 0.0
        %v1527 = vmax.f32 %v1511, 0.0
        %v1528 = vmax.f32 %v1512, 0.0
        %v1529 = vmax.f32 %v1513, 0.0
        %v1530 = vmax.f32 %v1514, 0.0
        %v1531 = vmax.f32 %v1515, 0.0
        %v1532 = vmax.f32 %v1516, 0.0
        %v1533 = vmax.f32 %v1517, 0.0
        %1534 = vrot.lane.b32.xlu0 %v1240, 64
        %v1535 = vpop.permute.xlu0 %1534
        %v1537 = vmul.f32 %v677, %v1535
        %v1538 = vmul.f32 %v678, %v1535
        %v1539 = vmul.f32 %v679, %v1535
        %v1540 = vmul.f32 %v680, %v1535
        %v1541 = vmul.f32 %v681, %v1535
        %v1542 = vmul.f32 %v682, %v1535
        %v1543 = vmul.f32 %v683, %v1535
        %v1544 = vmul.f32 %v684, %v1535
        %v1545 = vmul.f32 %v685, %v1535
        %v1546 = vmul.f32 %v686, %v1535
        %v1547 = vmul.f32 %v687, %v1535
        %v1548 = vmul.f32 %v688, %v1535
        %v1549 = vmul.f32 %v689, %v1535
        %v1550 = vmul.f32 %v690, %v1535
        %v1551 = vmul.f32 %v691, %v1535
        %v1552 = vmul.f32 %v692, %v1535
        %1569 = vrot.lane.b32.xlu0 %v1537, 64
        %v1570 = vpop.permute.xlu0 %1569
        %1571 = vrot.lane.b32.xlu0 %v1538, 64
        %v1572 = vpop.permute.xlu0 %1571
        %1573 = vrot.lane.b32.xlu0 %v1539, 64
        %v1574 = vpop.permute.xlu0 %1573
        %1575 = vrot.lane.b32.xlu0 %v1540, 64
        %v1576 = vpop.permute.xlu0 %1575
        %1577 = vrot.lane.b32.xlu0 %v1541, 64
        %v1578 = vpop.permute.xlu0 %1577
        %1579 = vrot.lane.b32.xlu0 %v1542, 64
        %v1580 = vpop.permute.xlu0 %1579
        %1581 = vrot.lane.b32.xlu0 %v1543, 64
        %v1582 = vpop.permute.xlu0 %1581
        %1583 = vrot.lane.b32.xlu0 %v1544, 64
        %v1584 = vpop.permute.xlu0 %1583
        %1585 = vrot.lane.b32.xlu0 %v1545, 64
        %v1586 = vpop.permute.xlu0 %1585
        %1587 = vrot.lane.b32.xlu0 %v1546, 64
        %v1588 = vpop.permute.xlu0 %1587
        %1589 = vrot.lane.b32.xlu0 %v1547, 64
        %v1590 = vpop.permute.xlu0 %1589
        %1591 = vrot.lane.b32.xlu0 %v1548, 64
        %v1592 = vpop.permute.xlu0 %1591
        %1593 = vrot.lane.b32.xlu0 %v1549, 64
        %v1594 = vpop.permute.xlu0 %1593
        %1595 = vrot.lane.b32.xlu0 %v1550, 64
        %v1596 = vpop.permute.xlu0 %1595
        %1597 = vrot.lane.b32.xlu0 %v1551, 64
        %v1598 = vpop.permute.xlu0 %1597
        %1599 = vrot.lane.b32.xlu0 %v1552, 64
        %v1600 = vpop.permute.xlu0 %1599
        %v1617 = vsel %vm921, %v1570, 0.0
        %1618 = vadd.xlane.f32.xlu0 %v1617
        %v1619 = vpop.xlane.xlu0 %1618
        %v1620 = vsel %vm921, %v1572, 0.0
        %1621 = vadd.xlane.f32.xlu0 %v1620
        %v1622 = vpop.xlane.xlu0 %1621
        %v1623 = vsel %vm921, %v1574, 0.0
        %1624 = vadd.xlane.f32.xlu0 %v1623
        %v1625 = vpop.xlane.xlu0 %1624
        %v1626 = vsel %vm921, %v1576, 0.0
        %1627 = vadd.xlane.f32.xlu0 %v1626
        %v1628 = vpop.xlane.xlu0 %1627
        %v1629 = vsel %vm921, %v1578, 0.0
        %1630 = vadd.xlane.f32.xlu0 %v1629
        %v1631 = vpop.xlane.xlu0 %1630
        %v1632 = vsel %vm921, %v1580, 0.0
        %1633 = vadd.xlane.f32.xlu0 %v1632
        %v1634 = vpop.xlane.xlu0 %1633
        %v1635 = vsel %vm921, %v1582, 0.0
        %1636 = vadd.xlane.f32.xlu0 %v1635
        %v1637 = vpop.xlane.xlu0 %1636
        %v1638 = vsel %vm921, %v1584, 0.0
        %1639 = vadd.xlane.f32.xlu0 %v1638
        %v1640 = vpop.xlane.xlu0 %1639
        %v1641 = vsel %vm921, %v1586, 0.0
        %1642 = vadd.xlane.f32.xlu0 %v1641
        %v1643 = vpop.xlane.xlu0 %1642
        %v1644 = vsel %vm921, %v1588, 0.0
        %1645 = vadd.xlane.f32.xlu0 %v1644
        %v1646 = vpop.xlane.xlu0 %1645
        %v1647 = vsel %vm921, %v1590, 0.0
        %1648 = vadd.xlane.f32.xlu0 %v1647
        %v1649 = vpop.xlane.xlu0 %1648
        %v1650 = vsel %vm921, %v1592, 0.0
        %1651 = vadd.xlane.f32.xlu0 %v1650
        %v1652 = vpop.xlane.xlu0 %1651
        %v1653 = vsel %vm921, %v1594, 0.0
        %1654 = vadd.xlane.f32.xlu0 %v1653
        %v1655 = vpop.xlane.xlu0 %1654
        %v1656 = vsel %vm921, %v1596, 0.0
        %1657 = vadd.xlane.f32.xlu0 %v1656
        %v1658 = vpop.xlane.xlu0 %1657
        %v1659 = vsel %vm921, %v1598, 0.0
        %1660 = vadd.xlane.f32.xlu0 %v1659
        %v1661 = vpop.xlane.xlu0 %1660
        %v1662 = vsel %vm921, %v1600, 0.0
        %1663 = vadd.xlane.f32.xlu0 %v1662
        %v1664 = vpop.xlane.xlu0 %1663
        %v1665 = vadd.f32 %v1189, %v1619
        %v1666 = vadd.f32 %v1192, %v1622
        %v1667 = vadd.f32 %v1195, %v1625
        %v1668 = vadd.f32 %v1198, %v1628
        %v1669 = vadd.f32 %v1201, %v1631
        %v1670 = vadd.f32 %v1204, %v1634
        %v1671 = vadd.f32 %v1207, %v1637
        %v1672 = vadd.f32 %v1210, %v1640
        %v1673 = vadd.f32 %v1213, %v1643
        %v1674 = vadd.f32 %v1216, %v1646
        %v1675 = vadd.f32 %v1219, %v1649
        %v1676 = vadd.f32 %v1222, %v1652
        %v1677 = vadd.f32 %v1225, %v1655
        %v1678 = vadd.f32 %v1228, %v1658
        %v1679 = vadd.f32 %v1231, %v1661
        %v1680 = vadd.f32 %v1234, %v1664
        %v1681 = vadd.f32 %v1665, %v1322
        %v1682 = vadd.f32 %v1666, %v1322
        %v1683 = vadd.f32 %v1667, %v1322
        %v1684 = vadd.f32 %v1668, %v1322
        %v1685 = vadd.f32 %v1669, %v1322
        %v1686 = vadd.f32 %v1670, %v1322
        %v1687 = vadd.f32 %v1671, %v1322
        %v1688 = vadd.f32 %v1672, %v1322
        %v1689 = vadd.f32 %v1673, %v1322
        %v1690 = vadd.f32 %v1674, %v1322
        %v1691 = vadd.f32 %v1675, %v1322
        %v1692 = vadd.f32 %v1676, %v1322
        %v1693 = vadd.f32 %v1677, %v1322
        %v1694 = vadd.f32 %v1678, %v1322
        %v1695 = vadd.f32 %v1679, %v1322
        %v1696 = vadd.f32 %v1680, %v1322
        %v1697 = vmax.f32 %v1681, 0.0
        %v1698 = vmax.f32 %v1682, 0.0
        %v1699 = vmax.f32 %v1683, 0.0
        %v1700 = vmax.f32 %v1684, 0.0
        %v1701 = vmax.f32 %v1685, 0.0
        %v1702 = vmax.f32 %v1686, 0.0
        %v1703 = vmax.f32 %v1687, 0.0
        %v1704 = vmax.f32 %v1688, 0.0
        %v1705 = vmax.f32 %v1689, 0.0
        %v1706 = vmax.f32 %v1690, 0.0
        %v1707 = vmax.f32 %v1691, 0.0
        %v1708 = vmax.f32 %v1692, 0.0
        %v1709 = vmax.f32 %v1693, 0.0
        %v1710 = vmax.f32 %v1694, 0.0
        %v1711 = vmax.f32 %v1695, 0.0
        %v1712 = vmax.f32 %v1696, 0.0
        %v1713 = vmax.f32 %v1339, %v1518
        %v1714 = vmax.f32 %v1340, %v1519
        %v1715 = vmax.f32 %v1341, %v1520
        %v1716 = vmax.f32 %v1342, %v1521
        %v1717 = vmax.f32 %v1343, %v1522
        %v1718 = vmax.f32 %v1344, %v1523
        %v1719 = vmax.f32 %v1345, %v1524
        %v1720 = vmax.f32 %v1346, %v1525
        %v1721 = vmax.f32 %v1347, %v1526
        %v1722 = vmax.f32 %v1348, %v1527
        %v1723 = vmax.f32 %v1349, %v1528
        %v1724 = vmax.f32 %v1350, %v1529
        %v1725 = vmax.f32 %v1351, %v1530
        %v1726 = vmax.f32 %v1352, %v1531
        %v1727 = vmax.f32 %v1353, %v1532
        %v1728 = vmax.f32 %v1354, %v1533
        %v1729 = vmax.f32 %v1713, %v1697
        %v1730 = vmax.f32 %v1714, %v1698
        %v1731 = vmax.f32 %v1715, %v1699
        %v1732 = vmax.f32 %v1716, %v1700
        %v1733 = vmax.f32 %v1717, %v1701
        %v1734 = vmax.f32 %v1718, %v1702
        %v1735 = vmax.f32 %v1719, %v1703
        %v1736 = vmax.f32 %v1720, %v1704
        %v1737 = vmax.f32 %v1721, %v1705
        %v1738 = vmax.f32 %v1722, %v1706
        %v1739 = vmax.f32 %v1723, %v1707
        %v1740 = vmax.f32 %v1724, %v1708
        %v1741 = vmax.f32 %v1725, %v1709
        %v1742 = vmax.f32 %v1726, %v1710
        %v1743 = vmax.f32 %v1727, %v1711
        %v1744 = vmax.f32 %v1728, %v1712
        %v1745 = vsub.f32 %v1339, %v1729
        %v1746 = vsub.f32 %v1340, %v1730
        %v1747 = vsub.f32 %v1341, %v1731
        %v1748 = vsub.f32 %v1342, %v1732
        %v1749 = vsub.f32 %v1343, %v1733
        %v1750 = vsub.f32 %v1344, %v1734
        %v1751 = vsub.f32 %v1345, %v1735
        %v1752 = vsub.f32 %v1346, %v1736
        %v1753 = vsub.f32 %v1347, %v1737
        %v1754 = vsub.f32 %v1348, %v1738
        %v1755 = vsub.f32 %v1349, %v1739
        %v1756 = vsub.f32 %v1350, %v1740
        %v1757 = vsub.f32 %v1351, %v1741
        %v1758 = vsub.f32 %v1352, %v1742
        %v1759 = vsub.f32 %v1353, %v1743
        %v1760 = vsub.f32 %v1354, %v1744
        %v1761 = vmul.f32 %v1745, 1.442695
        %v1762 = vpow.pop %v1761
        %v1763 = vmul.f32 %v1746, 1.442695
        %v1764 = vpow.pop %v1763
        %v1765 = vmul.f32 %v1747, 1.442695
        %v1766 = vpow.pop %v1765
        %v1767 = vmul.f32 %v1748, 1.442695
        %v1768 = vpow.pop %v1767
        %v1769 = vmul.f32 %v1749, 1.442695
        %v1770 = vpow.pop %v1769
        %v1771 = vmul.f32 %v1750, 1.442695
        %v1772 = vpow.pop %v1771
        %v1773 = vmul.f32 %v1751, 1.442695
        %v1774 = vpow.pop %v1773
        %v1775 = vmul.f32 %v1752, 1.442695
        %v1776 = vpow.pop %v1775
        %v1777 = vmul.f32 %v1753, 1.442695
        %v1778 = vpow.pop %v1777
        %v1779 = vmul.f32 %v1754, 1.442695
        %v1780 = vpow.pop %v1779
        %v1781 = vmul.f32 %v1755, 1.442695
        %v1782 = vpow.pop %v1781
        %v1783 = vmul.f32 %v1756, 1.442695
        %v1784 = vpow.pop %v1783
        %v1785 = vmul.f32 %v1757, 1.442695
        %v1786 = vpow.pop %v1785
        %v1787 = vmul.f32 %v1758, 1.442695
        %v1788 = vpow.pop %v1787
        %v1789 = vmul.f32 %v1759, 1.442695
        %v1790 = vpow.pop %v1789
        %v1791 = vmul.f32 %v1760, 1.442695
        %v1792 = vpow.pop %v1791
        %v1793 = vsub.f32 %v1518, %v1729
        %v1794 = vsub.f32 %v1519, %v1730
        %v1795 = vsub.f32 %v1520, %v1731
        %v1796 = vsub.f32 %v1521, %v1732
        %v1797 = vsub.f32 %v1522, %v1733
        %v1798 = vsub.f32 %v1523, %v1734
        %v1799 = vsub.f32 %v1524, %v1735
        %v1800 = vsub.f32 %v1525, %v1736
        %v1801 = vsub.f32 %v1526, %v1737
        %v1802 = vsub.f32 %v1527, %v1738
        %v1803 = vsub.f32 %v1528, %v1739
        %v1804 = vsub.f32 %v1529, %v1740
        %v1805 = vsub.f32 %v1530, %v1741
        %v1806 = vsub.f32 %v1531, %v1742
        %v1807 = vsub.f32 %v1532, %v1743
        %v1808 = vsub.f32 %v1533, %v1744
        %v1809 = vmul.f32 %v1793, 1.442695
        %v1810 = vpow.pop %v1809
        %v1811 = vmul.f32 %v1794, 1.442695
        %v1812 = vpow.pop %v1811
        %v1813 = vmul.f32 %v1795, 1.442695
        %v1814 = vpow.pop %v1813
        %v1815 = vmul.f32 %v1796, 1.442695
        %v1816 = vpow.pop %v1815
        %v1817 = vmul.f32 %v1797, 1.442695
        %v1818 = vpow.pop %v1817
        %v1819 = vmul.f32 %v1798, 1.442695
        %v1820 = vpow.pop %v1819
        %v1821 = vmul.f32 %v1799, 1.442695
        %v1822 = vpow.pop %v1821
        %v1823 = vmul.f32 %v1800, 1.442695
        %v1824 = vpow.pop %v1823
        %v1825 = vmul.f32 %v1801, 1.442695
        %v1826 = vpow.pop %v1825
        %v1827 = vmul.f32 %v1802, 1.442695
        %v1828 = vpow.pop %v1827
        %v1829 = vmul.f32 %v1803, 1.442695
        %v1830 = vpow.pop %v1829
        %v1831 = vmul.f32 %v1804, 1.442695
        %v1832 = vpow.pop %v1831
        %v1833 = vmul.f32 %v1805, 1.442695
        %v1834 = vpow.pop %v1833
        %v1835 = vmul.f32 %v1806, 1.442695
        %v1836 = vpow.pop %v1835
        %v1837 = vmul.f32 %v1807, 1.442695
        %v1838 = vpow.pop %v1837
        %v1839 = vmul.f32 %v1808, 1.442695
        %v1840 = vpow.pop %v1839
        %v1841 = vsub.f32 %v1697, %v1729
        %v1842 = vsub.f32 %v1698, %v1730
        %v1843 = vsub.f32 %v1699, %v1731
        %v1844 = vsub.f32 %v1700, %v1732
        %v1845 = vsub.f32 %v1701, %v1733
        %v1846 = vsub.f32 %v1702, %v1734
        %v1847 = vsub.f32 %v1703, %v1735
        %v1848 = vsub.f32 %v1704, %v1736
        %v1849 = vsub.f32 %v1705, %v1737
        %v1850 = vsub.f32 %v1706, %v1738
        %v1851 = vsub.f32 %v1707, %v1739
        %v1852 = vsub.f32 %v1708, %v1740
        %v1853 = vsub.f32 %v1709, %v1741
        %v1854 = vsub.f32 %v1710, %v1742
        %v1855 = vsub.f32 %v1711, %v1743
        %v1856 = vsub.f32 %v1712, %v1744
        %v1857 = vmul.f32 %v1841, 1.442695
        %v1858 = vpow.pop %v1857
        %v1859 = vmul.f32 %v1842, 1.442695
        %v1860 = vpow.pop %v1859
        %v1861 = vmul.f32 %v1843, 1.442695
        %v1862 = vpow.pop %v1861
        %v1863 = vmul.f32 %v1844, 1.442695
        %v1864 = vpow.pop %v1863
        %v1865 = vmul.f32 %v1845, 1.442695
        %v1866 = vpow.pop %v1865
        %v1867 = vmul.f32 %v1846, 1.442695
        %v1868 = vpow.pop %v1867
        %v1869 = vmul.f32 %v1847, 1.442695
        %v1870 = vpow.pop %v1869
        %v1871 = vmul.f32 %v1848, 1.442695
        %v1872 = vpow.pop %v1871
        %v1873 = vmul.f32 %v1849, 1.442695
        %v1874 = vpow.pop %v1873
        %v1875 = vmul.f32 %v1850, 1.442695
        %v1876 = vpow.pop %v1875
        %v1877 = vmul.f32 %v1851, 1.442695
        %v1878 = vpow.pop %v1877
        %v1879 = vmul.f32 %v1852, 1.442695
        %v1880 = vpow.pop %v1879
        %v1881 = vmul.f32 %v1853, 1.442695
        %v1882 = vpow.pop %v1881
        %v1883 = vmul.f32 %v1854, 1.442695
        %v1884 = vpow.pop %v1883
        %v1885 = vmul.f32 %v1855, 1.442695
        %v1886 = vpow.pop %v1885
        %v1887 = vmul.f32 %v1856, 1.442695
        %v1888 = vpow.pop %v1887
        %v1889 = vadd.f32 %v1762, %v1810
        %v1890 = vadd.f32 %v1764, %v1812
        %v1891 = vadd.f32 %v1766, %v1814
        %v1892 = vadd.f32 %v1768, %v1816
        %v1893 = vadd.f32 %v1770, %v1818
        %v1894 = vadd.f32 %v1772, %v1820
        %v1895 = vadd.f32 %v1774, %v1822
        %v1896 = vadd.f32 %v1776, %v1824
        %v1897 = vadd.f32 %v1778, %v1826
        %v1898 = vadd.f32 %v1780, %v1828
        %v1899 = vadd.f32 %v1782, %v1830
        %v1900 = vadd.f32 %v1784, %v1832
        %v1901 = vadd.f32 %v1786, %v1834
        %v1902 = vadd.f32 %v1788, %v1836
        %v1903 = vadd.f32 %v1790, %v1838
        %v1904 = vadd.f32 %v1792, %v1840
        %v1905 = vadd.f32 %v1889, %v1858
        %v1906 = vadd.f32 %v1890, %v1860
        %v1907 = vadd.f32 %v1891, %v1862
        %v1908 = vadd.f32 %v1892, %v1864
        %v1909 = vadd.f32 %v1893, %v1866
        %v1910 = vadd.f32 %v1894, %v1868
        %v1911 = vadd.f32 %v1895, %v1870
        %v1912 = vadd.f32 %v1896, %v1872
        %v1913 = vadd.f32 %v1897, %v1874
        %v1914 = vadd.f32 %v1898, %v1876
        %v1915 = vadd.f32 %v1899, %v1878
        %v1916 = vadd.f32 %v1900, %v1880
        %v1917 = vadd.f32 %v1901, %v1882
        %v1918 = vadd.f32 %v1902, %v1884
        %v1919 = vadd.f32 %v1903, %v1886
        %v1920 = vadd.f32 %v1904, %v1888
        %v1921 = vrcp.pop %v1905
        %v1922 = vmul.f32 1.0, %v1921
        %v1923 = vrcp.pop %v1906
        %v1924 = vmul.f32 1.0, %v1923
        %v1925 = vrcp.pop %v1907
        %v1926 = vmul.f32 1.0, %v1925
        %v1927 = vrcp.pop %v1908
        %v1928 = vmul.f32 1.0, %v1927
        %v1929 = vrcp.pop %v1909
        %v1930 = vmul.f32 1.0, %v1929
        %v1931 = vrcp.pop %v1910
        %v1932 = vmul.f32 1.0, %v1931
        %v1933 = vrcp.pop %v1911
        %v1934 = vmul.f32 1.0, %v1933
        %v1935 = vrcp.pop %v1912
        %v1936 = vmul.f32 1.0, %v1935
        %v1937 = vrcp.pop %v1913
        %v1938 = vmul.f32 1.0, %v1937
        %v1939 = vrcp.pop %v1914
        %v1940 = vmul.f32 1.0, %v1939
        %v1941 = vrcp.pop %v1915
        %v1942 = vmul.f32 1.0, %v1941
        %v1943 = vrcp.pop %v1916
        %v1944 = vmul.f32 1.0, %v1943
        %v1945 = vrcp.pop %v1917
        %v1946 = vmul.f32 1.0, %v1945
        %v1947 = vrcp.pop %v1918
        %v1948 = vmul.f32 1.0, %v1947
        %v1949 = vrcp.pop %v1919
        %v1950 = vmul.f32 1.0, %v1949
        %v1951 = vrcp.pop %v1920
        %v1952 = vmul.f32 1.0, %v1951
        %v1953 = vmul.f32 %v1762, %v1922
        %v1954 = vmul.f32 %v1764, %v1924
        %v1955 = vmul.f32 %v1766, %v1926
        %v1956 = vmul.f32 %v1768, %v1928
        %v1957 = vmul.f32 %v1770, %v1930
        %v1958 = vmul.f32 %v1772, %v1932
        %v1959 = vmul.f32 %v1774, %v1934
        %v1960 = vmul.f32 %v1776, %v1936
        %v1961 = vmul.f32 %v1778, %v1938
        %v1962 = vmul.f32 %v1780, %v1940
        %v1963 = vmul.f32 %v1782, %v1942
        %v1964 = vmul.f32 %v1784, %v1944
        %v1965 = vmul.f32 %v1786, %v1946
        %v1966 = vmul.f32 %v1788, %v1948
        %v1967 = vmul.f32 %v1790, %v1950
        %v1968 = vmul.f32 %v1792, %v1952
        %v1969 = vmul.f32 %v1810, %v1922
        %v1970 = vmul.f32 %v1812, %v1924
        %v1971 = vmul.f32 %v1814, %v1926
        %v1972 = vmul.f32 %v1816, %v1928
        %v1973 = vmul.f32 %v1818, %v1930
        %v1974 = vmul.f32 %v1820, %v1932
        %v1975 = vmul.f32 %v1822, %v1934
        %v1976 = vmul.f32 %v1824, %v1936
        %v1977 = vmul.f32 %v1826, %v1938
        %v1978 = vmul.f32 %v1828, %v1940
        %v1979 = vmul.f32 %v1830, %v1942
        %v1980 = vmul.f32 %v1832, %v1944
        %v1981 = vmul.f32 %v1834, %v1946
        %v1982 = vmul.f32 %v1836, %v1948
        %v1983 = vmul.f32 %v1838, %v1950
        %v1984 = vmul.f32 %v1840, %v1952
        %v1985 = vmul.f32 %v1858, %v1922
        %v1986 = vmul.f32 %v1860, %v1924
        %v1987 = vmul.f32 %v1862, %v1926
        %v1988 = vmul.f32 %v1864, %v1928
        %v1989 = vmul.f32 %v1866, %v1930
        %v1990 = vmul.f32 %v1868, %v1932
        %v1991 = vmul.f32 %v1870, %v1934
        %v1992 = vmul.f32 %v1872, %v1936
        %v1993 = vmul.f32 %v1874, %v1938
        %v1994 = vmul.f32 %v1876, %v1940
        %v1995 = vmul.f32 %v1878, %v1942
        %v1996 = vmul.f32 %v1880, %v1944
        %v1997 = vmul.f32 %v1882, %v1946
        %v1998 = vmul.f32 %v1884, %v1948
        %v1999 = vmul.f32 %v1886, %v1950
        %v2000 = vmul.f32 %v1888, %v1952
        %v2001 = vmul.f32 %v677, %v1953
        %v2002 = vmul.f32 %v678, %v1954
        %v2003 = vmul.f32 %v679, %v1955
        %v2004 = vmul.f32 %v680, %v1956
        %v2005 = vmul.f32 %v681, %v1957
        %v2006 = vmul.f32 %v682, %v1958
        %v2007 = vmul.f32 %v683, %v1959
        %v2008 = vmul.f32 %v684, %v1960
        %v2009 = vmul.f32 %v685, %v1961
        %v2010 = vmul.f32 %v686, %v1962
        %v2011 = vmul.f32 %v687, %v1963
        %v2012 = vmul.f32 %v688, %v1964
        %v2013 = vmul.f32 %v689, %v1965
        %v2014 = vmul.f32 %v690, %v1966
        %v2015 = vmul.f32 %v691, %v1967
        %v2016 = vmul.f32 %v692, %v1968
        %v2017 = vmul.f32 %v677, %v1969
        %v2018 = vmul.f32 %v678, %v1970
        %v2019 = vmul.f32 %v679, %v1971
        %v2020 = vmul.f32 %v680, %v1972
        %v2021 = vmul.f32 %v681, %v1973
        %v2022 = vmul.f32 %v682, %v1974
        %v2023 = vmul.f32 %v683, %v1975
        %v2024 = vmul.f32 %v684, %v1976
        %v2025 = vmul.f32 %v685, %v1977
        %v2026 = vmul.f32 %v686, %v1978
        %v2027 = vmul.f32 %v687, %v1979
        %v2028 = vmul.f32 %v688, %v1980
        %v2029 = vmul.f32 %v689, %v1981
        %v2030 = vmul.f32 %v690, %v1982
        %v2031 = vmul.f32 %v691, %v1983
        %v2032 = vmul.f32 %v692, %v1984
        %2049 = vrot.lane.b32.xlu0 %v2017, 96
        %v2050 = vpop.permute.xlu0 %2049
        %2051 = vrot.lane.b32.xlu0 %v2018, 96
        %v2052 = vpop.permute.xlu0 %2051
        %2053 = vrot.lane.b32.xlu0 %v2019, 96
        %v2054 = vpop.permute.xlu0 %2053
        %2055 = vrot.lane.b32.xlu0 %v2020, 96
        %v2056 = vpop.permute.xlu0 %2055
        %2057 = vrot.lane.b32.xlu0 %v2021, 96
        %v2058 = vpop.permute.xlu0 %2057
        %2059 = vrot.lane.b32.xlu0 %v2022, 96
        %v2060 = vpop.permute.xlu0 %2059
        %2061 = vrot.lane.b32.xlu0 %v2023, 96
        %v2062 = vpop.permute.xlu0 %2061
        %2063 = vrot.lane.b32.xlu0 %v2024, 96
        %v2064 = vpop.permute.xlu0 %2063
        %2065 = vrot.lane.b32.xlu0 %v2025, 96
        %v2066 = vpop.permute.xlu0 %2065
        %2067 = vrot.lane.b32.xlu0 %v2026, 96
        %v2068 = vpop.permute.xlu0 %2067
        %2069 = vrot.lane.b32.xlu0 %v2027, 96
        %v2070 = vpop.permute.xlu0 %2069
        %2071 = vrot.lane.b32.xlu0 %v2028, 96
        %v2072 = vpop.permute.xlu0 %2071
        %2073 = vrot.lane.b32.xlu0 %v2029, 96
        %v2074 = vpop.permute.xlu0 %2073
        %2075 = vrot.lane.b32.xlu0 %v2030, 96
        %v2076 = vpop.permute.xlu0 %2075
        %2077 = vrot.lane.b32.xlu0 %v2031, 96
        %v2078 = vpop.permute.xlu0 %2077
        %2079 = vrot.lane.b32.xlu0 %v2032, 96
        %v2080 = vpop.permute.xlu0 %2079
        %v2097 = vadd.f32 %v2001, %v2050
        %v2098 = vadd.f32 %v2002, %v2052
        %v2099 = vadd.f32 %v2003, %v2054
        %v2100 = vadd.f32 %v2004, %v2056
        %v2101 = vadd.f32 %v2005, %v2058
        %v2102 = vadd.f32 %v2006, %v2060
        %v2103 = vadd.f32 %v2007, %v2062
        %v2104 = vadd.f32 %v2008, %v2064
        %v2105 = vadd.f32 %v2009, %v2066
        %v2106 = vadd.f32 %v2010, %v2068
        %v2107 = vadd.f32 %v2011, %v2070
        %v2108 = vadd.f32 %v2012, %v2072
        %v2109 = vadd.f32 %v2013, %v2074
        %v2110 = vadd.f32 %v2014, %v2076
        %v2111 = vadd.f32 %v2015, %v2078
        %v2112 = vadd.f32 %v2016, %v2080
        %v2113 = vmul.f32 %v677, %v1985
        %v2114 = vmul.f32 %v678, %v1986
        %v2115 = vmul.f32 %v679, %v1987
        %v2116 = vmul.f32 %v680, %v1988
        %v2117 = vmul.f32 %v681, %v1989
        %v2118 = vmul.f32 %v682, %v1990
        %v2119 = vmul.f32 %v683, %v1991
        %v2120 = vmul.f32 %v684, %v1992
        %v2121 = vmul.f32 %v685, %v1993
        %v2122 = vmul.f32 %v686, %v1994
        %v2123 = vmul.f32 %v687, %v1995
        %v2124 = vmul.f32 %v688, %v1996
        %v2125 = vmul.f32 %v689, %v1997
        %v2126 = vmul.f32 %v690, %v1998
        %v2127 = vmul.f32 %v691, %v1999
        %v2128 = vmul.f32 %v692, %v2000
        %2145 = vrot.lane.b32.xlu0 %v2113, 64
        %v2146 = vpop.permute.xlu0 %2145
        %2147 = vrot.lane.b32.xlu0 %v2114, 64
        %v2148 = vpop.permute.xlu0 %2147
        %2149 = vrot.lane.b32.xlu0 %v2115, 64
        %v2150 = vpop.permute.xlu0 %2149
        %2151 = vrot.lane.b32.xlu0 %v2116, 64
        %v2152 = vpop.permute.xlu0 %2151
        %2153 = vrot.lane.b32.xlu0 %v2117, 64
        %v2154 = vpop.permute.xlu0 %2153
        %2155 = vrot.lane.b32.xlu0 %v2118, 64
        %v2156 = vpop.permute.xlu0 %2155
        %2157 = vrot.lane.b32.xlu0 %v2119, 64
        %v2158 = vpop.permute.xlu0 %2157
        %2159 = vrot.lane.b32.xlu0 %v2120, 64
        %v2160 = vpop.permute.xlu0 %2159
        %2161 = vrot.lane.b32.xlu0 %v2121, 64
        %v2162 = vpop.permute.xlu0 %2161
        %2163 = vrot.lane.b32.xlu0 %v2122, 64
        %v2164 = vpop.permute.xlu0 %2163
        %2165 = vrot.lane.b32.xlu0 %v2123, 64
        %v2166 = vpop.permute.xlu0 %2165
        %2167 = vrot.lane.b32.xlu0 %v2124, 64
        %v2168 = vpop.permute.xlu0 %2167
        %2169 = vrot.lane.b32.xlu0 %v2125, 64
        %v2170 = vpop.permute.xlu0 %2169
        %2171 = vrot.lane.b32.xlu0 %v2126, 64
        %v2172 = vpop.permute.xlu0 %2171
        %2173 = vrot.lane.b32.xlu0 %v2127, 64
        %v2174 = vpop.permute.xlu0 %2173
        %2175 = vrot.lane.b32.xlu0 %v2128, 64
        %v2176 = vpop.permute.xlu0 %2175
        %v2193 = vadd.f32 %v2097, %v2146
        %v2194 = vadd.f32 %v2098, %v2148
        %v2195 = vadd.f32 %v2099, %v2150
        %v2196 = vadd.f32 %v2100, %v2152
        %v2197 = vadd.f32 %v2101, %v2154
        %v2198 = vadd.f32 %v2102, %v2156
        %v2199 = vadd.f32 %v2103, %v2158
        %v2200 = vadd.f32 %v2104, %v2160
        %v2201 = vadd.f32 %v2105, %v2162
        %v2202 = vadd.f32 %v2106, %v2164
        %v2203 = vadd.f32 %v2107, %v2166
        %v2204 = vadd.f32 %v2108, %v2168
        %v2205 = vadd.f32 %v2109, %v2170
        %v2206 = vadd.f32 %v2110, %v2172
        %v2207 = vadd.f32 %v2111, %v2174
        %v2208 = vadd.f32 %v2112, %v2176
        %v2209 = vld [vmem:[#allocation9] sm:$0xff]
        %v2210 = vld [vmem:[#allocation9 + $0x8] sm:$0xff]
        %v2211 = vld [vmem:[#allocation9 + $0x10] sm:$0xff]
        %v2212 = vld [vmem:[#allocation9 + $0x18] sm:$0xff]
        %v2213 = vld [vmem:[#allocation11] sm:$0x1]
        %v2215 = vlaneseq
        %v2216 = vshrl.u32 %v2215, 7
        %v2217 = vsub.s32 0, %v2216
        %v2218 = vrot.slane %v2213, %v2217
        %v2221 = vsel %vm921, %v2193, 0
        %v2224 = vsel %vm921, %v2194, 0
        %v2227 = vsel %vm921, %v2195, 0
        %v2230 = vsel %vm921, %v2196, 0
        %v2233 = vsel %vm921, %v2197, 0
        %v2236 = vsel %vm921, %v2198, 0
        %v2239 = vsel %vm921, %v2199, 0
        %v2242 = vsel %vm921, %v2200, 0
        %v2245 = vsel %vm921, %v2201, 0
        %v2248 = vsel %vm921, %v2202, 0
        %v2251 = vsel %vm921, %v2203, 0
        %v2254 = vsel %vm921, %v2204, 0
        %v2257 = vsel %vm921, %v2205, 0
        %v2260 = vsel %vm921, %v2206, 0
        %v2263 = vsel %vm921, %v2207, 0
        %v2266 = vsel %vm921, %v2208, 0
        %2268 = vmatprep.subr.mxu0 0.0
        %2269 = vmatpush1.msra.mxu0 %v2209
        %2270 = vmatprep.subr.mxu0 0.0
        %2271 = vmatpush1.msra.mxu0 %v2210
        %2272 = vmatprep.subr.mxu0 0.0
        %2273 = vmatpush1.msra.mxu0 %v2211
        %2274 = vmatprep.subr.mxu0 0.0
        %2275 = vmatpush1.msra.mxu0 %v2212
        %2276 = vmatprep.subr.mxu0 0.0
        %2277 = vmatpush1.msra.mxu0 0.0
        %2278 = vmatprep.subr.mxu0 0.0
        %2279 = vmatpush1.msra.mxu0 0.0
        %2280 = vmatprep.subr.mxu0 0.0
        %2281 = vmatpush1.msra.mxu0 0.0
        %2282 = vmatprep.subr.mxu0 0.0
        %2283 = vmatpush1.msra.mxu0 0.0
        %2284 = vmatprep.subr.mxu0 0.0
        %2285 = vmatpush1.msra.mxu0 0.0
        %2286 = vmatprep.subr.mxu0 0.0
        %2287 = vmatpush1.msra.mxu0 0.0
        %2288 = vmatprep.subr.mxu0 0.0
        %2289 = vmatpush1.msra.mxu0 0.0
        %2290 = vmatprep.subr.mxu0 0.0
        %2291 = vmatpush1.msra.mxu0 0.0
        %2292 = vmatprep.subr.mxu0 0.0
        %2293 = vmatpush1.msra.mxu0 0.0
        %2294 = vmatprep.subr.mxu0 0.0
        %2295 = vmatpush1.msra.mxu0 0.0
        %2296 = vmatprep.subr.mxu0 0.0
        %2297 = vmatpush1.msra.mxu0 0.0
        %2298 = vmatprep.subr.mxu0 0.0
        %2299 = vmatpush1.msra.mxu0 0.0
        %2300 = vmatprep.subr.mxu0 0.0
        %2301 = vmatpush1.msra.mxu0 0.0
        %2302 = vmatprep.subr.mxu0 0.0
        %2303 = vmatpush1.msra.mxu0 0.0
        %2304 = vmatprep.subr.mxu0 0.0
        %2305 = vmatpush1.msra.mxu0 0.0
        %2306 = vmatprep.subr.mxu0 0.0
        %2307 = vmatpush1.msra.mxu0 0.0
        %2308 = vmatprep.subr.mxu0 0.0
        %2309 = vmatpush1.msra.mxu0 0.0
        %2310 = vmatprep.subr.mxu0 0.0
        %2311 = vmatpush1.msra.mxu0 0.0
        %2312 = vmatprep.subr.mxu0 0.0
        %2313 = vmatpush1.msra.mxu0 0.0
        %2314 = vmatprep.subr.mxu0 0.0
        %2315 = vmatpush1.msra.mxu0 0.0
        %2316 = vmatprep.subr.mxu0 0.0
        %2317 = vmatpush1.msra.mxu0 0.0
        %2318 = vmatprep.subr.mxu0 0.0
        %2319 = vmatpush1.msra.mxu0 0.0
        %2320 = vmatprep.subr.mxu0 0.0
        %2321 = vmatpush1.msra.mxu0 0.0
        %2322 = vmatprep.subr.mxu0 0.0
        %2323 = vmatpush1.msra.mxu0 0.0
        %2324 = vmatprep.subr.mxu0 0.0
        %2325 = vmatpush1.msra.mxu0 0.0
        %2326 = vmatprep.subr.mxu0 0.0
        %2327 = vmatpush1.msra.mxu0 0.0
        %2328 = vmatprep.subr.mxu0 0.0
        %2329 = vmatpush1.msra.mxu0 0.0
        %2330 = vmatprep.subr.mxu0 0.0
        %2331 = vmatpush1.msra.mxu0 0.0
        %2332 = vmatprep.mubr.f32.mxu0 0.0
        %2333 = vmatmul.mubr.f32.gmra.mrb[0].mxu0 %v2221
        %v2334 = vpop.f32.mrb[0].mxu0
        %v2335 = vadd.f32 %v2218, %v2334
        %v2336 = vpop.f32.mrb[0].mxu0
        %2337 = vmatprep.mubr.f32.mxu0 0.0
        %2338 = vmatmul.mubr.f32.gmra.mrb[0].mxu0 %v2224
        %v2339 = vpop.f32.mrb[0].mxu0
        %v2340 = vadd.f32 %v2218, %v2339
        %v2341 = vpop.f32.mrb[0].mxu0
        %2342 = vmatprep.mubr.f32.mxu0 0.0
        %2343 = vmatmul.mubr.f32.gmra.mrb[0].mxu0 %v2227
        %v2344 = vpop.f32.mrb[0].mxu0
        %v2345 = vadd.f32 %v2218, %v2344
        %v2346 = vpop.f32.mrb[0].mxu0
        %2347 = vmatprep.mubr.f32.mxu0 0.0
        %2348 = vmatmul.mubr.f32.gmra.mrb[0].mxu0 %v2230
        %v2349 = vpop.f32.mrb[0].mxu0
        %v2350 = vadd.f32 %v2218, %v2349
        %v2351 = vpop.f32.mrb[0].mxu0
        %2352 = vmatprep.mubr.f32.mxu0 0.0
        %2353 = vmatmul.mubr.f32.gmra.mrb[0].mxu0 %v2233
        %v2354 = vpop.f32.mrb[0].mxu0
        %v2355 = vadd.f32 %v2218, %v2354
        %v2356 = vpop.f32.mrb[0].mxu0
        %2357 = vmatprep.mubr.f32.mxu0 0.0
        %2358 = vmatmul.mubr.f32.gmra.mrb[0].mxu0 %v2236
        %v2359 = vpop.f32.mrb[0].mxu0
        %v2360 = vadd.f32 %v2218, %v2359
        %v2361 = vpop.f32.mrb[0].mxu0
        %2362 = vmatprep.mubr.f32.mxu0 0.0
        %2363 = vmatmul.mubr.f32.gmra.mrb[0].mxu0 %v2239
        %v2364 = vpop.f32.mrb[0].mxu0
        %v2365 = vadd.f32 %v2218, %v2364
        %v2366 = vpop.f32.mrb[0].mxu0
        %2367 = vmatprep.mubr.f32.mxu0 0.0
        %2368 = vmatmul.mubr.f32.gmra.mrb[0].mxu0 %v2242
        %v2369 = vpop.f32.mrb[0].mxu0
        %v2370 = vadd.f32 %v2218, %v2369
        %v2371 = vpop.f32.mrb[0].mxu0
        %2372 = vmatprep.mubr.f32.mxu0 0.0
        %2373 = vmatmul.mubr.f32.gmra.mrb[0].mxu0 %v2245
        %v2374 = vpop.f32.mrb[0].mxu0
        %v2375 = vadd.f32 %v2218, %v2374
        %v2376 = vpop.f32.mrb[0].mxu0
        %2377 = vmatprep.mubr.f32.mxu0 0.0
        %2378 = vmatmul.mubr.f32.gmra.mrb[0].mxu0 %v2248
        %v2379 = vpop.f32.mrb[0].mxu0
        %v2380 = vadd.f32 %v2218, %v2379
        %v2381 = vpop.f32.mrb[0].mxu0
        %2382 = vmatprep.mubr.f32.mxu0 0.0
        %2383 = vmatmul.mubr.f32.gmra.mrb[0].mxu0 %v2251
        %v2384 = vpop.f32.mrb[0].mxu0
        %v2385 = vadd.f32 %v2218, %v2384
        %v2386 = vpop.f32.mrb[0].mxu0
        %2387 = vmatprep.mubr.f32.mxu0 0.0
        %2388 = vmatmul.mubr.f32.gmra.mrb[0].mxu0 %v2254
        %v2389 = vpop.f32.mrb[0].mxu0
        %v2390 = vadd.f32 %v2218, %v2389
        %v2391 = vpop.f32.mrb[0].mxu0
        %2392 = vmatprep.mubr.f32.mxu0 0.0
        %2393 = vmatmul.mubr.f32.gmra.mrb[0].mxu0 %v2257
        %v2394 = vpop.f32.mrb[0].mxu0
        %v2395 = vadd.f32 %v2218, %v2394
        %v2396 = vpop.f32.mrb[0].mxu0
        %2397 = vmatprep.mubr.f32.mxu0 0.0
        %2398 = vmatmul.mubr.f32.gmra.mrb[0].mxu0 %v2260
        %v2399 = vpop.f32.mrb[0].mxu0
        %v2400 = vadd.f32 %v2218, %v2399
        %v2401 = vpop.f32.mrb[0].mxu0
        %2402 = vmatprep.mubr.f32.mxu0 0.0
        %2403 = vmatmul.mubr.f32.gmra.mrb[0].mxu0 %v2263
        %v2404 = vpop.f32.mrb[0].mxu0
        %v2405 = vadd.f32 %v2218, %v2404
        %v2406 = vpop.f32.mrb[0].mxu0
        %2407 = vmatprep.mubr.f32.mxu0 0.0
        %2408 = vmatmul.mubr.f32.gmra.mrb[0].mxu0 %v2266
        %v2409 = vpop.f32.mrb[0].mxu0
        %v2410 = vadd.f32 %v2218, %v2409
        %v2411 = vpop.f32.mrb[0].mxu0
        %2412 = vdwg.mxu0
        %vm2413 = vcmp.gt.f32.partialorder %v2335, 0.0
        %vm2414 = vcmp.gt.f32.partialorder %v2340, 0.0
        %vm2415 = vcmp.gt.f32.partialorder %v2345, 0.0
        %vm2416 = vcmp.gt.f32.partialorder %v2350, 0.0
        %vm2417 = vcmp.gt.f32.partialorder %v2355, 0.0
        %vm2418 = vcmp.gt.f32.partialorder %v2360, 0.0
        %vm2419 = vcmp.gt.f32.partialorder %v2365, 0.0
        %vm2420 = vcmp.gt.f32.partialorder %v2370, 0.0
        %vm2421 = vcmp.gt.f32.partialorder %v2375, 0.0
        %vm2422 = vcmp.gt.f32.partialorder %v2380, 0.0
        %vm2423 = vcmp.gt.f32.partialorder %v2385, 0.0
        %vm2424 = vcmp.gt.f32.partialorder %v2390, 0.0
        %vm2425 = vcmp.gt.f32.partialorder %v2395, 0.0
        %vm2426 = vcmp.gt.f32.partialorder %v2400, 0.0
        %vm2427 = vcmp.gt.f32.partialorder %v2405, 0.0
        %vm2428 = vcmp.gt.f32.partialorder %v2410, 0.0
        %v2429 = vstv %s675
        %v2430 = vmul.f32 %v2429, %v2335
        %v2431 = vmul.f32 %v2429, %v2340
        %v2432 = vmul.f32 %v2429, %v2345
        %v2433 = vmul.f32 %v2429, %v2350
        %v2434 = vmul.f32 %v2429, %v2355
        %v2435 = vmul.f32 %v2429, %v2360
        %v2436 = vmul.f32 %v2429, %v2365
        %v2437 = vmul.f32 %v2429, %v2370
        %v2438 = vmul.f32 %v2429, %v2375
        %v2439 = vmul.f32 %v2429, %v2380
        %v2440 = vmul.f32 %v2429, %v2385
        %v2441 = vmul.f32 %v2429, %v2390
        %v2442 = vmul.f32 %v2429, %v2395
        %v2443 = vmul.f32 %v2429, %v2400
        %v2444 = vmul.f32 %v2429, %v2405
        %v2445 = vmul.f32 %v2429, %v2410
        %v2446 = vsel %vm2413, %v2335, %v2430
        %v2447 = vsel %vm2414, %v2340, %v2431
        %v2448 = vsel %vm2415, %v2345, %v2432
        %v2449 = vsel %vm2416, %v2350, %v2433
        %v2450 = vsel %vm2417, %v2355, %v2434
        %v2451 = vsel %vm2418, %v2360, %v2435
        %v2452 = vsel %vm2419, %v2365, %v2436
        %v2453 = vsel %vm2420, %v2370, %v2437
        %v2454 = vsel %vm2421, %v2375, %v2438
        %v2455 = vsel %vm2422, %v2380, %v2439
        %v2456 = vsel %vm2423, %v2385, %v2440
        %v2457 = vsel %vm2424, %v2390, %v2441
        %v2458 = vsel %vm2425, %v2395, %v2442
        %v2459 = vsel %vm2426, %v2400, %v2443
        %v2460 = vsel %vm2427, %v2405, %v2444
        %v2461 = vsel %vm2428, %v2410, %v2445
        %v2462 = vld [vmem:[%s10] sm:$0xff]
        %v2463 = vld [vmem:[%s10 + $0x8] sm:$0xff]
        %v2464 = vld [vmem:[%s10 + $0x10] sm:$0xff]
        %v2465 = vld [vmem:[%s10 + $0x18] sm:$0xff]
        %v2466 = vld [vmem:[%s11] sm:$0x1]
        %v2468 = vlaneseq
        %v2469 = vshrl.u32 %v2468, 7
        %v2470 = vsub.s32 0, %v2469
        %v2471 = vrot.slane %v2466, %v2470
        %v2474 = vsel %vm921, %v2446, 0
        %v2477 = vsel %vm921, %v2447, 0
        %v2480 = vsel %vm921, %v2448, 0
        %v2483 = vsel %vm921, %v2449, 0
        %v2486 = vsel %vm921, %v2450, 0
        %v2489 = vsel %vm921, %v2451, 0
        %v2492 = vsel %vm921, %v2452, 0
        %v2495 = vsel %vm921, %v2453, 0
        %v2498 = vsel %vm921, %v2454, 0
        %v2501 = vsel %vm921, %v2455, 0
        %v2504 = vsel %vm921, %v2456, 0
        %v2507 = vsel %vm921, %v2457, 0
        %v2510 = vsel %vm921, %v2458, 0
        %v2513 = vsel %vm921, %v2459, 0
        %v2516 = vsel %vm921, %v2460, 0
        %v2519 = vsel %vm921, %v2461, 0
        %2521 = vmatprep.subr.mxu0 0.0
        %2522 = vmatpush1.msra.mxu0 %v2462
        %2523 = vmatprep.subr.mxu0 0.0
        %2524 = vmatpush1.msra.mxu0 %v2463
        %2525 = vmatprep.subr.mxu0 0.0
        %2526 = vmatpush1.msra.mxu0 %v2464
        %2527 = vmatprep.subr.mxu0 0.0
        %2528 = vmatpush1.msra.mxu0 %v2465
        %2529 = vmatprep.subr.mxu0 0.0
        %2530 = vmatpush1.msra.mxu0 0.0
        %2531 = vmatprep.subr.mxu0 0.0
        %2532 = vmatpush1.msra.mxu0 0.0
        %2533 = vmatprep.subr.mxu0 0.0
        %2534 = vmatpush1.msra.mxu0 0.0
        %2535 = vmatprep.subr.mxu0 0.0
        %2536 = vmatpush1.msra.mxu0 0.0
        %2537 = vmatprep.subr.mxu0 0.0
        %2538 = vmatpush1.msra.mxu0 0.0
        %2539 = vmatprep.subr.mxu0 0.0
        %2540 = vmatpush1.msra.mxu0 0.0
        %2541 = vmatprep.subr.mxu0 0.0
        %2542 = vmatpush1.msra.mxu0 0.0
        %2543 = vmatprep.subr.mxu0 0.0
        %2544 = vmatpush1.msra.mxu0 0.0
        %2545 = vmatprep.subr.mxu0 0.0
        %2546 = vmatpush1.msra.mxu0 0.0
        %2547 = vmatprep.subr.mxu0 0.0
        %2548 = vmatpush1.msra.mxu0 0.0
        %2549 = vmatprep.subr.mxu0 0.0
        %2550 = vmatpush1.msra.mxu0 0.0
        %2551 = vmatprep.subr.mxu0 0.0
        %2552 = vmatpush1.msra.mxu0 0.0
        %2553 = vmatprep.subr.mxu0 0.0
        %2554 = vmatpush1.msra.mxu0 0.0
        %2555 = vmatprep.subr.mxu0 0.0
        %2556 = vmatpush1.msra.mxu0 0.0
        %2557 = vmatprep.subr.mxu0 0.0
        %2558 = vmatpush1.msra.mxu0 0.0
        %2559 = vmatprep.subr.mxu0 0.0
        %2560 = vmatpush1.msra.mxu0 0.0
        %2561 = vmatprep.subr.mxu0 0.0
        %2562 = vmatpush1.msra.mxu0 0.0
        %2563 = vmatprep.subr.mxu0 0.0
        %2564 = vmatpush1.msra.mxu0 0.0
        %2565 = vmatprep.subr.mxu0 0.0
        %2566 = vmatpush1.msra.mxu0 0.0
        %2567 = vmatprep.subr.mxu0 0.0
        %2568 = vmatpush1.msra.mxu0 0.0
        %2569 = vmatprep.subr.mxu0 0.0
        %2570 = vmatpush1.msra.mxu0 0.0
        %2571 = vmatprep.subr.mxu0 0.0
        %2572 = vmatpush1.msra.mxu0 0.0
        %2573 = vmatprep.subr.mxu0 0.0
        %2574 = vmatpush1.msra.mxu0 0.0
        %2575 = vmatprep.subr.mxu0 0.0
        %2576 = vmatpush1.msra.mxu0 0.0
        %2577 = vmatprep.subr.mxu0 0.0
        %2578 = vmatpush1.msra.mxu0 0.0
        %2579 = vmatprep.subr.mxu0 0.0
        %2580 = vmatpush1.msra.mxu0 0.0
        %2581 = vmatprep.subr.mxu0 0.0
        %2582 = vmatpush1.msra.mxu0 0.0
        %2583 = vmatprep.subr.mxu0 0.0
        %2584 = vmatpush1.msra.mxu0 0.0
        %2585 = vmatprep.mubr.f32.mxu0 0.0
        %2586 = vmatmul.mubr.f32.gmra.mrb[0].mxu0 %v2474
        %v2587 = vpop.f32.mrb[0].mxu0
        %v2588 = vadd.f32 %v2471, %v2587
        %v2589 = vpop.f32.mrb[0].mxu0
        %2590 = vmatprep.mubr.f32.mxu0 0.0
        %2591 = vmatmul.mubr.f32.gmra.mrb[0].mxu0 %v2477
        %v2592 = vpop.f32.mrb[0].mxu0
        %v2593 = vadd.f32 %v2471, %v2592
        %v2594 = vpop.f32.mrb[0].mxu0
        %2595 = vmatprep.mubr.f32.mxu0 0.0
        %2596 = vmatmul.mubr.f32.gmra.mrb[0].mxu0 %v2480
        %v2597 = vpop.f32.mrb[0].mxu0
        %v2598 = vadd.f32 %v2471, %v2597
        %v2599 = vpop.f32.mrb[0].mxu0
        %2600 = vmatprep.mubr.f32.mxu0 0.0
        %2601 = vmatmul.mubr.f32.gmra.mrb[0].mxu0 %v2483
        %v2602 = vpop.f32.mrb[0].mxu0
        %v2603 = vadd.f32 %v2471, %v2602
        %v2604 = vpop.f32.mrb[0].mxu0
        %2605 = vmatprep.mubr.f32.mxu0 0.0
        %2606 = vmatmul.mubr.f32.gmra.mrb[0].mxu0 %v2486
        %v2607 = vpop.f32.mrb[0].mxu0
        %v2608 = vadd.f32 %v2471, %v2607
        %v2609 = vpop.f32.mrb[0].mxu0
        %2610 = vmatprep.mubr.f32.mxu0 0.0
        %2611 = vmatmul.mubr.f32.gmra.mrb[0].mxu0 %v2489
        %v2612 = vpop.f32.mrb[0].mxu0
        %v2613 = vadd.f32 %v2471, %v2612
        %v2614 = vpop.f32.mrb[0].mxu0
        %2615 = vmatprep.mubr.f32.mxu0 0.0
        %2616 = vmatmul.mubr.f32.gmra.mrb[0].mxu0 %v2492
        %v2617 = vpop.f32.mrb[0].mxu0
        %v2618 = vadd.f32 %v2471, %v2617
        %v2619 = vpop.f32.mrb[0].mxu0
        %2620 = vmatprep.mubr.f32.mxu0 0.0
        %2621 = vmatmul.mubr.f32.gmra.mrb[0].mxu0 %v2495
        %v2622 = vpop.f32.mrb[0].mxu0
        %v2623 = vadd.f32 %v2471, %v2622
        %v2624 = vpop.f32.mrb[0].mxu0
        %2625 = vmatprep.mubr.f32.mxu0 0.0
        %2626 = vmatmul.mubr.f32.gmra.mrb[0].mxu0 %v2498
        %v2627 = vpop.f32.mrb[0].mxu0
        %v2628 = vadd.f32 %v2471, %v2627
        %v2629 = vpop.f32.mrb[0].mxu0
        %2630 = vmatprep.mubr.f32.mxu0 0.0
        %2631 = vmatmul.mubr.f32.gmra.mrb[0].mxu0 %v2501
        %v2632 = vpop.f32.mrb[0].mxu0
        %v2633 = vadd.f32 %v2471, %v2632
        %v2634 = vpop.f32.mrb[0].mxu0
        %2635 = vmatprep.mubr.f32.mxu0 0.0
        %2636 = vmatmul.mubr.f32.gmra.mrb[0].mxu0 %v2504
        %v2637 = vpop.f32.mrb[0].mxu0
        %v2638 = vadd.f32 %v2471, %v2637
        %v2639 = vpop.f32.mrb[0].mxu0
        %2640 = vmatprep.mubr.f32.mxu0 0.0
        %2641 = vmatmul.mubr.f32.gmra.mrb[0].mxu0 %v2507
        %v2642 = vpop.f32.mrb[0].mxu0
        %v2643 = vadd.f32 %v2471, %v2642
        %v2644 = vpop.f32.mrb[0].mxu0
        %2645 = vmatprep.mubr.f32.mxu0 0.0
        %2646 = vmatmul.mubr.f32.gmra.mrb[0].mxu0 %v2510
        %v2647 = vpop.f32.mrb[0].mxu0
        %v2648 = vadd.f32 %v2471, %v2647
        %v2649 = vpop.f32.mrb[0].mxu0
        %2650 = vmatprep.mubr.f32.mxu0 0.0
        %2651 = vmatmul.mubr.f32.gmra.mrb[0].mxu0 %v2513
        %v2652 = vpop.f32.mrb[0].mxu0
        %v2653 = vadd.f32 %v2471, %v2652
        %v2654 = vpop.f32.mrb[0].mxu0
        %2655 = vmatprep.mubr.f32.mxu0 0.0
        %2656 = vmatmul.mubr.f32.gmra.mrb[0].mxu0 %v2516
        %v2657 = vpop.f32.mrb[0].mxu0
        %v2658 = vadd.f32 %v2471, %v2657
        %v2659 = vpop.f32.mrb[0].mxu0
        %2660 = vmatprep.mubr.f32.mxu0 0.0
        %2661 = vmatmul.mubr.f32.gmra.mrb[0].mxu0 %v2519
        %v2662 = vpop.f32.mrb[0].mxu0
        %v2663 = vadd.f32 %v2471, %v2662
        %v2664 = vpop.f32.mrb[0].mxu0
        %2665 = vdwg.mxu0
        %v2666 = vld [vmem:[%s583] sm:$0xff]
        %v2667 = vld [vmem:[%s583 + $0x8] sm:$0xff]
        %v2668 = vld [vmem:[%s583 + $0x10] sm:$0xff]
        %v2669 = vld [vmem:[%s583 + $0x18] sm:$0xff]
        %v2670 = vld [vmem:[%s583 + $0x20] sm:$0xff]
        %v2671 = vld [vmem:[%s583 + $0x28] sm:$0xff]
        %v2672 = vld [vmem:[%s583 + $0x30] sm:$0xff]
        %v2673 = vld [vmem:[%s583 + $0x38] sm:$0xff]
        %v2674 = vld [vmem:[%s583 + $0x40] sm:$0xff]
        %v2675 = vld [vmem:[%s583 + $0x48] sm:$0xff]
        %v2676 = vld [vmem:[%s583 + $0x50] sm:$0xff]
        %v2677 = vld [vmem:[%s583 + $0x58] sm:$0xff]
        %v2678 = vld [vmem:[%s583 + $0x60] sm:$0xff]
        %v2679 = vld [vmem:[%s583 + $0x68] sm:$0xff]
        %v2680 = vld [vmem:[%s583 + $0x70] sm:$0xff]
        %v2681 = vld [vmem:[%s583 + $0x78] sm:$0xff]
        %v2682 = vld [vmem:[%s12] sm:$0xff]
        %v2683 = vld [vmem:[%s12 + $0x8] sm:$0xff]
        %v2684 = vld [vmem:[%s12 + $0x10] sm:$0xff]
        %v2685 = vld [vmem:[%s12 + $0x18] sm:$0xff]
        %v2686 = vld [vmem:[%s12 + $0x20] sm:$0xff]
        %v2687 = vld [vmem:[%s12 + $0x28] sm:$0xff]
        %v2688 = vld [vmem:[%s12 + $0x30] sm:$0xff]
        %v2689 = vld [vmem:[%s12 + $0x38] sm:$0xff]
        %v2690 = vld [vmem:[%s12 + $0x40] sm:$0xff]
        %v2691 = vld [vmem:[%s12 + $0x48] sm:$0xff]
        %v2692 = vld [vmem:[%s12 + $0x50] sm:$0xff]
        %v2693 = vld [vmem:[%s12 + $0x58] sm:$0xff]
        %v2694 = vld [vmem:[%s12 + $0x60] sm:$0xff]
        %v2695 = vld [vmem:[%s12 + $0x68] sm:$0xff]
        %v2696 = vld [vmem:[%s12 + $0x70] sm:$0xff]
        %v2697 = vld [vmem:[%s12 + $0x78] sm:$0xff]
        %v2698 = vld [vmem:[%s13] sm:$0x1]
        %v2700 = vlaneseq
        %v2701 = vshrl.u32 %v2700, 7
        %v2702 = vsub.s32 0, %v2701
        %v2703 = vrot.slane %v2698, %v2702
        %2705 = vmatprep.subr.mxu0 0.0
        %2706 = vmatpush1.msra.mxu0 %v2682
        %2707 = vmatprep.subr.mxu0 0.0
        %2708 = vmatpush1.msra.mxu0 %v2683
        %2709 = vmatprep.subr.mxu0 0.0
        %2710 = vmatpush1.msra.mxu0 %v2684
        %2711 = vmatprep.subr.mxu0 0.0
        %2712 = vmatpush1.msra.mxu0 %v2685
        %2713 = vmatprep.subr.mxu0 0.0
        %2714 = vmatpush1.msra.mxu0 %v2686
        %2715 = vmatprep.subr.mxu0 0.0
        %2716 = vmatpush1.msra.mxu0 %v2687
        %2717 = vmatprep.subr.mxu0 0.0
        %2718 = vmatpush1.msra.mxu0 %v2688
        %2719 = vmatprep.subr.mxu0 0.0
        %2720 = vmatpush1.msra.mxu0 %v2689
        %2721 = vmatprep.subr.mxu0 0.0
        %2722 = vmatpush1.msra.mxu0 %v2690
        %2723 = vmatprep.subr.mxu0 0.0
        %2724 = vmatpush1.msra.mxu0 %v2691
        %2725 = vmatprep.subr.mxu0 0.0
        %2726 = vmatpush1.msra.mxu0 %v2692
        %2727 = vmatprep.subr.mxu0 0.0
        %2728 = vmatpush1.msra.mxu0 %v2693
        %2729 = vmatprep.subr.mxu0 0.0
        %2730 = vmatpush1.msra.mxu0 %v2694
        %2731 = vmatprep.subr.mxu0 0.0
        %2732 = vmatpush1.msra.mxu0 %v2695
        %2733 = vmatprep.subr.mxu0 0.0
        %2734 = vmatpush1.msra.mxu0 %v2696
        %2735 = vmatprep.subr.mxu0 0.0
        %2736 = vmatpush1.msra.mxu0 %v2697
        %2737 = vmatprep.subr.mxu0 0.0
        %2738 = vmatpush1.msra.mxu0 0.0
        %2739 = vmatprep.subr.mxu0 0.0
        %2740 = vmatpush1.msra.mxu0 0.0
        %2741 = vmatprep.subr.mxu0 0.0
        %2742 = vmatpush1.msra.mxu0 0.0
        %2743 = vmatprep.subr.mxu0 0.0
        %2744 = vmatpush1.msra.mxu0 0.0
        %2745 = vmatprep.subr.mxu0 0.0
        %2746 = vmatpush1.msra.mxu0 0.0
        %2747 = vmatprep.subr.mxu0 0.0
        %2748 = vmatpush1.msra.mxu0 0.0
        %2749 = vmatprep.subr.mxu0 0.0
        %2750 = vmatpush1.msra.mxu0 0.0
        %2751 = vmatprep.subr.mxu0 0.0
        %2752 = vmatpush1.msra.mxu0 0.0
        %2753 = vmatprep.subr.mxu0 0.0
        %2754 = vmatpush1.msra.mxu0 0.0
        %2755 = vmatprep.subr.mxu0 0.0
        %2756 = vmatpush1.msra.mxu0 0.0
        %2757 = vmatprep.subr.mxu0 0.0
        %2758 = vmatpush1.msra.mxu0 0.0
        %2759 = vmatprep.subr.mxu0 0.0
        %2760 = vmatpush1.msra.mxu0 0.0
        %2761 = vmatprep.subr.mxu0 0.0
        %2762 = vmatpush1.msra.mxu0 0.0
        %2763 = vmatprep.subr.mxu0 0.0
        %2764 = vmatpush1.msra.mxu0 0.0
        %2765 = vmatprep.subr.mxu0 0.0
        %2766 = vmatpush1.msra.mxu0 0.0
        %2767 = vmatprep.subr.mxu0 0.0
        %2768 = vmatpush1.msra.mxu0 0.0
        %2769 = vmatprep.mubr.f32.mxu0 0.0
        %2770 = vmatmul.mubr.f32.gmra.mrb[0].mxu0 %v2666
        %v2771 = vpop.f32.mrb[0].mxu0
        %v2772 = vadd.f32 %v2703, %v2771
        %v2773 = vpop.f32.mrb[0].mxu0
        %2774 = vmatprep.mubr.f32.mxu0 0.0
        %2775 = vmatmul.mubr.f32.gmra.mrb[0].mxu0 %v2667
        %v2776 = vpop.f32.mrb[0].mxu0
        %v2777 = vadd.f32 %v2703, %v2776
        %v2778 = vpop.f32.mrb[0].mxu0
        %2779 = vmatprep.mubr.f32.mxu0 0.0
        %2780 = vmatmul.mubr.f32.gmra.mrb[0].mxu0 %v2668
        %v2781 = vpop.f32.mrb[0].mxu0
        %v2782 = vadd.f32 %v2703, %v2781
        %v2783 = vpop.f32.mrb[0].mxu0
        %2784 = vmatprep.mubr.f32.mxu0 0.0
        %2785 = vmatmul.mubr.f32.gmra.mrb[0].mxu0 %v2669
        %v2786 = vpop.f32.mrb[0].mxu0
        %v2787 = vadd.f32 %v2703, %v2786
        %v2788 = vpop.f32.mrb[0].mxu0
        %2789 = vmatprep.mubr.f32.mxu0 0.0
        %2790 = vmatmul.mubr.f32.gmra.mrb[0].mxu0 %v2670
        %v2791 = vpop.f32.mrb[0].mxu0
        %v2792 = vadd.f32 %v2703, %v2791
        %v2793 = vpop.f32.mrb[0].mxu0
        %2794 = vmatprep.mubr.f32.mxu0 0.0
        %2795 = vmatmul.mubr.f32.gmra.mrb[0].mxu0 %v2671
        %v2796 = vpop.f32.mrb[0].mxu0
        %v2797 = vadd.f32 %v2703, %v2796
        %v2798 = vpop.f32.mrb[0].mxu0
        %2799 = vmatprep.mubr.f32.mxu0 0.0
        %2800 = vmatmul.mubr.f32.gmra.mrb[0].mxu0 %v2672
        %v2801 = vpop.f32.mrb[0].mxu0
        %v2802 = vadd.f32 %v2703, %v2801
        %v2803 = vpop.f32.mrb[0].mxu0
        %2804 = vmatprep.mubr.f32.mxu0 0.0
        %2805 = vmatmul.mubr.f32.gmra.mrb[0].mxu0 %v2673
        %v2806 = vpop.f32.mrb[0].mxu0
        %v2807 = vadd.f32 %v2703, %v2806
        %v2808 = vpop.f32.mrb[0].mxu0
        %2809 = vmatprep.mubr.f32.mxu0 0.0
        %2810 = vmatmul.mubr.f32.gmra.mrb[0].mxu0 %v2674
        %v2811 = vpop.f32.mrb[0].mxu0
        %v2812 = vadd.f32 %v2703, %v2811
        %v2813 = vpop.f32.mrb[0].mxu0
        %2814 = vmatprep.mubr.f32.mxu0 0.0
        %2815 = vmatmul.mubr.f32.gmra.mrb[0].mxu0 %v2675
        %v2816 = vpop.f32.mrb[0].mxu0
        %v2817 = vadd.f32 %v2703, %v2816
        %v2818 = vpop.f32.mrb[0].mxu0
        %2819 = vmatprep.mubr.f32.mxu0 0.0
        %2820 = vmatmul.mubr.f32.gmra.mrb[0].mxu0 %v2676
        %v2821 = vpop.f32.mrb[0].mxu0
        %v2822 = vadd.f32 %v2703, %v2821
        %v2823 = vpop.f32.mrb[0].mxu0
        %2824 = vmatprep.mubr.f32.mxu0 0.0
        %2825 = vmatmul.mubr.f32.gmra.mrb[0].mxu0 %v2677
        %v2826 = vpop.f32.mrb[0].mxu0
        %v2827 = vadd.f32 %v2703, %v2826
        %v2828 = vpop.f32.mrb[0].mxu0
        %2829 = vmatprep.mubr.f32.mxu0 0.0
        %2830 = vmatmul.mubr.f32.gmra.mrb[0].mxu0 %v2678
        %v2831 = vpop.f32.mrb[0].mxu0
        %v2832 = vadd.f32 %v2703, %v2831
        %v2833 = vpop.f32.mrb[0].mxu0
        %2834 = vmatprep.mubr.f32.mxu0 0.0
        %2835 = vmatmul.mubr.f32.gmra.mrb[0].mxu0 %v2679
        %v2836 = vpop.f32.mrb[0].mxu0
        %v2837 = vadd.f32 %v2703, %v2836
        %v2838 = vpop.f32.mrb[0].mxu0
        %2839 = vmatprep.mubr.f32.mxu0 0.0
        %2840 = vmatmul.mubr.f32.gmra.mrb[0].mxu0 %v2680
        %v2841 = vpop.f32.mrb[0].mxu0
        %v2842 = vadd.f32 %v2703, %v2841
        %v2843 = vpop.f32.mrb[0].mxu0
        %2844 = vmatprep.mubr.f32.mxu0 0.0
        %2845 = vmatmul.mubr.f32.gmra.mrb[0].mxu0 %v2681
        %v2846 = vpop.f32.mrb[0].mxu0
        %v2847 = vadd.f32 %v2703, %v2846
        %v2848 = vpop.f32.mrb[0].mxu0
        %2849 = vdwg.mxu0
        %vm2850 = vcmp.gt.f32.partialorder %v2772, 0.0
        %vm2851 = vcmp.gt.f32.partialorder %v2777, 0.0
        %vm2852 = vcmp.gt.f32.partialorder %v2782, 0.0
        %vm2853 = vcmp.gt.f32.partialorder %v2787, 0.0
        %vm2854 = vcmp.gt.f32.partialorder %v2792, 0.0
        %vm2855 = vcmp.gt.f32.partialorder %v2797, 0.0
        %vm2856 = vcmp.gt.f32.partialorder %v2802, 0.0
        %vm2857 = vcmp.gt.f32.partialorder %v2807, 0.0
        %vm2858 = vcmp.gt.f32.partialorder %v2812, 0.0
        %vm2859 = vcmp.gt.f32.partialorder %v2817, 0.0
        %vm2860 = vcmp.gt.f32.partialorder %v2822, 0.0
        %vm2861 = vcmp.gt.f32.partialorder %v2827, 0.0
        %vm2862 = vcmp.gt.f32.partialorder %v2832, 0.0
        %vm2863 = vcmp.gt.f32.partialorder %v2837, 0.0
        %vm2864 = vcmp.gt.f32.partialorder %v2842, 0.0
        %vm2865 = vcmp.gt.f32.partialorder %v2847, 0.0
        %v2866 = vstv %s676
        %v2867 = vmul.f32 %v2866, %v2772
        %v2868 = vmul.f32 %v2866, %v2777
        %v2869 = vmul.f32 %v2866, %v2782
        %v2870 = vmul.f32 %v2866, %v2787
        %v2871 = vmul.f32 %v2866, %v2792
        %v2872 = vmul.f32 %v2866, %v2797
        %v2873 = vmul.f32 %v2866, %v2802
        %v2874 = vmul.f32 %v2866, %v2807
        %v2875 = vmul.f32 %v2866, %v2812
        %v2876 = vmul.f32 %v2866, %v2817
        %v2877 = vmul.f32 %v2866, %v2822
        %v2878 = vmul.f32 %v2866, %v2827
        %v2879 = vmul.f32 %v2866, %v2832
        %v2880 = vmul.f32 %v2866, %v2837
        %v2881 = vmul.f32 %v2866, %v2842
        %v2882 = vmul.f32 %v2866, %v2847
        %v2883 = vsel %vm2850, %v2772, %v2867
        %v2884 = vsel %vm2851, %v2777, %v2868
        %v2885 = vsel %vm2852, %v2782, %v2869
        %v2886 = vsel %vm2853, %v2787, %v2870
        %v2887 = vsel %vm2854, %v2792, %v2871
        %v2888 = vsel %vm2855, %v2797, %v2872
        %v2889 = vsel %vm2856, %v2802, %v2873
        %v2890 = vsel %vm2857, %v2807, %v2874
        %v2891 = vsel %vm2858, %v2812, %v2875
        %v2892 = vsel %vm2859, %v2817, %v2876
        %v2893 = vsel %vm2860, %v2822, %v2877
        %v2894 = vsel %vm2861, %v2827, %v2878
        %v2895 = vsel %vm2862, %v2832, %v2879
        %v2896 = vsel %vm2863, %v2837, %v2880
        %v2897 = vsel %vm2864, %v2842, %v2881
        %v2898 = vsel %vm2865, %v2847, %v2882
        %v2899 = vld [vmem:[#allocation12] sm:$0xff]
        %v2900 = vld [vmem:[#allocation12 + $0x8] sm:$0xff]
        %v2901 = vld [vmem:[#allocation12 + $0x10] sm:$0xff]
        %v2902 = vld [vmem:[#allocation12 + $0x18] sm:$0xff]
        %v2903 = vld [vmem:[%s15] sm:$0x1]
        %v2905 = vlaneseq
        %v2906 = vshrl.u32 %v2905, 7
        %v2907 = vsub.s32 0, %v2906
        %v2908 = vrot.slane %v2903, %v2907
        %v2911 = vsel %vm921, %v2883, 0
        %v2914 = vsel %vm921, %v2884, 0
        %v2917 = vsel %vm921, %v2885, 0
        %v2920 = vsel %vm921, %v2886, 0
        %v2923 = vsel %vm921, %v2887, 0
        %v2926 = vsel %vm921, %v2888, 0
        %v2929 = vsel %vm921, %v2889, 0
        %v2932 = vsel %vm921, %v2890, 0
        %v2935 = vsel %vm921, %v2891, 0
        %v2938 = vsel %vm921, %v2892, 0
        %v2941 = vsel %vm921, %v2893, 0
        %v2944 = vsel %vm921, %v2894, 0
        %v2947 = vsel %vm921, %v2895, 0
        %v2950 = vsel %vm921, %v2896, 0
        %v2953 = vsel %vm921, %v2897, 0
        %v2956 = vsel %vm921, %v2898, 0
        %2958 = vmatprep.subr.mxu0 0.0
        %2959 = vmatpush1.msra.mxu0 %v2899
        %2960 = vmatprep.subr.mxu0 0.0
        %2961 = vmatpush1.msra.mxu0 %v2900
        %2962 = vmatprep.subr.mxu0 0.0
        %2963 = vmatpush1.msra.mxu0 %v2901
        %2964 = vmatprep.subr.mxu0 0.0
        %2965 = vmatpush1.msra.mxu0 %v2902
        %2966 = vmatprep.subr.mxu0 0.0
        %2967 = vmatpush1.msra.mxu0 0.0
        %2968 = vmatprep.subr.mxu0 0.0
        %2969 = vmatpush1.msra.mxu0 0.0
        %2970 = vmatprep.subr.mxu0 0.0
        %2971 = vmatpush1.msra.mxu0 0.0
        %2972 = vmatprep.subr.mxu0 0.0
        %2973 = vmatpush1.msra.mxu0 0.0
        %2974 = vmatprep.subr.mxu0 0.0
        %2975 = vmatpush1.msra.mxu0 0.0
        %2976 = vmatprep.subr.mxu0 0.0
        %2977 = vmatpush1.msra.mxu0 0.0
        %2978 = vmatprep.subr.mxu0 0.0
        %2979 = vmatpush1.msra.mxu0 0.0
        %2980 = vmatprep.subr.mxu0 0.0
        %2981 = vmatpush1.msra.mxu0 0.0
        %2982 = vmatprep.subr.mxu0 0.0
        %2983 = vmatpush1.msra.mxu0 0.0
        %2984 = vmatprep.subr.mxu0 0.0
        %2985 = vmatpush1.msra.mxu0 0.0
        %2986 = vmatprep.subr.mxu0 0.0
        %2987 = vmatpush1.msra.mxu0 0.0
        %2988 = vmatprep.subr.mxu0 0.0
        %2989 = vmatpush1.msra.mxu0 0.0
        %2990 = vmatprep.subr.mxu0 0.0
        %2991 = vmatpush1.msra.mxu0 0.0
        %2992 = vmatprep.subr.mxu0 0.0
        %2993 = vmatpush1.msra.mxu0 0.0
        %2994 = vmatprep.subr.mxu0 0.0
        %2995 = vmatpush1.msra.mxu0 0.0
        %2996 = vmatprep.subr.mxu0 0.0
        %2997 = vmatpush1.msra.mxu0 0.0
        %2998 = vmatprep.subr.mxu0 0.0
        %2999 = vmatpush1.msra.mxu0 0.0
        %3000 = vmatprep.subr.mxu0 0.0
        %3001 = vmatpush1.msra.mxu0 0.0
        %3002 = vmatprep.subr.mxu0 0.0
        %3003 = vmatpush1.msra.mxu0 0.0
        %3004 = vmatprep.subr.mxu0 0.0
        %3005 = vmatpush1.msra.mxu0 0.0
        %3006 = vmatprep.subr.mxu0 0.0
        %3007 = vmatpush1.msra.mxu0 0.0
        %3008 = vmatprep.subr.mxu0 0.0
        %3009 = vmatpush1.msra.mxu0 0.0
        %3010 = vmatprep.subr.mxu0 0.0
        %3011 = vmatpush1.msra.mxu0 0.0
        %3012 = vmatprep.subr.mxu0 0.0
        %3013 = vmatpush1.msra.mxu0 0.0
        %3014 = vmatprep.subr.mxu0 0.0
        %3015 = vmatpush1.msra.mxu0 0.0
        %3016 = vmatprep.subr.mxu0 0.0
        %3017 = vmatpush1.msra.mxu0 0.0
        %3018 = vmatprep.subr.mxu0 0.0
        %3019 = vmatpush1.msra.mxu0 0.0
        %3020 = vmatprep.subr.mxu0 0.0
        %3021 = vmatpush1.msra.mxu0 0.0
        %3022 = vmatprep.mubr.f32.mxu0 0.0
        %3023 = vmatmul.mubr.f32.gmra.mrb[0].mxu0 %v2911
        %v3024 = vpop.f32.mrb[0].mxu0
        %v3025 = vadd.f32 %v2908, %v3024
        %v3026 = vpop.f32.mrb[0].mxu0
        %3027 = vmatprep.mubr.f32.mxu0 0.0
        %3028 = vmatmul.mubr.f32.gmra.mrb[0].mxu0 %v2914
        %v3029 = vpop.f32.mrb[0].mxu0
        %v3030 = vadd.f32 %v2908, %v3029
        %v3031 = vpop.f32.mrb[0].mxu0
        %3032 = vmatprep.mubr.f32.mxu0 0.0
        %3033 = vmatmul.mubr.f32.gmra.mrb[0].mxu0 %v2917
        %v3034 = vpop.f32.mrb[0].mxu0
        %v3035 = vadd.f32 %v2908, %v3034
        %v3036 = vpop.f32.mrb[0].mxu0
        %3037 = vmatprep.mubr.f32.mxu0 0.0
        %3038 = vmatmul.mubr.f32.gmra.mrb[0].mxu0 %v2920
        %v3039 = vpop.f32.mrb[0].mxu0
        %v3040 = vadd.f32 %v2908, %v3039
        %v3041 = vpop.f32.mrb[0].mxu0
        %3042 = vmatprep.mubr.f32.mxu0 0.0
        %3043 = vmatmul.mubr.f32.gmra.mrb[0].mxu0 %v2923
        %v3044 = vpop.f32.mrb[0].mxu0
        %v3045 = vadd.f32 %v2908, %v3044
        %v3046 = vpop.f32.mrb[0].mxu0
        %3047 = vmatprep.mubr.f32.mxu0 0.0
        %3048 = vmatmul.mubr.f32.gmra.mrb[0].mxu0 %v2926
        %v3049 = vpop.f32.mrb[0].mxu0
        %v3050 = vadd.f32 %v2908, %v3049
        %v3051 = vpop.f32.mrb[0].mxu0
        %3052 = vmatprep.mubr.f32.mxu0 0.0
        %3053 = vmatmul.mubr.f32.gmra.mrb[0].mxu0 %v2929
        %v3054 = vpop.f32.mrb[0].mxu0
        %v3055 = vadd.f32 %v2908, %v3054
        %v3056 = vpop.f32.mrb[0].mxu0
        %3057 = vmatprep.mubr.f32.mxu0 0.0
        %3058 = vmatmul.mubr.f32.gmra.mrb[0].mxu0 %v2932
        %v3059 = vpop.f32.mrb[0].mxu0
        %v3060 = vadd.f32 %v2908, %v3059
        %v3061 = vpop.f32.mrb[0].mxu0
        %3062 = vmatprep.mubr.f32.mxu0 0.0
        %3063 = vmatmul.mubr.f32.gmra.mrb[0].mxu0 %v2935
        %v3064 = vpop.f32.mrb[0].mxu0
        %v3065 = vadd.f32 %v2908, %v3064
        %v3066 = vpop.f32.mrb[0].mxu0
        %3067 = vmatprep.mubr.f32.mxu0 0.0
        %3068 = vmatmul.mubr.f32.gmra.mrb[0].mxu0 %v2938
        %v3069 = vpop.f32.mrb[0].mxu0
        %v3070 = vadd.f32 %v2908, %v3069
        %v3071 = vpop.f32.mrb[0].mxu0
        %3072 = vmatprep.mubr.f32.mxu0 0.0
        %3073 = vmatmul.mubr.f32.gmra.mrb[0].mxu0 %v2941
        %v3074 = vpop.f32.mrb[0].mxu0
        %v3075 = vadd.f32 %v2908, %v3074
        %v3076 = vpop.f32.mrb[0].mxu0
        %3077 = vmatprep.mubr.f32.mxu0 0.0
        %3078 = vmatmul.mubr.f32.gmra.mrb[0].mxu0 %v2944
        %v3079 = vpop.f32.mrb[0].mxu0
        %v3080 = vadd.f32 %v2908, %v3079
        %v3081 = vpop.f32.mrb[0].mxu0
        %3082 = vmatprep.mubr.f32.mxu0 0.0
        %3083 = vmatmul.mubr.f32.gmra.mrb[0].mxu0 %v2947
        %v3084 = vpop.f32.mrb[0].mxu0
        %v3085 = vadd.f32 %v2908, %v3084
        %v3086 = vpop.f32.mrb[0].mxu0
        %3087 = vmatprep.mubr.f32.mxu0 0.0
        %3088 = vmatmul.mubr.f32.gmra.mrb[0].mxu0 %v2950
        %v3089 = vpop.f32.mrb[0].mxu0
        %v3090 = vadd.f32 %v2908, %v3089
        %v3091 = vpop.f32.mrb[0].mxu0
        %3092 = vmatprep.mubr.f32.mxu0 0.0
        %3093 = vmatmul.mubr.f32.gmra.mrb[0].mxu0 %v2953
        %v3094 = vpop.f32.mrb[0].mxu0
        %v3095 = vadd.f32 %v2908, %v3094
        %v3096 = vpop.f32.mrb[0].mxu0
        %3097 = vmatprep.mubr.f32.mxu0 0.0
        %3098 = vmatmul.mubr.f32.gmra.mrb[0].mxu0 %v2956
        %v3099 = vpop.f32.mrb[0].mxu0
        %v3100 = vadd.f32 %v2908, %v3099
        %v3101 = vpop.f32.mrb[0].mxu0
        %3102 = vdwg.mxu0
        %v3103 = vadd.f32 %v2588, %v3025
        %v3104 = vadd.f32 %v2593, %v3030
        %v3105 = vadd.f32 %v2598, %v3035
        %v3106 = vadd.f32 %v2603, %v3040
        %v3107 = vadd.f32 %v2608, %v3045
        %v3108 = vadd.f32 %v2613, %v3050
        %v3109 = vadd.f32 %v2618, %v3055
        %v3110 = vadd.f32 %v2623, %v3060
        %v3111 = vadd.f32 %v2628, %v3065
        %v3112 = vadd.f32 %v2633, %v3070
        %v3113 = vadd.f32 %v2638, %v3075
        %v3114 = vadd.f32 %v2643, %v3080
        %v3115 = vadd.f32 %v2648, %v3085
        %v3116 = vadd.f32 %v2653, %v3090
        %v3117 = vadd.f32 %v2658, %v3095
        %v3118 = vadd.f32 %v2663, %v3100
        %3119 = vst [vmem:[%s663] sm:$0xff] %v3103
        %3120 = vst [vmem:[%s663 + $0x8] sm:$0xff] %v3104
        %3121 = vst [vmem:[%s663 + $0x10] sm:$0xff] %v3105
        %3122 = vst [vmem:[%s663 + $0x18] sm:$0xff] %v3106
        %3123 = vst [vmem:[%s663 + $0x20] sm:$0xff] %v3107
        %3124 = vst [vmem:[%s663 + $0x28] sm:$0xff] %v3108
        %3125 = vst [vmem:[%s663 + $0x30] sm:$0xff] %v3109
        %3126 = vst [vmem:[%s663 + $0x38] sm:$0xff] %v3110
        %3127 = vst [vmem:[%s663 + $0x40] sm:$0xff] %v3111
        %3128 = vst [vmem:[%s663 + $0x48] sm:$0xff] %v3112
        %3129 = vst [vmem:[%s663 + $0x50] sm:$0xff] %v3113
        %3130 = vst [vmem:[%s663 + $0x58] sm:$0xff] %v3114
        %3131 = vst [vmem:[%s663 + $0x60] sm:$0xff] %v3115
        %3132 = vst [vmem:[%s663 + $0x68] sm:$0xff] %v3116
        %3133 = vst [vmem:[%s663 + $0x70] sm:$0xff] %v3117
        %3134 = vst [vmem:[%s663 + $0x78] sm:$0xff] %v3118
        %s3135 = sand.u32 %s413, 1
        %s3136 = scalar_lea.sflag [#allocation4], %s3135
        %s3137 = sand.u32 %s413, 1
        %s3138 = smul.addr %s3137, 128
        %s3139 = scalar_lea.vmem [#allocation15], %s3138
        // Predicated region
        $region117: #{tpu_custom_call.1} parent=87 // pred_check
          %p3140 = pneg %p423
        $region118: #{tpu_custom_call.1} parent=87 // pred_check_branch
          %3142 = sbr.rel (%p3140) target = $region120
        $region119: #{tpu_custom_call.1} parent=87 // pred_region
          %s3143 = smul.u32 16, %s38
          %s3145 = ssub.s32 2048, 2048
          %3146 = vsyncadd %s3136, %s3145
          %s3147 = smul.addr %s3143, 128
          %s3148 = scalar_lea.hbm %s17, %s3147
          %s3149 = sshll.u32 %s3139, 4
          %s3150 = int_to_ptr.vmem [resolvable:$true] %s3149
          %3155 = dma.vmem_to_hbm [thread:$0]  %s3150, 2048, %s3148, %s3136, 128, 128, 8
        $region120: #{tpu_custom_call.1} parent=87 // pred_fallthru
          _
      $region88: #{tpu_custom_call.1} parent=5 // pred_fallthru
        _
      %p3156 = scmp.le.s32.totalorder 2, %s33
      // Predicated region
      $region121: #{tpu_custom_call.1} parent=5 // pred_check
        %p3157 = pneg %p3156
      $region122: #{tpu_custom_call.1} parent=5 // pred_check_branch
        %3159 = sbr.rel (%p3157) target = $region124
      $region123: #{tpu_custom_call.1} parent=5 // pred_region
        %s3160 = ssub.s32 %s33, 2
        // Predicated region
        $region125: #{tpu_custom_call.1} parent=123 // pred_check
          %p3161 = pneg %p429
        $region126: #{tpu_custom_call.1} parent=123 // pred_check_branch
          %3163 = sbr.rel (%p3161) target = $region128
        $region127: #{tpu_custom_call.1} parent=123 // pred_region
          %s3164 = sand.u32 %s414, 1
          %s3165 = scalar_lea.sflag [#allocation4], %s3164
          %s3166 = sand.u32 %s414, 1
          %s3167 = smul.addr %s3166, 128
          %s3168 = scalar_lea.vmem [#allocation15], %s3167
          %3169 = dma.done %s3165, 2048
        $region128: #{tpu_custom_call.1} parent=123 // pred_fallthru
          _
      $region124: #{tpu_custom_call.1} parent=5 // pred_fallthru
        _
    $region6: #{tpu_custom_call.1} parent=1 // loop_footer
      %s37 = sadd.s32 1, %s33
    $region7: #{tpu_custom_call.1} parent=1 // loop_footer_branch
      %32 = sbr.rel target = $region3
    $region8: #{tpu_custom_call.1} parent=1 // loop_exit
      _
    %3170 = vsyncpa [#allocation3], 1
    %s3171 = scalar_lea.sflag [#allocation3], 1
    %3172 = vsyncpa %s3171, 1
    %3173 = vsyncpa [#allocation7], 1
    %3174 = vsyncpa [#allocation10], 1
    %3175 = vsyncpa [#allocation13], 1
    %3176 = vsyncpa [#allocation4], 1
    %s3177 = scalar_lea.sflag [#allocation4], 1
    %3178 = vsyncpa %s3177, 1
    %3179 = vsyncpa [#allocation5], 1
    %s3180 = scalar_lea.sflag [#allocation5], 1
    %3181 = vsyncpa %s3180, 1

</llo_original>
